<compile_context>
chip_gen: v7x
topology: tpu7x:2x2x1
jax: 0.10.0
libtpu: 0.0.40
codegen_flags: <defaults>
</compile_context>

<pallas_src>
import functools

import jax
import jax.numpy as jnp
from jax.experimental import pallas as pl
from jax.experimental.pallas import tpu as pltpu


def _layernorm(x, scale, shift, eps=1e-5):
    mean = jnp.mean(x, axis=-1, keepdims=True)
    var = jnp.mean((x - mean) ** 2, axis=-1, keepdims=True)   # unbiased=False (torch)
    return scale * ((x - mean) / jnp.sqrt(var + eps)) + shift


def _gelu_tanh(x):
    c = jnp.float32(0.7978845608028654)      # sqrt(2/pi)
    return 0.5 * x * (1.0 + jnp.tanh(c * (x + 0.044715 * x * x * x)))


def transformer_block_kernel(x_ref,
                             wq_ref, wk_ref, wv_ref, wo_ref, bo_ref,
                             w1_ref, b1_ref, w2_ref, b2_ref,
                             g1_ref, s1_ref, g2_ref, s2_ref,
                             o_ref,
                             k_heads, v_heads, q_heads, ctx_sc,
                             *, num_heads, q_tile):
    T, E = x_ref.shape                       # full sequence for this batch element
    H = num_heads
    Dh = E // H
    TQ = q_tile
    TK = TQ
    n_k_tiles = T // TK

    qi = pl.program_id(1)
    cdt = x_ref.dtype                        # MXU input dtype (bf16-friendly)
    inv_sqrt_d = jnp.float32(1.0 / (Dh ** 0.5))

    g1 = g1_ref[...].astype(jnp.float32)
    s1 = s1_ref[...].astype(jnp.float32)

    # ---- once per batch element: LN1 + K/V projections for the whole sequence
    @pl.when(qi == 0)
    def _():
        x_full = x_ref[...].astype(jnp.float32)
        x1_full = _layernorm(x_full, g1, s1).astype(cdt)
        k2d = jnp.dot(x1_full, wk_ref[...], preferred_element_type=jnp.float32)
        v2d = jnp.dot(x1_full, wv_ref[...], preferred_element_type=jnp.float32)
        # one-time head split into (kv_tile, head, TK, Dh) VMEM scratch
        for kt in range(n_k_tiles):
            r0 = kt * TK
            for h in range(H):
                c0 = h * Dh
                k_heads[kt, h] = k2d[r0:r0 + TK, c0:c0 + Dh].astype(k_heads.dtype)
                v_heads[kt, h] = v2d[r0:r0 + TK, c0:c0 + Dh].astype(v_heads.dtype)

    # ---- this query tile ------------------------------------------------------
    q_lo = pl.multiple_of(qi * TQ, TQ)
    x_tile = x_ref[pl.ds(q_lo, TQ), :].astype(jnp.float32)        # (TQ, E)
    x1 = _layernorm(x_tile, g1, s1).astype(cdt)
    q2d = jnp.dot(x1, wq_ref[...], preferred_element_type=jnp.float32)
    q2d = q2d * inv_sqrt_d                   # fold 1/sqrt(head_dim) into Q
    for h in range(H):
        c0 = h * Dh
        q_heads[h] = q2d[:, c0:c0 + Dh].astype(q_heads.dtype)
    qh = q_heads[...]                        # (H, TQ, Dh)

    # ---- flash-style online softmax over causally needed K/V tiles ------------
    row_ids = q_lo + jax.lax.broadcasted_iota(jnp.int32, (TQ, TK), 0)
    neg_big = jnp.float32(-1e30)

    def kv_step(kj, carry):
        m_prev, l_prev, acc_prev = carry
        k_t = k_heads[kj]                    # (H, TK, Dh)
        v_t = v_heads[kj]
        s = jnp.einsum('hqd,hkd->hqk', qh, k_t,
                       preferred_element_type=jnp.float32)        # (H, TQ, TK)
        col_ids = kj * TK + jax.lax.broadcasted_iota(jnp.int32, (TQ, TK), 1)
        bias = jnp.where(col_ids > row_ids, neg_big, jnp.float32(0.0))
        s = s + bias[None, :, :]
        m_new = jnp.maximum(m_prev, jnp.max(s, axis=-1, keepdims=True))
        alpha = jnp.exp(m_prev - m_new)
        p = jnp.exp(s - m_new)
        l_new = alpha * l_prev + jnp.sum(p, axis=-1, keepdims=True)
        acc_new = alpha * acc_prev + jnp.einsum(
            'hqk,hkd->hqd', p.astype(v_t.dtype), v_t,
            preferred_element_type=jnp.float32)
        return m_new, l_new, acc_new

    m0 = jnp.full((H, TQ, 1), neg_big, jnp.float32)
    l0 = jnp.zeros((H, TQ, 1), jnp.float32)
    a0 = jnp.zeros((H, TQ, Dh), jnp.float32)
    # K/V tiles with index > qi are fully masked -> skipped entirely
    _, l_fin, acc = jax.lax.fori_loop(0, qi + 1, kv_step, (m0, l0, a0))

    ctx = acc * pl.reciprocal(l_fin, approx=True)                 # (H, TQ, Dh)
    for h in range(H):
        c0 = h * Dh
        ctx_sc[:, c0:c0 + Dh] = ctx[h]
    attn_out = jnp.dot(ctx_sc[...].astype(cdt), wo_ref[...],
                       preferred_element_type=jnp.float32) + bo_ref[...]

    x_res = x_tile + attn_out                # residual 1 (dropout = identity, eval)

    # ---- LN2 + feed-forward + residual ----------------------------------------
    x2 = _layernorm(x_res, g2_ref[...].astype(jnp.float32),
                    s2_ref[...].astype(jnp.float32)).astype(cdt)
    h1 = jnp.dot(x2, w1_ref[...], preferred_element_type=jnp.float32) + b1_ref[...]
    h1 = _gelu_tanh(h1)
    ff_out = jnp.dot(h1.astype(cdt), w2_ref[...],
                     preferred_element_type=jnp.float32) + b2_ref[...]

    o_ref[...] = (x_res + ff_out).astype(o_ref.dtype)   # residual 2 (dropout = identity)


def transformer_block(x, params, num_heads, *, q_tile=128):
    B, T, E = x.shape
    assert E % num_heads == 0, "emb_dim must be divisible by n_heads"
    Dh = E // num_heads
    H4 = 4 * E
    (wq, wk, wv, wo, bo, w1, b1, w2, b2, g1, s1, g2, s2) = params

    # query/key tile: multiple of 8 that divides T; otherwise whole sequence
    if T <= q_tile:
        TQ = T
    elif T % q_tile == 0 and q_tile % 8 == 0:
        TQ = q_tile
    else:
        TQ = T
    NQ = T // TQ

    kernel = functools.partial(transformer_block_kernel,
                               num_heads=num_heads, q_tile=TQ)

    def rep(shape):
        # parameters replicated across the whole grid (constant index_map)
        return pl.BlockSpec(shape, lambda b, qi: (0, 0))

    in_specs = [
        pl.BlockSpec((None, T, E), lambda b, qi: (b, 0, 0)),   # x: full seq per batch
        rep((E, E)), rep((E, E)), rep((E, E)),                 # Wq, Wk, Wv
        rep((E, E)), rep((1, E)),                              # Wo, bo
        rep((E, H4)), rep((1, H4)),                            # W1, b1
        rep((H4, E)), rep((1, E)),                             # W2, b2
        rep((1, E)), rep((1, E)),                              # norm1 scale/shift
        rep((1, E)), rep((1, E)),                              # norm2 scale/shift
    ]
    out_spec = pl.BlockSpec((None, TQ, E), lambda b, qi: (b, qi, 0))

    scratch_shapes = [
        pltpu.VMEM((NQ, num_heads, TQ, Dh), x.dtype),   # K, split per head (cached per batch)
        pltpu.VMEM((NQ, num_heads, TQ, Dh), x.dtype),   # V, split per head (cached per batch)
        pltpu.VMEM((num_heads, TQ, Dh), x.dtype),       # Q, split per head (this tile)
        pltpu.VMEM((TQ, E), jnp.float32),               # merged attention context
    ]

    itemsize = jnp.dtype(x.dtype).itemsize
    flops = int(24 * B * T * E * E + 2 * B * T * T * E)
    transcendentals = int(B * num_heads * T * T // 2 + 4 * B * T * E)
    bytes_accessed = int(itemsize * (2 * B * T * E + 12 * E * E + 12 * E))

    return pl.pallas_call(
        kernel,
        grid=(B, NQ),
        in_specs=in_specs,
        out_specs=out_spec,
        out_shape=jax.ShapeDtypeStruct((B, T, E), x.dtype),
        scratch_shapes=scratch_shapes,
        compiler_params=pltpu.CompilerParams(
            dimension_semantics=("parallel", "arbitrary"),
            vmem_limit_bytes=64 * 1024 * 1024),
        cost_estimate=pl.CostEstimate(flops=flops,
                                      transcendentals=transcendentals,
                                      bytes_accessed=bytes_accessed),
    )(x, wq, wk, wv, wo, bo, w1, b1, w2, b2, g1, s1, g2, s2)


# --------------------------- pure-JAX reference ------------------------------
def transformer_block_ref(x, params, num_heads):
    (wq, wk, wv, wo, bo, w1, b1, w2, b2, g1, s1, g2, s2) = params
    B, T, E = x.shape
    Dh = E // num_heads

    def ln(y, g, s):
        mean = jnp.mean(y, axis=-1, keepdims=True)
        var = jnp.mean((y - mean) ** 2, axis=-1, keepdims=True)
        return g * (y - mean) / jnp.sqrt(var + 1e-5) + s

    x1 = ln(x, g1, s1)
    q = (x1 @ wq).reshape(B, T, num_heads, Dh).transpose(0, 2, 1, 3)
    k = (x1 @ wk).reshape(B, T, num_heads, Dh).transpose(0, 2, 1, 3)
    v = (x1 @ wv).reshape(B, T, num_heads, Dh).transpose(0, 2, 1, 3)
    scores = jnp.einsum('bhqd,bhkd->bhqk', q, k)
    mask = jnp.triu(jnp.ones((T, T), bool), k=1)
    scores = jnp.where(mask, -jnp.inf, scores)
    attn = jax.nn.softmax(scores / (Dh ** 0.5), axis=-1)
    ctx = jnp.einsum('bhqk,bhkd->bhqd', attn, v).transpose(0, 2, 1, 3).reshape(B, T, E)
    x = x + (ctx @ wo + bo)
    x2 = ln(x, g2, s2)
    h = x2 @ w1 + b1
    h = 0.5 * h * (1 + jnp.tanh(jnp.sqrt(2.0 / jnp.pi) * (h + 0.044715 * h ** 3)))
    return x + (h @ w2 + b2)


if __name__ == "__main__":
    cfg = dict(emb_dim=128, context_length=128, n_heads=4, drop_rate=0.1, qkv_bias=False)
    B, T, E = 2, cfg["context_length"], cfg["emb_dim"]
    H4 = 4 * E

    key = jax.random.PRNGKey(0)
    ks = jax.random.split(key, 16)
    x = jax.random.normal(ks[0], (B, T, E), jnp.float32)

    wq = 0.05 * jax.random.normal(ks[1], (E, E), jnp.float32)
    wk = 0.05 * jax.random.normal(ks[2], (E, E), jnp.float32)
    wv = 0.05 * jax.random.normal(ks[3], (E, E), jnp.float32)
    wo = 0.05 * jax.random.normal(ks[4], (E, E), jnp.float32)
    bo = 0.05 * jax.random.normal(ks[5], (1, E), jnp.float32)
    w1 = 0.05 * jax.random.normal(ks[6], (E, H4), jnp.float32)
    b1 = 0.05 * jax.random.normal(ks[7], (1, H4), jnp.float32)
    w2 = 0.05 * jax.random.normal(ks[8], (H4, E), jnp.float32)
    b2 = 0.05 * jax.random.normal(ks[9], (1, E), jnp.float32)
    g1 = 1.0 + 0.05 * jax.random.normal(ks[10], (1, E), jnp.float32)
    s1 = 0.05 * jax.random.normal(ks[11], (1, E), jnp.float32)
    g2 = 1.0 + 0.05 * jax.random.normal(ks[12], (1, E), jnp.float32)
    s2 = 0.05 * jax.random.normal(ks[13], (1, E), jnp.float32)

    params = (wq, wk, wv, wo, bo, w1, b1, w2, b2, g1, s1, g2, s2)

    out = transformer_block(x, params, cfg["n_heads"], q_tile=64)   # grid = (2, 2)
    out = jax.block_until_ready(out)

    ref = transformer_block_ref(x, params, cfg["n_heads"])
    ref = jax.block_until_ready(ref)

    # tolerance accommodates MXU f32-precision differences between the Pallas
    # kernel and the XLA reference matmul paths
    assert out.shape == ref.shape
    assert jnp.allclose(out, ref, atol=1e-2, rtol=1e-2), (
        "mismatch vs JAX reference: max abs err "
        f"{float(jnp.max(jnp.abs(out - ref)))}")

    print("KERNEL_OK")
</pallas_src>

<mosaic_0001>
module attributes {stable_mosaic.version = 11 : i64} {
  func.func @transformer_block_kernel(%arg0: i32, %arg1: i32, %arg2: memref<1x128x128xf32, #tpu.memory_space<vmem>>, %arg3: memref<128x128xf32, #tpu.memory_space<vmem>>, %arg4: memref<128x128xf32, #tpu.memory_space<vmem>>, %arg5: memref<128x128xf32, #tpu.memory_space<vmem>>, %arg6: memref<128x128xf32, #tpu.memory_space<vmem>>, %arg7: memref<1x128xf32, #tpu.memory_space<vmem>>, %arg8: memref<128x512xf32, #tpu.memory_space<vmem>>, %arg9: memref<1x512xf32, #tpu.memory_space<vmem>>, %arg10: memref<512x128xf32, #tpu.memory_space<vmem>>, %arg11: memref<1x128xf32, #tpu.memory_space<vmem>>, %arg12: memref<1x128xf32, #tpu.memory_space<vmem>>, %arg13: memref<1x128xf32, #tpu.memory_space<vmem>>, %arg14: memref<1x128xf32, #tpu.memory_space<vmem>>, %arg15: memref<1x128xf32, #tpu.memory_space<vmem>>, %arg16: memref<1x64x128xf32, #tpu.memory_space<vmem>>, %arg17: memref<2x4x64x32xf32, #tpu.memory_space<vmem>>, %arg18: memref<2x4x64x32xf32, #tpu.memory_space<vmem>>, %arg19: memref<4x64x32xf32, #tpu.memory_space<vmem>>, %arg20: memref<64x128xf32, #tpu.memory_space<vmem>>) attributes {dimension_semantics = [#tpu.dimension_semantics<parallel>, #tpu.dimension_semantics<arbitrary>], iteration_bounds = array<i64: 2, 2>, scalar_prefetch = 0 : i64, scratch_operands = 4 : i64, tpu.core_type = #tpu.core_type<tc>, window_params = [{transform_indices = @transform_0, window_bounds = array<i64: 1, 128, 128>}, {pipeline_mode = #tpu.pipeline_mode<synchronous>, transform_indices = @transform_1, window_bounds = array<i64: 128, 128>}, {pipeline_mode = #tpu.pipeline_mode<synchronous>, transform_indices = @transform_2, window_bounds = array<i64: 128, 128>}, {pipeline_mode = #tpu.pipeline_mode<synchronous>, transform_indices = @transform_3, window_bounds = array<i64: 128, 128>}, {pipeline_mode = #tpu.pipeline_mode<synchronous>, transform_indices = @transform_4, window_bounds = array<i64: 128, 128>}, {pipeline_mode = #tpu.pipeline_mode<synchronous>, transform_indices = @transform_5, window_bounds = array<i64: 1, 128>}, {pipeline_mode = #tpu.pipeline_mode<synchronous>, transform_indices = @transform_6, window_bounds = array<i64: 128, 512>}, {pipeline_mode = #tpu.pipeline_mode<synchronous>, transform_indices = @transform_7, window_bounds = array<i64: 1, 512>}, {pipeline_mode = #tpu.pipeline_mode<synchronous>, transform_indices = @transform_8, window_bounds = array<i64: 512, 128>}, {pipeline_mode = #tpu.pipeline_mode<synchronous>, transform_indices = @transform_9, window_bounds = array<i64: 1, 128>}, {pipeline_mode = #tpu.pipeline_mode<synchronous>, transform_indices = @transform_10, window_bounds = array<i64: 1, 128>}, {pipeline_mode = #tpu.pipeline_mode<synchronous>, transform_indices = @transform_11, window_bounds = array<i64: 1, 128>}, {pipeline_mode = #tpu.pipeline_mode<synchronous>, transform_indices = @transform_12, window_bounds = array<i64: 1, 128>}, {pipeline_mode = #tpu.pipeline_mode<synchronous>, transform_indices = @transform_13, window_bounds = array<i64: 1, 128>}, {transform_indices = @transform_14, window_bounds = array<i64: 1, 64, 128>}]} {
    %c0 = arith.constant 0 : index
    %c0_0 = arith.constant 0 : index
    %0 = vector.load %arg12[%c0, %c0_0] : memref<1x128xf32, #tpu.memory_space<vmem>>, vector<1x128xf32>
    %c0_1 = arith.constant 0 : index
    %c0_2 = arith.constant 0 : index
    %1 = vector.load %arg13[%c0_1, %c0_2] : memref<1x128xf32, #tpu.memory_space<vmem>>, vector<1x128xf32>
    %c0_i32 = arith.constant 0 : i32
    %2 = arith.cmpi eq, %arg1, %c0_i32 : i32
    %3 = arith.extui %2 : i1 to i32
    %c0_i32_3 = arith.constant 0 : i32
    %4 = arith.cmpi ne, %3, %c0_i32_3 : i32
    scf.if %4 {
      %c0_70 = arith.constant 0 : index
      %c0_71 = arith.constant 0 : index
      %c0_72 = arith.constant 0 : index
      %136 = vector.load %arg2[%c0_70, %c0_71, %c0_72] : memref<1x128x128xf32, #tpu.memory_space<vmem>>, vector<1x128x128xf32>
      %137 = vector.shape_cast %136 : vector<1x128x128xf32> to vector<128x128xf32>
      %cst_73 = arith.constant dense<0.000000e+00> : vector<128xf32>
      %138 = vector.multi_reduction <add>, %137, %cst_73 [1] : vector<128x128xf32> to vector<128xf32>
      %139 = vector.shape_cast %138 : vector<128xf32> to vector<128x1xf32>
      %cst_74 = arith.constant 1.280000e+02 : f32
      %140 = vector.broadcast %cst_74 : f32 to vector<128x1xf32>
      %141 = arith.divf %139, %140 : vector<128x1xf32>
      %142 = vector.broadcast %141 : vector<128x1xf32> to vector<128x128xf32>
      %143 = arith.subf %137, %142 : vector<128x128xf32>
      %144 = arith.mulf %143, %143 : vector<128x128xf32>
      %cst_75 = arith.constant dense<0.000000e+00> : vector<128xf32>
      %145 = vector.multi_reduction <add>, %144, %cst_75 [1] : vector<128x128xf32> to vector<128xf32>
      %146 = vector.shape_cast %145 : vector<128xf32> to vector<128x1xf32>
      %cst_76 = arith.constant 1.280000e+02 : f32
      %147 = vector.broadcast %cst_76 : f32 to vector<128x1xf32>
      %148 = arith.divf %146, %147 : vector<128x1xf32>
      %149 = vector.broadcast %141 : vector<128x1xf32> to vector<128x128xf32>
      %150 = arith.subf %137, %149 : vector<128x128xf32>
      %cst_77 = arith.constant 9.99999974E-6 : f32
      %151 = vector.broadcast %cst_77 : f32 to vector<128x1xf32>
      %152 = arith.addf %148, %151 : vector<128x1xf32>
      %153 = math.sqrt %152 : vector<128x1xf32>
      %154 = vector.broadcast %153 : vector<128x1xf32> to vector<128x128xf32>
      %155 = arith.divf %150, %154 : vector<128x128xf32>
      %156 = vector.broadcast %0 : vector<1x128xf32> to vector<128x128xf32>
      %157 = arith.mulf %156, %155 : vector<128x128xf32>
      %158 = vector.broadcast %1 : vector<1x128xf32> to vector<128x128xf32>
      %159 = arith.addf %157, %158 : vector<128x128xf32>
      %c0_78 = arith.constant 0 : index
      %c0_79 = arith.constant 0 : index
      %160 = vector.load %arg4[%c0_78, %c0_79] : memref<128x128xf32, #tpu.memory_space<vmem>>, vector<128x128xf32>
      %cst_80 = arith.constant dense<0.000000e+00> : vector<128x128xf32>
      %161 = tpu.matmul %159, %160, %cst_80 {dimension_numbers = #tpu.dot_dimension_numbers<[1], [0], [0], [1], [0, 0, 1, 1], [], []>} : vector<128x128xf32>, vector<128x128xf32>, vector<128x128xf32> -> vector<128x128xf32>
      %c0_81 = arith.constant 0 : index
      %c0_82 = arith.constant 0 : index
      %162 = vector.load %arg5[%c0_81, %c0_82] : memref<128x128xf32, #tpu.memory_space<vmem>>, vector<128x128xf32>
      %cst_83 = arith.constant dense<0.000000e+00> : vector<128x128xf32>
      %163 = tpu.matmul %159, %162, %cst_83 {dimension_numbers = #tpu.dot_dimension_numbers<[1], [0], [0], [1], [0, 0, 1, 1], [], []>} : vector<128x128xf32>, vector<128x128xf32>, vector<128x128xf32> -> vector<128x128xf32>
      %164 = vector.extract_strided_slice %161 {offsets = [0, 0], sizes = [64, 32], strides = [1, 1]} : vector<128x128xf32> to vector<64x32xf32>
      %c0_84 = arith.constant 0 : index
      %c0_85 = arith.constant 0 : index
      %c0_86 = arith.constant 0 : index
      %c0_87 = arith.constant 0 : index
      %165 = vector.load %arg17[%c0_84, %c0_85, %c0_86, %c0_87] : memref<2x4x64x32xf32, #tpu.memory_space<vmem>>, vector<1x1x64x32xf32>
      %166 = vector.shape_cast %165 : vector<1x1x64x32xf32> to vector<64x32xf32>
      %167 = vector.shape_cast %164 : vector<64x32xf32> to vector<1x1x64x32xf32>
      tpu.vector_store %arg17[%c0_84, %c0_85, %c0_86, %c0_87], %167 {strides = array<i32>} : memref<2x4x64x32xf32, #tpu.memory_space<vmem>>, vector<1x1x64x32xf32>,
      %168 = vector.extract_strided_slice %163 {offsets = [0, 0], sizes = [64, 32], strides = [1, 1]} : vector<128x128xf32> to vector<64x32xf32>
      %c0_88 = arith.constant 0 : index
      %c0_89 = arith.constant 0 : index
      %c0_90 = arith.constant 0 : index
      %c0_91 = arith.constant 0 : index
      %169 = vector.load %arg18[%c0_88, %c0_89, %c0_90, %c0_91] : memref<2x4x64x32xf32, #tpu.memory_space<vmem>>, vector<1x1x64x32xf32>
      %170 = vector.shape_cast %169 : vector<1x1x64x32xf32> to vector<64x32xf32>
      %171 = vector.shape_cast %168 : vector<64x32xf32> to vector<1x1x64x32xf32>
      tpu.vector_store %arg18[%c0_88, %c0_89, %c0_90, %c0_91], %171 {strides = array<i32>} : memref<2x4x64x32xf32, #tpu.memory_space<vmem>>, vector<1x1x64x32xf32>,
      %172 = vector.extract_strided_slice %161 {offsets = [0, 32], sizes = [64, 32], strides = [1, 1]} : vector<128x128xf32> to vector<64x32xf32>
      %c0_92 = arith.constant 0 : index
      %c1_93 = arith.constant 1 : index
      %c0_94 = arith.constant 0 : index
      %c0_95 = arith.constant 0 : index
      %173 = vector.load %arg17[%c0_92, %c1_93, %c0_94, %c0_95] : memref<2x4x64x32xf32, #tpu.memory_space<vmem>>, vector<1x1x64x32xf32>
      %174 = vector.shape_cast %173 : vector<1x1x64x32xf32> to vector<64x32xf32>
      %175 = vector.shape_cast %172 : vector<64x32xf32> to vector<1x1x64x32xf32>
      tpu.vector_store %arg17[%c0_92, %c1_93, %c0_94, %c0_95], %175 {strides = array<i32>} : memref<2x4x64x32xf32, #tpu.memory_space<vmem>>, vector<1x1x64x32xf32>,
      %176 = vector.extract_strided_slice %163 {offsets = [0, 32], sizes = [64, 32], strides = [1, 1]} : vector<128x128xf32> to vector<64x32xf32>
      %c0_96 = arith.constant 0 : index
      %c1_97 = arith.constant 1 : index
      %c0_98 = arith.constant 0 : index
      %c0_99 = arith.constant 0 : index
      %177 = vector.load %arg18[%c0_96, %c1_97, %c0_98, %c0_99] : memref<2x4x64x32xf32, #tpu.memory_space<vmem>>, vector<1x1x64x32xf32>
      %178 = vector.shape_cast %177 : vector<1x1x64x32xf32> to vector<64x32xf32>
      %179 = vector.shape_cast %176 : vector<64x32xf32> to vector<1x1x64x32xf32>
      tpu.vector_store %arg18[%c0_96, %c1_97, %c0_98, %c0_99], %179 {strides = array<i32>} : memref<2x4x64x32xf32, #tpu.memory_space<vmem>>, vector<1x1x64x32xf32>,
      %180 = vector.extract_strided_slice %161 {offsets = [0, 64], sizes = [64, 32], strides = [1, 1]} : vector<128x128xf32> to vector<64x32xf32>
      %c0_100 = arith.constant 0 : index
      %c2_101 = arith.constant 2 : index
      %c0_102 = arith.constant 0 : index
      %c0_103 = arith.constant 0 : index
      %181 = vector.load %arg17[%c0_100, %c2_101, %c0_102, %c0_103] : memref<2x4x64x32xf32, #tpu.memory_space<vmem>>, vector<1x1x64x32xf32>
      %182 = vector.shape_cast %181 : vector<1x1x64x32xf32> to vector<64x32xf32>
      %183 = vector.shape_cast %180 : vector<64x32xf32> to vector<1x1x64x32xf32>
      tpu.vector_store %arg17[%c0_100, %c2_101, %c0_102, %c0_103], %183 {strides = array<i32>} : memref<2x4x64x32xf32, #tpu.memory_space<vmem>>, vector<1x1x64x32xf32>,
      %184 = vector.extract_strided_slice %163 {offsets = [0, 64], sizes = [64, 32], strides = [1, 1]} : vector<128x128xf32> to vector<64x32xf32>
      %c0_104 = arith.constant 0 : index
      %c2_105 = arith.constant 2 : index
      %c0_106 = arith.constant 0 : index
      %c0_107 = arith.constant 0 : index
      %185 = vector.load %arg18[%c0_104, %c2_105, %c0_106, %c0_107] : memref<2x4x64x32xf32, #tpu.memory_space<vmem>>, vector<1x1x64x32xf32>
      %186 = vector.shape_cast %185 : vector<1x1x64x32xf32> to vector<64x32xf32>
      %187 = vector.shape_cast %184 : vector<64x32xf32> to vector<1x1x64x32xf32>
      tpu.vector_store %arg18[%c0_104, %c2_105, %c0_106, %c0_107], %187 {strides = array<i32>} : memref<2x4x64x32xf32, #tpu.memory_space<vmem>>, vector<1x1x64x32xf32>,
      %188 = vector.extract_strided_slice %161 {offsets = [0, 96], sizes = [64, 32], strides = [1, 1]} : vector<128x128xf32> to vector<64x32xf32>
      %c0_108 = arith.constant 0 : index
      %c3_109 = arith.constant 3 : index
      %c0_110 = arith.constant 0 : index
      %c0_111 = arith.constant 0 : index
      %189 = vector.load %arg17[%c0_108, %c3_109, %c0_110, %c0_111] : memref<2x4x64x32xf32, #tpu.memory_space<vmem>>, vector<1x1x64x32xf32>
      %190 = vector.shape_cast %189 : vector<1x1x64x32xf32> to vector<64x32xf32>
      %191 = vector.shape_cast %188 : vector<64x32xf32> to vector<1x1x64x32xf32>
      tpu.vector_store %arg17[%c0_108, %c3_109, %c0_110, %c0_111], %191 {strides = array<i32>} : memref<2x4x64x32xf32, #tpu.memory_space<vmem>>, vector<1x1x64x32xf32>,
      %192 = vector.extract_strided_slice %163 {offsets = [0, 96], sizes = [64, 32], strides = [1, 1]} : vector<128x128xf32> to vector<64x32xf32>
      %c0_112 = arith.constant 0 : index
      %c3_113 = arith.constant 3 : index
      %c0_114 = arith.constant 0 : index
      %c0_115 = arith.constant 0 : index
      %193 = vector.load %arg18[%c0_112, %c3_113, %c0_114, %c0_115] : memref<2x4x64x32xf32, #tpu.memory_space<vmem>>, vector<1x1x64x32xf32>
      %194 = vector.shape_cast %193 : vector<1x1x64x32xf32> to vector<64x32xf32>
      %195 = vector.shape_cast %192 : vector<64x32xf32> to vector<1x1x64x32xf32>
      tpu.vector_store %arg18[%c0_112, %c3_113, %c0_114, %c0_115], %195 {strides = array<i32>} : memref<2x4x64x32xf32, #tpu.memory_space<vmem>>, vector<1x1x64x32xf32>,
      %196 = vector.extract_strided_slice %161 {offsets = [64, 0], sizes = [64, 32], strides = [1, 1]} : vector<128x128xf32> to vector<64x32xf32>
      %c1_116 = arith.constant 1 : index
      %c0_117 = arith.constant 0 : index
      %c0_118 = arith.constant 0 : index
      %c0_119 = arith.constant 0 : index
      %197 = vector.load %arg17[%c1_116, %c0_117, %c0_118, %c0_119] : memref<2x4x64x32xf32, #tpu.memory_space<vmem>>, vector<1x1x64x32xf32>
      %198 = vector.shape_cast %197 : vector<1x1x64x32xf32> to vector<64x32xf32>
      %199 = vector.shape_cast %196 : vector<64x32xf32> to vector<1x1x64x32xf32>
      tpu.vector_store %arg17[%c1_116, %c0_117, %c0_118, %c0_119], %199 {strides = array<i32>} : memref<2x4x64x32xf32, #tpu.memory_space<vmem>>, vector<1x1x64x32xf32>,
      %200 = vector.extract_strided_slice %163 {offsets = [64, 0], sizes = [64, 32], strides = [1, 1]} : vector<128x128xf32> to vector<64x32xf32>
      %c1_120 = arith.constant 1 : index
      %c0_121 = arith.constant 0 : index
      %c0_122 = arith.constant 0 : index
      %c0_123 = arith.constant 0 : index
      %201 = vector.load %arg18[%c1_120, %c0_121, %c0_122, %c0_123] : memref<2x4x64x32xf32, #tpu.memory_space<vmem>>, vector<1x1x64x32xf32>
      %202 = vector.shape_cast %201 : vector<1x1x64x32xf32> to vector<64x32xf32>
      %203 = vector.shape_cast %200 : vector<64x32xf32> to vector<1x1x64x32xf32>
      tpu.vector_store %arg18[%c1_120, %c0_121, %c0_122, %c0_123], %203 {strides = array<i32>} : memref<2x4x64x32xf32, #tpu.memory_space<vmem>>, vector<1x1x64x32xf32>,
      %204 = vector.extract_strided_slice %161 {offsets = [64, 32], sizes = [64, 32], strides = [1, 1]} : vector<128x128xf32> to vector<64x32xf32>
      %c1_124 = arith.constant 1 : index
      %c1_125 = arith.constant 1 : index
      %c0_126 = arith.constant 0 : index
      %c0_127 = arith.constant 0 : index
      %205 = vector.load %arg17[%c1_124, %c1_125, %c0_126, %c0_127] : memref<2x4x64x32xf32, #tpu.memory_space<vmem>>, vector<1x1x64x32xf32>
      %206 = vector.shape_cast %205 : vector<1x1x64x32xf32> to vector<64x32xf32>
      %207 = vector.shape_cast %204 : vector<64x32xf32> to vector<1x1x64x32xf32>
      tpu.vector_store %arg17[%c1_124, %c1_125, %c0_126, %c0_127], %207 {strides = array<i32>} : memref<2x4x64x32xf32, #tpu.memory_space<vmem>>, vector<1x1x64x32xf32>,
      %208 = vector.extract_strided_slice %163 {offsets = [64, 32], sizes = [64, 32], strides = [1, 1]} : vector<128x128xf32> to vector<64x32xf32>
      %c1_128 = arith.constant 1 : index
      %c1_129 = arith.constant 1 : index
      %c0_130 = arith.constant 0 : index
      %c0_131 = arith.constant 0 : index
      %209 = vector.load %arg18[%c1_128, %c1_129, %c0_130, %c0_131] : memref<2x4x64x32xf32, #tpu.memory_space<vmem>>, vector<1x1x64x32xf32>
      %210 = vector.shape_cast %209 : vector<1x1x64x32xf32> to vector<64x32xf32>
      %211 = vector.shape_cast %208 : vector<64x32xf32> to vector<1x1x64x32xf32>
      tpu.vector_store %arg18[%c1_128, %c1_129, %c0_130, %c0_131], %211 {strides = array<i32>} : memref<2x4x64x32xf32, #tpu.memory_space<vmem>>, vector<1x1x64x32xf32>,
      %212 = vector.extract_strided_slice %161 {offsets = [64, 64], sizes = [64, 32], strides = [1, 1]} : vector<128x128xf32> to vector<64x32xf32>
      %c1_132 = arith.constant 1 : index
      %c2_133 = arith.constant 2 : index
      %c0_134 = arith.constant 0 : index
      %c0_135 = arith.constant 0 : index
      %213 = vector.load %arg17[%c1_132, %c2_133, %c0_134, %c0_135] : memref<2x4x64x32xf32, #tpu.memory_space<vmem>>, vector<1x1x64x32xf32>
      %214 = vector.shape_cast %213 : vector<1x1x64x32xf32> to vector<64x32xf32>
      %215 = vector.shape_cast %212 : vector<64x32xf32> to vector<1x1x64x32xf32>
      tpu.vector_store %arg17[%c1_132, %c2_133, %c0_134, %c0_135], %215 {strides = array<i32>} : memref<2x4x64x32xf32, #tpu.memory_space<vmem>>, vector<1x1x64x32xf32>,
      %216 = vector.extract_strided_slice %163 {offsets = [64, 64], sizes = [64, 32], strides = [1, 1]} : vector<128x128xf32> to vector<64x32xf32>
      %c1_136 = arith.constant 1 : index
      %c2_137 = arith.constant 2 : index
      %c0_138 = arith.constant 0 : index
      %c0_139 = arith.constant 0 : index
      %217 = vector.load %arg18[%c1_136, %c2_137, %c0_138, %c0_139] : memref<2x4x64x32xf32, #tpu.memory_space<vmem>>, vector<1x1x64x32xf32>
      %218 = vector.shape_cast %217 : vector<1x1x64x32xf32> to vector<64x32xf32>
      %219 = vector.shape_cast %216 : vector<64x32xf32> to vector<1x1x64x32xf32>
      tpu.vector_store %arg18[%c1_136, %c2_137, %c0_138, %c0_139], %219 {strides = array<i32>} : memref<2x4x64x32xf32, #tpu.memory_space<vmem>>, vector<1x1x64x32xf32>,
      %220 = vector.extract_strided_slice %161 {offsets = [64, 96], sizes = [64, 32], strides = [1, 1]} : vector<128x128xf32> to vector<64x32xf32>
      %c1_140 = arith.constant 1 : index
      %c3_141 = arith.constant 3 : index
      %c0_142 = arith.constant 0 : index
      %c0_143 = arith.constant 0 : index
      %221 = vector.load %arg17[%c1_140, %c3_141, %c0_142, %c0_143] : memref<2x4x64x32xf32, #tpu.memory_space<vmem>>, vector<1x1x64x32xf32>
      %222 = vector.shape_cast %221 : vector<1x1x64x32xf32> to vector<64x32xf32>
      %223 = vector.shape_cast %220 : vector<64x32xf32> to vector<1x1x64x32xf32>
      tpu.vector_store %arg17[%c1_140, %c3_141, %c0_142, %c0_143], %223 {strides = array<i32>} : memref<2x4x64x32xf32, #tpu.memory_space<vmem>>, vector<1x1x64x32xf32>,
      %224 = vector.extract_strided_slice %163 {offsets = [64, 96], sizes = [64, 32], strides = [1, 1]} : vector<128x128xf32> to vector<64x32xf32>
      %c1_144 = arith.constant 1 : index
      %c3_145 = arith.constant 3 : index
      %c0_146 = arith.constant 0 : index
      %c0_147 = arith.constant 0 : index
      %225 = vector.load %arg18[%c1_144, %c3_145, %c0_146, %c0_147] : memref<2x4x64x32xf32, #tpu.memory_space<vmem>>, vector<1x1x64x32xf32>
      %226 = vector.shape_cast %225 : vector<1x1x64x32xf32> to vector<64x32xf32>
      %227 = vector.shape_cast %224 : vector<64x32xf32> to vector<1x1x64x32xf32>
      tpu.vector_store %arg18[%c1_144, %c3_145, %c0_146, %c0_147], %227 {strides = array<i32>} : memref<2x4x64x32xf32, #tpu.memory_space<vmem>>, vector<1x1x64x32xf32>,
    } else {
    }
    %c64_i32 = arith.constant 64 : i32
    %5 = arith.muli %arg1, %c64_i32 : i32
    %6 = tpu.assume_multiple %5, 64 : i32
    %c0_4 = arith.constant 0 : index
    %7 = arith.index_cast %6 : i32 to index
    %c0_5 = arith.constant 0 : index
    %8 = vector.load %arg2[%c0_4, %7, %c0_5] : memref<1x128x128xf32, #tpu.memory_space<vmem>>, vector<1x64x128xf32>
    %9 = vector.shape_cast %8 : vector<1x64x128xf32> to vector<64x128xf32>
    %cst = arith.constant dense<0.000000e+00> : vector<64xf32>
    %10 = vector.multi_reduction <add>, %9, %cst [1] : vector<64x128xf32> to vector<64xf32>
    %11 = vector.shape_cast %10 : vector<64xf32> to vector<64x1xf32>
    %cst_6 = arith.constant 1.280000e+02 : f32
    %12 = vector.broadcast %cst_6 : f32 to vector<64x1xf32>
    %13 = arith.divf %11, %12 : vector<64x1xf32>
    %14 = vector.broadcast %13 : vector<64x1xf32> to vector<64x128xf32>
    %15 = arith.subf %9, %14 : vector<64x128xf32>
    %16 = arith.mulf %15, %15 : vector<64x128xf32>
    %cst_7 = arith.constant dense<0.000000e+00> : vector<64xf32>
    %17 = vector.multi_reduction <add>, %16, %cst_7 [1] : vector<64x128xf32> to vector<64xf32>
    %18 = vector.shape_cast %17 : vector<64xf32> to vector<64x1xf32>
    %cst_8 = arith.constant 1.280000e+02 : f32
    %19 = vector.broadcast %cst_8 : f32 to vector<64x1xf32>
    %20 = arith.divf %18, %19 : vector<64x1xf32>
    %21 = vector.broadcast %13 : vector<64x1xf32> to vector<64x128xf32>
    %22 = arith.subf %9, %21 : vector<64x128xf32>
    %cst_9 = arith.constant 9.99999974E-6 : f32
    %23 = vector.broadcast %cst_9 : f32 to vector<64x1xf32>
    %24 = arith.addf %20, %23 : vector<64x1xf32>
    %25 = math.sqrt %24 : vector<64x1xf32>
    %26 = vector.broadcast %25 : vector<64x1xf32> to vector<64x128xf32>
    %27 = arith.divf %22, %26 : vector<64x128xf32>
    %28 = vector.broadcast %0 : vector<1x128xf32> to vector<64x128xf32>
    %29 = arith.mulf %28, %27 : vector<64x128xf32>
    %30 = vector.broadcast %1 : vector<1x128xf32> to vector<64x128xf32>
    %31 = arith.addf %29, %30 : vector<64x128xf32>
    %c0_10 = arith.constant 0 : index
    %c0_11 = arith.constant 0 : index
    %32 = vector.load %arg3[%c0_10, %c0_11] : memref<128x128xf32, #tpu.memory_space<vmem>>, vector<128x128xf32>
    %cst_12 = arith.constant dense<0.000000e+00> : vector<64x128xf32>
    %33 = tpu.matmul %31, %32, %cst_12 {dimension_numbers = #tpu.dot_dimension_numbers<[1], [0], [0], [1], [0, 0, 1, 1], [], []>} : vector<64x128xf32>, vector<128x128xf32>, vector<64x128xf32> -> vector<64x128xf32>
    %cst_13 = arith.constant 0.176776692 : f32
    %34 = vector.broadcast %cst_13 : f32 to vector<64x128xf32>
    %35 = arith.mulf %33, %34 : vector<64x128xf32>
    %36 = vector.extract_strided_slice %35 {offsets = [0, 0], sizes = [64, 32], strides = [1, 1]} : vector<64x128xf32> to vector<64x32xf32>
    %c0_14 = arith.constant 0 : index
    %c0_15 = arith.constant 0 : index
    %c0_16 = arith.constant 0 : index
    %37 = vector.load %arg19[%c0_14, %c0_15, %c0_16] : memref<4x64x32xf32, #tpu.memory_space<vmem>>, vector<1x64x32xf32>
    %38 = vector.shape_cast %37 : vector<1x64x32xf32> to vector<64x32xf32>
    %39 = vector.shape_cast %36 : vector<64x32xf32> to vector<1x64x32xf32>
    tpu.vector_store %arg19[%c0_14, %c0_15, %c0_16], %39 {strides = array<i32>} : memref<4x64x32xf32, #tpu.memory_space<vmem>>, vector<1x64x32xf32>,
    %40 = vector.extract_strided_slice %35 {offsets = [0, 32], sizes = [64, 32], strides = [1, 1]} : vector<64x128xf32> to vector<64x32xf32>
    %c1 = arith.constant 1 : index
    %c0_17 = arith.constant 0 : index
    %c0_18 = arith.constant 0 : index
    %41 = vector.load %arg19[%c1, %c0_17, %c0_18] : memref<4x64x32xf32, #tpu.memory_space<vmem>>, vector<1x64x32xf32>
    %42 = vector.shape_cast %41 : vector<1x64x32xf32> to vector<64x32xf32>
    %43 = vector.shape_cast %40 : vector<64x32xf32> to vector<1x64x32xf32>
    tpu.vector_store %arg19[%c1, %c0_17, %c0_18], %43 {strides = array<i32>} : memref<4x64x32xf32, #tpu.memory_space<vmem>>, vector<1x64x32xf32>,
    %44 = vector.extract_strided_slice %35 {offsets = [0, 64], sizes = [64, 32], strides = [1, 1]} : vector<64x128xf32> to vector<64x32xf32>
    %c2 = arith.constant 2 : index
    %c0_19 = arith.constant 0 : index
    %c0_20 = arith.constant 0 : index
    %45 = vector.load %arg19[%c2, %c0_19, %c0_20] : memref<4x64x32xf32, #tpu.memory_space<vmem>>, vector<1x64x32xf32>
    %46 = vector.shape_cast %45 : vector<1x64x32xf32> to vector<64x32xf32>
    %47 = vector.shape_cast %44 : vector<64x32xf32> to vector<1x64x32xf32>
    tpu.vector_store %arg19[%c2, %c0_19, %c0_20], %47 {strides = array<i32>} : memref<4x64x32xf32, #tpu.memory_space<vmem>>, vector<1x64x32xf32>,
    %48 = vector.extract_strided_slice %35 {offsets = [0, 96], sizes = [64, 32], strides = [1, 1]} : vector<64x128xf32> to vector<64x32xf32>
    %c3 = arith.constant 3 : index
    %c0_21 = arith.constant 0 : index
    %c0_22 = arith.constant 0 : index
    %49 = vector.load %arg19[%c3, %c0_21, %c0_22] : memref<4x64x32xf32, #tpu.memory_space<vmem>>, vector<1x64x32xf32>
    %50 = vector.shape_cast %49 : vector<1x64x32xf32> to vector<64x32xf32>
    %51 = vector.shape_cast %48 : vector<64x32xf32> to vector<1x64x32xf32>
    tpu.vector_store %arg19[%c3, %c0_21, %c0_22], %51 {strides = array<i32>} : memref<4x64x32xf32, #tpu.memory_space<vmem>>, vector<1x64x32xf32>,
    %c0_23 = arith.constant 0 : index
    %c0_24 = arith.constant 0 : index
    %c0_25 = arith.constant 0 : index
    %52 = vector.load %arg19[%c0_23, %c0_24, %c0_25] : memref<4x64x32xf32, #tpu.memory_space<vmem>>, vector<4x64x32xf32>
    %53 = tpu.iota {dimensions = array<i32: 0>} : vector<64x64xi32>
    %54 = vector.broadcast %6 : i32 to vector<64x64xi32>
    %55 = arith.addi %54, %53 : vector<64x64xi32>
    %cst_26 = arith.constant -1.000000e+30 : f32
    %56 = vector.broadcast %cst_26 : f32 to vector<4x64x1xf32>
    %cst_27 = arith.constant 0.000000e+00 : f32
    %57 = vector.broadcast %cst_27 : f32 to vector<4x64x1xf32>
    %cst_28 = arith.constant 0.000000e+00 : f32
    %58 = vector.broadcast %cst_28 : f32 to vector<4x64x32xf32>
    %c1_i32 = arith.constant 1 : i32
    %59 = arith.addi %arg1, %c1_i32 : i32
    %cst_29 = arith.constant -1.000000e+30 : f32
    %c0_i32_30 = arith.constant 0 : i32
    %60 = arith.subi %59, %c0_i32_30 : i32
    %61 = arith.addi %c0_i32_30, %60 : i32
    %c1_i32_31 = arith.constant 1 : i32
    %62:3 = scf.for %arg21 = %c0_i32_30 to %61 step %c1_i32_31 iter_args(%arg22 = %56, %arg23 = %57, %arg24 = %58) -> (vector<4x64x1xf32>, vector<4x64x1xf32>, vector<4x64x32xf32>)  : i32 {
      %136 = arith.index_cast %arg21 : i32 to index
      %c0_70 = arith.constant 0 : index
      %c0_71 = arith.constant 0 : index
      %c0_72 = arith.constant 0 : index
      %137 = vector.load %arg17[%136, %c0_70, %c0_71, %c0_72] : memref<2x4x64x32xf32, #tpu.memory_space<vmem>>, vector<1x4x64x32xf32>
      %138 = vector.shape_cast %137 : vector<1x4x64x32xf32> to vector<4x64x32xf32>
      %139 = arith.index_cast %arg21 : i32 to index
      %c0_73 = arith.constant 0 : index
      %c0_74 = arith.constant 0 : index
      %c0_75 = arith.constant 0 : index
      %140 = vector.load %arg18[%139, %c0_73, %c0_74, %c0_75] : memref<2x4x64x32xf32, #tpu.memory_space<vmem>>, vector<1x4x64x32xf32>
      %141 = vector.shape_cast %140 : vector<1x4x64x32xf32> to vector<4x64x32xf32>
      "tpu.trace_start"() <{level = 10 : i32, message = "hqd,hkd->hqk"}> : () -> ()
      %cst_76 = arith.constant dense<0.000000e+00> : vector<4x64x64xf32>
      %142 = tpu.matmul %52, %138, %cst_76 {dimension_numbers = #tpu.dot_dimension_numbers<[2], [2], [1], [1], [0, 0, 0, 1, 1, 1], [0], [0]>} : vector<4x64x32xf32>, vector<4x64x32xf32>, vector<4x64x64xf32> -> vector<4x64x64xf32>
      "tpu.trace_stop"() : () -> ()
      %c64_i32_77 = arith.constant 64 : i32
      %143 = arith.muli %arg21, %c64_i32_77 : i32
      %144 = tpu.iota {dimensions = array<i32: 1>} : vector<64x64xi32>
      %145 = vector.broadcast %143 : i32 to vector<64x64xi32>
      %146 = arith.addi %145, %144 : vector<64x64xi32>
      %147 = arith.cmpi sgt, %146, %55 : vector<64x64xi32>
      %cst_78 = arith.constant 0.000000e+00 : f32
      %148 = vector.broadcast %cst_29 : f32 to vector<64x64xf32>
      %149 = vector.broadcast %cst_78 : f32 to vector<64x64xf32>
      %150 = arith.select %147, %148, %149 : vector<64x64xi1>, vector<64x64xf32>
      %151 = vector.shape_cast %150 : vector<64x64xf32> to vector<1x64x64xf32>
      %152 = vector.broadcast %151 : vector<1x64x64xf32> to vector<4x64x64xf32>
      %153 = arith.addf %142, %152 : vector<4x64x64xf32>
      %cst_79 = arith.constant dense<0xFF800000> : vector<4x64xf32>
      %154 = vector.multi_reduction <maximumf>, %153, %cst_79 [2] : vector<4x64x64xf32> to vector<4x64xf32>
      %155 = vector.shape_cast %154 : vector<4x64xf32> to vector<4x64x1xf32>
      %156 = arith.maximumf %arg22, %155 : vector<4x64x1xf32>
      %157 = arith.subf %arg22, %156 : vector<4x64x1xf32>
      %158 = math.exp %157 : vector<4x64x1xf32>
      %159 = vector.broadcast %156 : vector<4x64x1xf32> to vector<4x64x64xf32>
      %160 = arith.subf %153, %159 : vector<4x64x64xf32>
      %161 = math.exp %160 : vector<4x64x64xf32>
      %162 = arith.mulf %158, %arg23 : vector<4x64x1xf32>
      %cst_80 = arith.constant dense<0.000000e+00> : vector<4x64xf32>
      %163 = vector.multi_reduction <add>, %161, %cst_80 [2] : vector<4x64x64xf32> to vector<4x64xf32>
      %164 = vector.shape_cast %163 : vector<4x64xf32> to vector<4x64x1xf32>
      %165 = arith.addf %162, %164 : vector<4x64x1xf32>
      %166 = vector.broadcast %158 : vector<4x64x1xf32> to vector<4x64x32xf32>
      %167 = arith.mulf %166, %arg24 : vector<4x64x32xf32>
      "tpu.trace_start"() <{level = 10 : i32, message = "hqk,hkd->hqd"}> : () -> ()
      %cst_81 = arith.constant dense<0.000000e+00> : vector<4x64x32xf32>
      %168 = tpu.matmul %161, %141, %cst_81 {dimension_numbers = #tpu.dot_dimension_numbers<[2], [1], [1], [2], [0, 0, 0, 1, 1, 2], [0], [0]>} : vector<4x64x64xf32>, vector<4x64x32xf32>, vector<4x64x32xf32> -> vector<4x64x32xf32>
      "tpu.trace_stop"() : () -> ()
      %169 = arith.addf %167, %168 : vector<4x64x32xf32>
      scf.yield %156, %165, %169 : vector<4x64x1xf32>, vector<4x64x1xf32>, vector<4x64x32xf32>
    }
    %63 = tpu.reciprocal %62#1 {approx = true} : vector<4x64x1xf32> -> vector<4x64x1xf32>
    %64 = vector.broadcast %63 : vector<4x64x1xf32> to vector<4x64x32xf32>
    %65 = arith.mulf %62#2, %64 : vector<4x64x32xf32>
    %66 = vector.extract_strided_slice %65 {offsets = [0, 0, 0], sizes = [1, 64, 32], strides = [1, 1, 1]} : vector<4x64x32xf32> to vector<1x64x32xf32>
    %67 = vector.shape_cast %66 : vector<1x64x32xf32> to vector<64x32xf32>
    %c0_32 = arith.constant 0 : index
    %c0_33 = arith.constant 0 : index
    %68 = vector.load %arg20[%c0_32, %c0_33] : memref<64x128xf32, #tpu.memory_space<vmem>>, vector<64x32xf32>
    tpu.vector_store %arg20[%c0_32, %c0_33], %67 {strides = array<i32>} : memref<64x128xf32, #tpu.memory_space<vmem>>, vector<64x32xf32>,
    %69 = vector.extract_strided_slice %65 {offsets = [1, 0, 0], sizes = [1, 64, 32], strides = [1, 1, 1]} : vector<4x64x32xf32> to vector<1x64x32xf32>
    %70 = vector.shape_cast %69 : vector<1x64x32xf32> to vector<64x32xf32>
    %c0_34 = arith.constant 0 : index
    %c32 = arith.constant 32 : index
    %71 = vector.load %arg20[%c0_34, %c32] : memref<64x128xf32, #tpu.memory_space<vmem>>, vector<64x32xf32>
    tpu.vector_store %arg20[%c0_34, %c32], %70 {strides = array<i32>} : memref<64x128xf32, #tpu.memory_space<vmem>>, vector<64x32xf32>,
    %72 = vector.extract_strided_slice %65 {offsets = [2, 0, 0], sizes = [1, 64, 32], strides = [1, 1, 1]} : vector<4x64x32xf32> to vector<1x64x32xf32>
    %73 = vector.shape_cast %72 : vector<1x64x32xf32> to vector<64x32xf32>
    %c0_35 = arith.constant 0 : index
    %c64 = arith.constant 64 : index
    %74 = vector.load %arg20[%c0_35, %c64] : memref<64x128xf32, #tpu.memory_space<vmem>>, vector<64x32xf32>
    tpu.vector_store %arg20[%c0_35, %c64], %73 {strides = array<i32>} : memref<64x128xf32, #tpu.memory_space<vmem>>, vector<64x32xf32>,
    %75 = vector.extract_strided_slice %65 {offsets = [3, 0, 0], sizes = [1, 64, 32], strides = [1, 1, 1]} : vector<4x64x32xf32> to vector<1x64x32xf32>
    %76 = vector.shape_cast %75 : vector<1x64x32xf32> to vector<64x32xf32>
    %c0_36 = arith.constant 0 : index
    %c96 = arith.constant 96 : index
    %77 = vector.load %arg20[%c0_36, %c96] : memref<64x128xf32, #tpu.memory_space<vmem>>, vector<64x32xf32>
    tpu.vector_store %arg20[%c0_36, %c96], %76 {strides = array<i32>} : memref<64x128xf32, #tpu.memory_space<vmem>>, vector<64x32xf32>,
    %c0_37 = arith.constant 0 : index
    %c0_38 = arith.constant 0 : index
    %78 = vector.load %arg20[%c0_37, %c0_38] : memref<64x128xf32, #tpu.memory_space<vmem>>, vector<64x128xf32>
    %c0_39 = arith.constant 0 : index
    %c0_40 = arith.constant 0 : index
    %79 = vector.load %arg6[%c0_39, %c0_40] : memref<128x128xf32, #tpu.memory_space<vmem>>, vector<128x128xf32>
    %cst_41 = arith.constant dense<0.000000e+00> : vector<64x128xf32>
    %80 = tpu.matmul %78, %79, %cst_41 {dimension_numbers = #tpu.dot_dimension_numbers<[1], [0], [0], [1], [0, 0, 1, 1], [], []>} : vector<64x128xf32>, vector<128x128xf32>, vector<64x128xf32> -> vector<64x128xf32>
    %c0_42 = arith.constant 0 : index
    %c0_43 = arith.constant 0 : index
    %81 = vector.load %arg7[%c0_42, %c0_43] : memref<1x128xf32, #tpu.memory_space<vmem>>, vector<1x128xf32>
    %82 = vector.broadcast %81 : vector<1x128xf32> to vector<64x128xf32>
    %83 = arith.addf %80, %82 : vector<64x128xf32>
    %84 = arith.addf %9, %83 : vector<64x128xf32>
    %c0_44 = arith.constant 0 : index
    %c0_45 = arith.constant 0 : index
    %85 = vector.load %arg14[%c0_44, %c0_45] : memref<1x128xf32, #tpu.memory_space<vmem>>, vector<1x128xf32>
    %c0_46 = arith.constant 0 : index
    %c0_47 = arith.constant 0 : index
    %86 = vector.load %arg15[%c0_46, %c0_47] : memref<1x128xf32, #tpu.memory_space<vmem>>, vector<1x128xf32>
    %cst_48 = arith.constant dense<0.000000e+00> : vector<64xf32>
    %87 = vector.multi_reduction <add>, %84, %cst_48 [1] : vector<64x128xf32> to vector<64xf32>
    %88 = vector.shape_cast %87 : vector<64xf32> to vector<64x1xf32>
    %cst_49 = arith.constant 1.280000e+02 : f32
    %89 = vector.broadcast %cst_49 : f32 to vector<64x1xf32>
    %90 = arith.divf %88, %89 : vector<64x1xf32>
    %91 = vector.broadcast %90 : vector<64x1xf32> to vector<64x128xf32>
    %92 = arith.subf %84, %91 : vector<64x128xf32>
    %93 = arith.mulf %92, %92 : vector<64x128xf32>
    %cst_50 = arith.constant dense<0.000000e+00> : vector<64xf32>
    %94 = vector.multi_reduction <add>, %93, %cst_50 [1] : vector<64x128xf32> to vector<64xf32>
    %95 = vector.shape_cast %94 : vector<64xf32> to vector<64x1xf32>
    %cst_51 = arith.constant 1.280000e+02 : f32
    %96 = vector.broadcast %cst_51 : f32 to vector<64x1xf32>
    %97 = arith.divf %95, %96 : vector<64x1xf32>
    %98 = vector.broadcast %90 : vector<64x1xf32> to vector<64x128xf32>
    %99 = arith.subf %84, %98 : vector<64x128xf32>
    %cst_52 = arith.constant 9.99999974E-6 : f32
    %100 = vector.broadcast %cst_52 : f32 to vector<64x1xf32>
    %101 = arith.addf %97, %100 : vector<64x1xf32>
    %102 = math.sqrt %101 : vector<64x1xf32>
    %103 = vector.broadcast %102 : vector<64x1xf32> to vector<64x128xf32>
    %104 = arith.divf %99, %103 : vector<64x128xf32>
    %105 = vector.broadcast %85 : vector<1x128xf32> to vector<64x128xf32>
    %106 = arith.mulf %105, %104 : vector<64x128xf32>
    %107 = vector.broadcast %86 : vector<1x128xf32> to vector<64x128xf32>
    %108 = arith.addf %106, %107 : vector<64x128xf32>
    %c0_53 = arith.constant 0 : index
    %c0_54 = arith.constant 0 : index
    %109 = vector.load %arg8[%c0_53, %c0_54] : memref<128x512xf32, #tpu.memory_space<vmem>>, vector<128x512xf32>
    %cst_55 = arith.constant dense<0.000000e+00> : vector<64x512xf32>
    %110 = tpu.matmul %108, %109, %cst_55 {dimension_numbers = #tpu.dot_dimension_numbers<[1], [0], [0], [1], [0, 0, 1, 1], [], []>} : vector<64x128xf32>, vector<128x512xf32>, vector<64x512xf32> -> vector<64x512xf32>
    %c0_56 = arith.constant 0 : index
    %c0_57 = arith.constant 0 : index
    %111 = vector.load %arg9[%c0_56, %c0_57] : memref<1x512xf32, #tpu.memory_space<vmem>>, vector<1x512xf32>
    %112 = vector.broadcast %111 : vector<1x512xf32> to vector<64x512xf32>
    %113 = arith.addf %110, %112 : vector<64x512xf32>
    %cst_58 = arith.constant 5.000000e-01 : f32
    %114 = vector.broadcast %cst_58 : f32 to vector<64x512xf32>
    %115 = arith.mulf %114, %113 : vector<64x512xf32>
    %cst_59 = arith.constant 4.471500e-02 : f32
    %116 = vector.broadcast %cst_59 : f32 to vector<64x512xf32>
    %117 = arith.mulf %116, %113 : vector<64x512xf32>
    %118 = arith.mulf %117, %113 : vector<64x512xf32>
    %119 = arith.mulf %118, %113 : vector<64x512xf32>
    %120 = arith.addf %113, %119 : vector<64x512xf32>
    %cst_60 = arith.constant 0.797884583 : f32
    %121 = vector.broadcast %cst_60 : f32 to vector<64x512xf32>
    %122 = arith.mulf %121, %120 : vector<64x512xf32>
    %123 = math.tanh %122 : vector<64x512xf32>
    %cst_61 = arith.constant 1.000000e+00 : f32
    %124 = vector.broadcast %cst_61 : f32 to vector<64x512xf32>
    %125 = arith.addf %124, %123 : vector<64x512xf32>
    %126 = arith.mulf %115, %125 : vector<64x512xf32>
    %c0_62 = arith.constant 0 : index
    %c0_63 = arith.constant 0 : index
    %127 = vector.load %arg10[%c0_62, %c0_63] : memref<512x128xf32, #tpu.memory_space<vmem>>, vector<512x128xf32>
    %cst_64 = arith.constant dense<0.000000e+00> : vector<64x128xf32>
    %128 = tpu.matmul %126, %127, %cst_64 {dimension_numbers = #tpu.dot_dimension_numbers<[1], [0], [0], [1], [0, 0, 1, 1], [], []>} : vector<64x512xf32>, vector<512x128xf32>, vector<64x128xf32> -> vector<64x128xf32>
    %c0_65 = arith.constant 0 : index
    %c0_66 = arith.constant 0 : index
    %129 = vector.load %arg11[%c0_65, %c0_66] : memref<1x128xf32, #tpu.memory_space<vmem>>, vector<1x128xf32>
    %130 = vector.broadcast %129 : vector<1x128xf32> to vector<64x128xf32>
    %131 = arith.addf %128, %130 : vector<64x128xf32>
    %132 = arith.addf %84, %131 : vector<64x128xf32>
    %c0_67 = arith.constant 0 : index
    %c0_68 = arith.constant 0 : index
    %c0_69 = arith.constant 0 : index
    %133 = vector.load %arg16[%c0_67, %c0_68, %c0_69] : memref<1x64x128xf32, #tpu.memory_space<vmem>>, vector<1x64x128xf32>
    %134 = vector.shape_cast %133 : vector<1x64x128xf32> to vector<64x128xf32>
    %135 = vector.shape_cast %132 : vector<64x128xf32> to vector<1x64x128xf32>
    tpu.vector_store %arg16[%c0_67, %c0_68, %c0_69], %135 {strides = array<i32>} : memref<1x64x128xf32, #tpu.memory_space<vmem>>, vector<1x64x128xf32>,
    return
  }
  func.func @transform_0(%arg0: i32, %arg1: i32) -> (i32, i32, i32) {
    %c0_i32 = arith.constant 0 : i32
    %c0_i32_0 = arith.constant 0 : i32
    %c0_i32_1 = arith.constant 0 : i32
    return %arg0, %c0_i32, %c0_i32_0 : i32, i32, i32
  }
  func.func @transform_1(%arg0: i32, %arg1: i32) -> (i32, i32) {
    %c0_i32 = arith.constant 0 : i32
    %c0_i32_0 = arith.constant 0 : i32
    %c0_i32_1 = arith.constant 0 : i32
    return %c0_i32, %c0_i32_0 : i32, i32
  }
  func.func @transform_2(%arg0: i32, %arg1: i32) -> (i32, i32) {
    %c0_i32 = arith.constant 0 : i32
    %c0_i32_0 = arith.constant 0 : i32
    %c0_i32_1 = arith.constant 0 : i32
    return %c0_i32, %c0_i32_0 : i32, i32
  }
  func.func @transform_3(%arg0: i32, %arg1: i32) -> (i32, i32) {
    %c0_i32 = arith.constant 0 : i32
    %c0_i32_0 = arith.constant 0 : i32
    %c0_i32_1 = arith.constant 0 : i32
    return %c0_i32, %c0_i32_0 : i32, i32
  }
  func.func @transform_4(%arg0: i32, %arg1: i32) -> (i32, i32) {
    %c0_i32 = arith.constant 0 : i32
    %c0_i32_0 = arith.constant 0 : i32
    %c0_i32_1 = arith.constant 0 : i32
    return %c0_i32, %c0_i32_0 : i32, i32
  }
  func.func @transform_5(%arg0: i32, %arg1: i32) -> (i32, i32) {
    %c0_i32 = arith.constant 0 : i32
    %c0_i32_0 = arith.constant 0 : i32
    %c0_i32_1 = arith.constant 0 : i32
    return %c0_i32, %c0_i32_0 : i32, i32
  }
  func.func @transform_6(%arg0: i32, %arg1: i32) -> (i32, i32) {
    %c0_i32 = arith.constant 0 : i32
    %c0_i32_0 = arith.constant 0 : i32
    %c0_i32_1 = arith.constant 0 : i32
    return %c0_i32, %c0_i32_0 : i32, i32
  }
  func.func @transform_7(%arg0: i32, %arg1: i32) -> (i32, i32) {
    %c0_i32 = arith.constant 0 : i32
    %c0_i32_0 = arith.constant 0 : i32
    %c0_i32_1 = arith.constant 0 : i32
    return %c0_i32, %c0_i32_0 : i32, i32
  }
  func.func @transform_8(%arg0: i32, %arg1: i32) -> (i32, i32) {
    %c0_i32 = arith.constant 0 : i32
    %c0_i32_0 = arith.constant 0 : i32
    %c0_i32_1 = arith.constant 0 : i32
    return %c0_i32, %c0_i32_0 : i32, i32
  }
  func.func @transform_9(%arg0: i32, %arg1: i32) -> (i32, i32) {
    %c0_i32 = arith.constant 0 : i32
    %c0_i32_0 = arith.constant 0 : i32
    %c0_i32_1 = arith.constant 0 : i32
    return %c0_i32, %c0_i32_0 : i32, i32
  }
  func.func @transform_10(%arg0: i32, %arg1: i32) -> (i32, i32) {
    %c0_i32 = arith.constant 0 : i32
    %c0_i32_0 = arith.constant 0 : i32
    %c0_i32_1 = arith.constant 0 : i32
    return %c0_i32, %c0_i32_0 : i32, i32
  }
  func.func @transform_11(%arg0: i32, %arg1: i32) -> (i32, i32) {
    %c0_i32 = arith.constant 0 : i32
    %c0_i32_0 = arith.constant 0 : i32
    %c0_i32_1 = arith.constant 0 : i32
    return %c0_i32, %c0_i32_0 : i32, i32
  }
  func.func @transform_12(%arg0: i32, %arg1: i32) -> (i32, i32) {
    %c0_i32 = arith.constant 0 : i32
    %c0_i32_0 = arith.constant 0 : i32
    %c0_i32_1 = arith.constant 0 : i32
    return %c0_i32, %c0_i32_0 : i32, i32
  }
  func.func @transform_13(%arg0: i32, %arg1: i32) -> (i32, i32) {
    %c0_i32 = arith.constant 0 : i32
    %c0_i32_0 = arith.constant 0 : i32
    %c0_i32_1 = arith.constant 0 : i32
    return %c0_i32, %c0_i32_0 : i32, i32
  }
  func.func @transform_14(%arg0: i32, %arg1: i32) -> (i32, i32, i32) {
    %c0_i32 = arith.constant 0 : i32
    %c0_i32_0 = arith.constant 0 : i32
    return %arg0, %arg1, %c0_i32 : i32, i32, i32
  }
}

</mosaic_0001>

<llo_original>
// kernel: tpu_custom_call.1
$region0: #{tpu_custom_call.1}
  #allocation0 [shape = 'u32[]', space=smem, size = 0x4, offset = 0x4, fixed_abs, tag = 'smem constant byte address 0x4 - core index']
  #allocation1 [shape = 'u32[144,128]{1,0:T(1,128)}', space=vmem, size = 0x12000, scoped, tag = 'internal scratch']
  #allocation2 [shape = 'f32[2,4,64,32]{3,2,1,0:T(8,128)}', space=vmem, size = 0x40000, scoped, tag = 'scratch operand']
  #allocation3 [shape = 'f32[2,4,64,32]{3,2,1,0:T(8,128)}', space=vmem, size = 0x40000, scoped, tag = 'scratch operand']
  #allocation4 [shape = 'f32[4,64,32]{2,1,0:T(8,128)}', space=vmem, size = 0x20000, scoped, tag = 'scratch operand']
  #allocation5 [shape = 'f32[64,128]{1,0:T(8,128)}', space=vmem, size = 0x8000, scoped, tag = 'scratch operand']
  %s0 = inlined_call_operand.hbm [shape: f32[2,128,128], index: 0, kind: input, shape index: {}]
  %s1 = inlined_call_operand.hbm [shape: f32[128,128], index: 1, kind: input, shape index: {}]
  %s2 = inlined_call_operand.hbm [shape: f32[128,128], index: 2, kind: input, shape index: {}]
  %s3 = inlined_call_operand.hbm [shape: f32[128,128], index: 3, kind: input, shape index: {}]
  %s4 = inlined_call_operand.hbm [shape: f32[128,128], index: 4, kind: input, shape index: {}]
  %s5 = inlined_call_operand.hbm [shape: f32[1,128], index: 5, kind: input, shape index: {}]
  %s6 = inlined_call_operand.hbm [shape: f32[128,512], index: 6, kind: input, shape index: {}]
  %s7 = inlined_call_operand.hbm [shape: f32[1,512], index: 7, kind: input, shape index: {}]
  %s8 = inlined_call_operand.hbm [shape: f32[512,128], index: 8, kind: input, shape index: {}]
  %s9 = inlined_call_operand.hbm [shape: f32[1,128], index: 9, kind: input, shape index: {}]
  %s10 = inlined_call_operand.hbm [shape: f32[1,128], index: 10, kind: input, shape index: {}]
  %s11 = inlined_call_operand.hbm [shape: f32[1,128], index: 11, kind: input, shape index: {}]
  %s12 = inlined_call_operand.hbm [shape: f32[1,128], index: 12, kind: input, shape index: {}]
  %s13 = inlined_call_operand.hbm [shape: f32[1,128], index: 13, kind: input, shape index: {}]
  %s14 = inlined_call_operand.hbm [shape: f32[2,128,128], index: 14, kind: output, shape index: {}]
  %s15 = sld [smem:[#allocation0]]
  $region156: #{tpu_custom_call.1} parent=0
    _
  %s17 = ssub.s32 1, %s15
  %s18 = scalar_select 0, %s17, %s15
  $region1: #{tpu_custom_call.1} parent=0
    #allocation6 [shape = 'u8[131072]{0}', space=vmem, size = 0x20000, scoped, tag = 'input window, operand 0']
    #allocation7 [shape = 's32[2]{0}', space=sflag, size = 0x8, scoped, tag = 'scoped memory for tpu_custom_call.1']
    #allocation8 [shape = 's32[2]{0}', space=sflag, size = 0x8, scoped, tag = 'scoped memory for tpu_custom_call.1']
    #allocation9 [shape = 'u8[65536]{0}', space=vmem, size = 0x10000, scoped, tag = 'input window, operand 1, single buffered']
    #allocation10 [shape = 's32[1]{0}', space=sflag, size = 0x4, scoped, tag = 'scoped memory for tpu_custom_call.1']
    #allocation11 [shape = 'u8[65536]{0}', space=vmem, size = 0x10000, scoped, tag = 'input window, operand 2, single buffered']
    #allocation12 [shape = 'u8[65536]{0}', space=vmem, size = 0x10000, scoped, tag = 'input window, operand 3, single buffered']
    #allocation13 [shape = 's32[1]{0}', space=sflag, size = 0x4, scoped, tag = 'scoped memory for tpu_custom_call.1']
    #allocation14 [shape = 'u8[65536]{0}', space=vmem, size = 0x10000, scoped, tag = 'input window, operand 4, single buffered']
    #allocation15 [shape = 'u8[512]{0}', space=vmem, size = 0x400, scoped, tag = 'input window, operand 5, single buffered']
    #allocation16 [shape = 's32[1]{0}', space=sflag, size = 0x4, scoped, tag = 'scoped memory for tpu_custom_call.1']
    #allocation17 [shape = 'u8[262144]{0}', space=vmem, size = 0x40000, scoped, tag = 'input window, operand 6, single buffered']
    #allocation18 [shape = 'u8[2048]{0}', space=vmem, size = 0x800, scoped, tag = 'input window, operand 7, single buffered']
    #allocation19 [shape = 's32[1]{0}', space=sflag, size = 0x4, scoped, tag = 'scoped memory for tpu_custom_call.1']
    #allocation20 [shape = 'u8[262144]{0}', space=vmem, size = 0x40000, scoped, tag = 'input window, operand 8, single buffered']
    #allocation21 [shape = 'u8[512]{0}', space=vmem, size = 0x400, scoped, tag = 'input window, operand 9, single buffered']
    #allocation22 [shape = 's32[1]{0}', space=sflag, size = 0x4, scoped, tag = 'scoped memory for tpu_custom_call.1']
    #allocation23 [shape = 'u8[512]{0}', space=vmem, size = 0x400, scoped, tag = 'input window, operand 10, single buffered']
    #allocation24 [shape = 'u8[512]{0}', space=vmem, size = 0x400, scoped, tag = 'input window, operand 11, single buffered']
    #allocation25 [shape = 's32[1]{0}', space=sflag, size = 0x4, scoped, tag = 'scoped memory for tpu_custom_call.1']
    #allocation26 [shape = 'u8[512]{0}', space=vmem, size = 0x400, scoped, tag = 'input window, operand 12, single buffered']
    #allocation27 [shape = 'u8[512]{0}', space=vmem, size = 0x400, scoped, tag = 'input window, operand 13, single buffered']
    #allocation28 [shape = 's32[1]{0}', space=sflag, size = 0x4, scoped, tag = 'scoped memory for tpu_custom_call.1']
    #allocation29 [shape = 'u8[65536]{0}', space=vmem, size = 0x10000, scoped, tag = 'output window, operand 0']
    %19 = vsyncpa [#allocation7], 0
    %s20 = scalar_lea.sflag [#allocation7], 1
    %21 = vsyncpa %s20, 0
    %22 = vsyncpa [#allocation10], 0
    %23 = vsyncpa [#allocation13], 0
    %24 = vsyncpa [#allocation16], 0
    %25 = vsyncpa [#allocation19], 0
    %26 = vsyncpa [#allocation22], 0
    %27 = vsyncpa [#allocation25], 0
    %28 = vsyncpa [#allocation28], 0
    %29 = vsyncpa [#allocation8], 0
    %s30 = scalar_lea.sflag [#allocation8], 1
    %31 = vsyncpa %s30, 0
    loop: start=0, step=1, limit=6
    $region2: #{tpu_custom_call.1} parent=1 // loop_pre_header
      _
    $region3: #{tpu_custom_call.1} parent=1 // loop_header
      %s33 = sphi 0, %s37
      %p34 = scmp.ge.s32.totalorder %s33, 6
      %s40 = sphi 0, %s52
      %s41 = sphi 0, %s48
      %s42 = sphi 0, %s40
      %s43 = sphi 0, %s41
      %s44 = sphi 0, %s42
      %s45 = sphi 0, %s43
      %s55 = sphi 0, %s57
      %s58 = sphi 0, %s55
      %s59 = sphi 0, %s58
      %s75 = sphi 0, %s59
      %s79 = sphi 0, %s79
      %s81 = sphi 0, %s79
      %s82 = sphi 0, %s81
      %s96 = sphi 0, %s82
      %s100 = sphi 0, %s100
      %s102 = sphi 0, %s100
      %s103 = sphi 0, %s102
      %s117 = sphi 0, %s103
      %s121 = sphi 0, %s121
      %s123 = sphi 0, %s121
      %s124 = sphi 0, %s123
      %s138 = sphi 0, %s124
      %s142 = sphi 0, %s142
      %s144 = sphi 0, %s142
      %s145 = sphi 0, %s144
      %s159 = sphi 0, %s145
      %s163 = sphi 0, %s163
      %s165 = sphi 0, %s163
      %s166 = sphi 0, %s165
      %s180 = sphi 0, %s166
      %s184 = sphi 0, %s184
      %s186 = sphi 0, %s184
      %s187 = sphi 0, %s186
      %s201 = sphi 0, %s187
      %s205 = sphi 0, %s205
      %s207 = sphi 0, %s205
      %s208 = sphi 0, %s207
      %s222 = sphi 0, %s208
      %s226 = sphi 0, %s226
      %s228 = sphi 0, %s226
      %s229 = sphi 0, %s228
      %s243 = sphi 0, %s229
      %s247 = sphi 0, %s247
      %s249 = sphi 0, %s247
      %s250 = sphi 0, %s249
      %s264 = sphi 0, %s250
      %s268 = sphi 0, %s268
      %s270 = sphi 0, %s268
      %s271 = sphi 0, %s270
      %s285 = sphi 0, %s271
      %s289 = sphi 0, %s289
      %s291 = sphi 0, %s289
      %s292 = sphi 0, %s291
      %s306 = sphi 0, %s292
      %s310 = sphi 0, %s310
      %s312 = sphi 0, %s310
      %s313 = sphi 0, %s312
      %s327 = sphi 0, %s313
      %s331 = sphi 0, %s331
      %s333 = sphi 0, %s331
      %s334 = sphi 0, %s333
      %s348 = sphi 0, %s334
      %s356 = sphi 0, %s358
      %s359 = sphi 0, %s356
      %s360 = sphi 0, %s359
      %s376 = sphi 0, %s360
    $region4: #{tpu_custom_call.1} parent=1 // loop_header_branch
      %36 = sbr.rel (%p34) target = $region8
    $region5: #{tpu_custom_call.1} parent=1 // loop_body
      %s38 = ssub.s32 %s33, 1
      %s39 = ssub.s32 %s33, 2
      %s46 = sadd.s32 1, %s41
      %p47 = scmp.ge.s32.totalorder %s46, 2
      %s48 = scalar_select %p47, 0, %s46
      %s49 = sadd.s32 1, %s40
      %s50 = scalar_select %p47, %s49, %s40
      %p51 = scmp.ge.s32.totalorder %s50, 2
      %s52 = scalar_select %p51, 0, %s50
      %s53 = ssub.s32 %s40, %s52
      %p54 = scmp.eq.s32.totalorder %s53, 0
      %s56 = sadd.s32 %s55, 1
      %s57 = scalar_select %p54, %s55, %s56
      %p60 = pneg %p54
      %p61 = scmp.eq.s32.totalorder %s33, 3
      %p62 = por %p60, %p61
      %p63 = scmp.ne.s32.totalorder %s55, %s58
      %p64 = scmp.eq.s32.totalorder %s33, 0
      %p65 = por %p63, %p64
      %p66 = scmp.ne.s32.totalorder %s55, %s58
      %p67 = scmp.eq.s32.totalorder %s38, 3
      %p68 = por %p66, %p67
      %p69 = scmp.ne.s32.totalorder %s58, %s59
      %p70 = scmp.eq.s32.totalorder %s38, 0
      %p71 = por %p69, %p70
      %p72 = scmp.ne.s32.totalorder %s58, %s59
      %p73 = scmp.eq.s32.totalorder %s39, 3
      %p74 = por %p72, %p73
      %p76 = scmp.ne.s32.totalorder %s59, %s75
      %p77 = scmp.eq.s32.totalorder %s39, 0
      %p78 = por %p76, %p77
      %s80 = sadd.s32 %s79, 1
      %p83 = scmp.eq.s32.totalorder %s33, 3
      %p84 = scmp.ne.s32.totalorder %s79, %s81
      %p85 = scmp.eq.s32.totalorder %s33, 0
      %p86 = por %p84, %p85
      %p87 = scmp.ne.s32.totalorder %s79, %s81
      %p88 = scmp.eq.s32.totalorder %s38, 3
      %p89 = por %p87, %p88
      %p90 = scmp.ne.s32.totalorder %s81, %s82
      %p91 = scmp.eq.s32.totalorder %s38, 0
      %p92 = por %p90, %p91
      %p93 = scmp.ne.s32.totalorder %s81, %s82
      %p94 = scmp.eq.s32.totalorder %s39, 3
      %p95 = por %p93, %p94
      %p97 = scmp.ne.s32.totalorder %s82, %s96
      %p98 = scmp.eq.s32.totalorder %s39, 0
      %p99 = por %p97, %p98
      %s101 = sadd.s32 %s100, 1
      %p104 = scmp.eq.s32.totalorder %s33, 3
      %p105 = scmp.ne.s32.totalorder %s100, %s102
      %p106 = scmp.eq.s32.totalorder %s33, 0
      %p107 = por %p105, %p106
      %p108 = scmp.ne.s32.totalorder %s100, %s102
      %p109 = scmp.eq.s32.totalorder %s38, 3
      %p110 = por %p108, %p109
      %p111 = scmp.ne.s32.totalorder %s102, %s103
      %p112 = scmp.eq.s32.totalorder %s38, 0
      %p113 = por %p111, %p112
      %p114 = scmp.ne.s32.totalorder %s102, %s103
      %p115 = scmp.eq.s32.totalorder %s39, 3
      %p116 = por %p114, %p115
      %p118 = scmp.ne.s32.totalorder %s103, %s117
      %p119 = scmp.eq.s32.totalorder %s39, 0
      %p120 = por %p118, %p119
      %s122 = sadd.s32 %s121, 1
      %p125 = scmp.eq.s32.totalorder %s33, 3
      %p126 = scmp.ne.s32.totalorder %s121, %s123
      %p127 = scmp.eq.s32.totalorder %s33, 0
      %p128 = por %p126, %p127
      %p129 = scmp.ne.s32.totalorder %s121, %s123
      %p130 = scmp.eq.s32.totalorder %s38, 3
      %p131 = por %p129, %p130
      %p132 = scmp.ne.s32.totalorder %s123, %s124
      %p133 = scmp.eq.s32.totalorder %s38, 0
      %p134 = por %p132, %p133
      %p135 = scmp.ne.s32.totalorder %s123, %s124
      %p136 = scmp.eq.s32.totalorder %s39, 3
      %p137 = por %p135, %p136
      %p139 = scmp.ne.s32.totalorder %s124, %s138
      %p140 = scmp.eq.s32.totalorder %s39, 0
      %p141 = por %p139, %p140
      %s143 = sadd.s32 %s142, 1
      %p146 = scmp.eq.s32.totalorder %s33, 3
      %p147 = scmp.ne.s32.totalorder %s142, %s144
      %p148 = scmp.eq.s32.totalorder %s33, 0
      %p149 = por %p147, %p148
      %p150 = scmp.ne.s32.totalorder %s142, %s144
      %p151 = scmp.eq.s32.totalorder %s38, 3
      %p152 = por %p150, %p151
      %p153 = scmp.ne.s32.totalorder %s144, %s145
      %p154 = scmp.eq.s32.totalorder %s38, 0
      %p155 = por %p153, %p154
      %p156 = scmp.ne.s32.totalorder %s144, %s145
      %p157 = scmp.eq.s32.totalorder %s39, 3
      %p158 = por %p156, %p157
      %p160 = scmp.ne.s32.totalorder %s145, %s159
      %p161 = scmp.eq.s32.totalorder %s39, 0
      %p162 = por %p160, %p161
      %s164 = sadd.s32 %s163, 1
      %p167 = scmp.eq.s32.totalorder %s33, 3
      %p168 = scmp.ne.s32.totalorder %s163, %s165
      %p169 = scmp.eq.s32.totalorder %s33, 0
      %p170 = por %p168, %p169
      %p171 = scmp.ne.s32.totalorder %s163, %s165
      %p172 = scmp.eq.s32.totalorder %s38, 3
      %p173 = por %p171, %p172
      %p174 = scmp.ne.s32.totalorder %s165, %s166
      %p175 = scmp.eq.s32.totalorder %s38, 0
      %p176 = por %p174, %p175
      %p177 = scmp.ne.s32.totalorder %s165, %s166
      %p178 = scmp.eq.s32.totalorder %s39, 3
      %p179 = por %p177, %p178
      %p181 = scmp.ne.s32.totalorder %s166, %s180
      %p182 = scmp.eq.s32.totalorder %s39, 0
      %p183 = por %p181, %p182
      %s185 = sadd.s32 %s184, 1
      %p188 = scmp.eq.s32.totalorder %s33, 3
      %p189 = scmp.ne.s32.totalorder %s184, %s186
      %p190 = scmp.eq.s32.totalorder %s33, 0
      %p191 = por %p189, %p190
      %p192 = scmp.ne.s32.totalorder %s184, %s186
      %p193 = scmp.eq.s32.totalorder %s38, 3
      %p194 = por %p192, %p193
      %p195 = scmp.ne.s32.totalorder %s186, %s187
      %p196 = scmp.eq.s32.totalorder %s38, 0
      %p197 = por %p195, %p196
      %p198 = scmp.ne.s32.totalorder %s186, %s187
      %p199 = scmp.eq.s32.totalorder %s39, 3
      %p200 = por %p198, %p199
      %p202 = scmp.ne.s32.totalorder %s187, %s201
      %p203 = scmp.eq.s32.totalorder %s39, 0
      %p204 = por %p202, %p203
      %s206 = sadd.s32 %s205, 1
      %p209 = scmp.eq.s32.totalorder %s33, 3
      %p210 = scmp.ne.s32.totalorder %s205, %s207
      %p211 = scmp.eq.s32.totalorder %s33, 0
      %p212 = por %p210, %p211
      %p213 = scmp.ne.s32.totalorder %s205, %s207
      %p214 = scmp.eq.s32.totalorder %s38, 3
      %p215 = por %p213, %p214
      %p216 = scmp.ne.s32.totalorder %s207, %s208
      %p217 = scmp.eq.s32.totalorder %s38, 0
      %p218 = por %p216, %p217
      %p219 = scmp.ne.s32.totalorder %s207, %s208
      %p220 = scmp.eq.s32.totalorder %s39, 3
      %p221 = por %p219, %p220
      %p223 = scmp.ne.s32.totalorder %s208, %s222
      %p224 = scmp.eq.s32.totalorder %s39, 0
      %p225 = por %p223, %p224
      %s227 = sadd.s32 %s226, 1
      %p230 = scmp.eq.s32.totalorder %s33, 3
      %p231 = scmp.ne.s32.totalorder %s226, %s228
      %p232 = scmp.eq.s32.totalorder %s33, 0
      %p233 = por %p231, %p232
      %p234 = scmp.ne.s32.totalorder %s226, %s228
      %p235 = scmp.eq.s32.totalorder %s38, 3
      %p236 = por %p234, %p235
      %p237 = scmp.ne.s32.totalorder %s228, %s229
      %p238 = scmp.eq.s32.totalorder %s38, 0
      %p239 = por %p237, %p238
      %p240 = scmp.ne.s32.totalorder %s228, %s229
      %p241 = scmp.eq.s32.totalorder %s39, 3
      %p242 = por %p240, %p241
      %p244 = scmp.ne.s32.totalorder %s229, %s243
      %p245 = scmp.eq.s32.totalorder %s39, 0
      %p246 = por %p244, %p245
      %s248 = sadd.s32 %s247, 1
      %p251 = scmp.eq.s32.totalorder %s33, 3
      %p252 = scmp.ne.s32.totalorder %s247, %s249
      %p253 = scmp.eq.s32.totalorder %s33, 0
      %p254 = por %p252, %p253
      %p255 = scmp.ne.s32.totalorder %s247, %s249
      %p256 = scmp.eq.s32.totalorder %s38, 3
      %p257 = por %p255, %p256
      %p258 = scmp.ne.s32.totalorder %s249, %s250
      %p259 = scmp.eq.s32.totalorder %s38, 0
      %p260 = por %p258, %p259
      %p261 = scmp.ne.s32.totalorder %s249, %s250
      %p262 = scmp.eq.s32.totalorder %s39, 3
      %p263 = por %p261, %p262
      %p265 = scmp.ne.s32.totalorder %s250, %s264
      %p266 = scmp.eq.s32.totalorder %s39, 0
      %p267 = por %p265, %p266
      %s269 = sadd.s32 %s268, 1
      %p272 = scmp.eq.s32.totalorder %s33, 3
      %p273 = scmp.ne.s32.totalorder %s268, %s270
      %p274 = scmp.eq.s32.totalorder %s33, 0
      %p275 = por %p273, %p274
      %p276 = scmp.ne.s32.totalorder %s268, %s270
      %p277 = scmp.eq.s32.totalorder %s38, 3
      %p278 = por %p276, %p277
      %p279 = scmp.ne.s32.totalorder %s270, %s271
      %p280 = scmp.eq.s32.totalorder %s38, 0
      %p281 = por %p279, %p280
      %p282 = scmp.ne.s32.totalorder %s270, %s271
      %p283 = scmp.eq.s32.totalorder %s39, 3
      %p284 = por %p282, %p283
      %p286 = scmp.ne.s32.totalorder %s271, %s285
      %p287 = scmp.eq.s32.totalorder %s39, 0
      %p288 = por %p286, %p287
      %s290 = sadd.s32 %s289, 1
      %p293 = scmp.eq.s32.totalorder %s33, 3
      %p294 = scmp.ne.s32.totalorder %s289, %s291
      %p295 = scmp.eq.s32.totalorder %s33, 0
      %p296 = por %p294, %p295
      %p297 = scmp.ne.s32.totalorder %s289, %s291
      %p298 = scmp.eq.s32.totalorder %s38, 3
      %p299 = por %p297, %p298
      %p300 = scmp.ne.s32.totalorder %s291, %s292
      %p301 = scmp.eq.s32.totalorder %s38, 0
      %p302 = por %p300, %p301
      %p303 = scmp.ne.s32.totalorder %s291, %s292
      %p304 = scmp.eq.s32.totalorder %s39, 3
      %p305 = por %p303, %p304
      %p307 = scmp.ne.s32.totalorder %s292, %s306
      %p308 = scmp.eq.s32.totalorder %s39, 0
      %p309 = por %p307, %p308
      %s311 = sadd.s32 %s310, 1
      %p314 = scmp.eq.s32.totalorder %s33, 3
      %p315 = scmp.ne.s32.totalorder %s310, %s312
      %p316 = scmp.eq.s32.totalorder %s33, 0
      %p317 = por %p315, %p316
      %p318 = scmp.ne.s32.totalorder %s310, %s312
      %p319 = scmp.eq.s32.totalorder %s38, 3
      %p320 = por %p318, %p319
      %p321 = scmp.ne.s32.totalorder %s312, %s313
      %p322 = scmp.eq.s32.totalorder %s38, 0
      %p323 = por %p321, %p322
      %p324 = scmp.ne.s32.totalorder %s312, %s313
      %p325 = scmp.eq.s32.totalorder %s39, 3
      %p326 = por %p324, %p325
      %p328 = scmp.ne.s32.totalorder %s313, %s327
      %p329 = scmp.eq.s32.totalorder %s39, 0
      %p330 = por %p328, %p329
      %s332 = sadd.s32 %s331, 1
      %p335 = scmp.eq.s32.totalorder %s33, 3
      %p336 = scmp.ne.s32.totalorder %s331, %s333
      %p337 = scmp.eq.s32.totalorder %s33, 0
      %p338 = por %p336, %p337
      %p339 = scmp.ne.s32.totalorder %s331, %s333
      %p340 = scmp.eq.s32.totalorder %s38, 3
      %p341 = por %p339, %p340
      %p342 = scmp.ne.s32.totalorder %s333, %s334
      %p343 = scmp.eq.s32.totalorder %s38, 0
      %p344 = por %p342, %p343
      %p345 = scmp.ne.s32.totalorder %s333, %s334
      %p346 = scmp.eq.s32.totalorder %s39, 3
      %p347 = por %p345, %p346
      %p349 = scmp.ne.s32.totalorder %s334, %s348
      %p350 = scmp.eq.s32.totalorder %s39, 0
      %p351 = por %p349, %p350
      %s352 = ssub.s32 %s40, %s52
      %s353 = ssub.s32 %s41, %s48
      %s354 = sor.u32 %s352, %s353
      %p355 = scmp.eq.s32.totalorder %s354, 0
      %s357 = sadd.s32 %s356, 1
      %s358 = scalar_select %p355, %s356, %s357
      %p361 = pneg %p355
      %p362 = scmp.eq.s32.totalorder %s33, 3
      %p363 = por %p361, %p362
      %p364 = scmp.ne.s32.totalorder %s356, %s359
      %p365 = scmp.eq.s32.totalorder %s33, 0
      %p366 = por %p364, %p365
      %p367 = scmp.ne.s32.totalorder %s356, %s359
      %p368 = scmp.eq.s32.totalorder %s38, 3
      %p369 = por %p367, %p368
      %p370 = scmp.ne.s32.totalorder %s359, %s360
      %p371 = scmp.eq.s32.totalorder %s38, 0
      %p372 = por %p370, %p371
      %p373 = scmp.ne.s32.totalorder %s359, %s360
      %p374 = scmp.eq.s32.totalorder %s39, 3
      %p375 = por %p373, %p374
      %p377 = scmp.ne.s32.totalorder %s360, %s376
      %p378 = scmp.eq.s32.totalorder %s39, 0
      %p379 = por %p377, %p378
      %p380 = scmp.le.s32.totalorder 1, %s33
      %p381 = scmp.lt.s32.totalorder %s33, 5
      %p382 = pnand %p380, %p381
      %p383 = pneg %p382
      // Predicated region
      $region9: #{tpu_custom_call.1} parent=5 // pred_check
        _
      $region10: #{tpu_custom_call.1} parent=5 // pred_check_branch
        %385 = sbr.rel (%p382) target = $region12
      $region11: #{tpu_custom_call.1} parent=5 // pred_region
        %s386 = ssub.s32 %s33, 1
        // Predicated region
        $region13: #{tpu_custom_call.1} parent=11 // pred_check
          %p387 = pneg %p92
        $region14: #{tpu_custom_call.1} parent=11 // pred_check_branch
          %389 = sbr.rel (%p387) target = $region16
        $region15: #{tpu_custom_call.1} parent=11 // pred_region
          %s391 = ssub.s32 2048, 2048
          %392 = vsyncadd [#allocation10], %s391
          %s393 = sshll.u32 [#allocation9], 4
          %s394 = int_to_ptr.vmem [resolvable:$true] %s393
          %399 = dma.hbm_to_vmem [thread:$0]  %s1, 2048, %s394, [#allocation10], 128, 128, 8
        $region16: #{tpu_custom_call.1} parent=11 // pred_fallthru
          _
        // Predicated region
        $region17: #{tpu_custom_call.1} parent=11 // pred_check
          %p400 = pneg %p113
        $region18: #{tpu_custom_call.1} parent=11 // pred_check_branch
          %402 = sbr.rel (%p400) target = $region20
        $region19: #{tpu_custom_call.1} parent=11 // pred_region
          %s404 = ssub.s32 2048, 2048
          %405 = vsyncadd [#allocation10], %s404
          %s406 = sshll.u32 [#allocation11], 4
          %s407 = int_to_ptr.vmem [resolvable:$true] %s406
          %412 = dma.hbm_to_vmem [thread:$0]  %s2, 2048, %s407, [#allocation10], 128, 128, 8
        $region20: #{tpu_custom_call.1} parent=11 // pred_fallthru
          _
        // Predicated region
        $region21: #{tpu_custom_call.1} parent=11 // pred_check
          %p413 = pneg %p134
        $region22: #{tpu_custom_call.1} parent=11 // pred_check_branch
          %415 = sbr.rel (%p413) target = $region24
        $region23: #{tpu_custom_call.1} parent=11 // pred_region
          %s417 = ssub.s32 2048, 2048
          %418 = vsyncadd [#allocation13], %s417
          %s419 = sshll.u32 [#allocation12], 4
          %s420 = int_to_ptr.vmem [resolvable:$true] %s419
          %425 = dma.hbm_to_vmem [thread:$0]  %s3, 2048, %s420, [#allocation13], 128, 128, 8
        $region24: #{tpu_custom_call.1} parent=11 // pred_fallthru
          _
        // Predicated region
        $region25: #{tpu_custom_call.1} parent=11 // pred_check
          %p426 = pneg %p155
        $region26: #{tpu_custom_call.1} parent=11 // pred_check_branch
          %428 = sbr.rel (%p426) target = $region28
        $region27: #{tpu_custom_call.1} parent=11 // pred_region
          %s430 = ssub.s32 2048, 2048
          %431 = vsyncadd [#allocation13], %s430
          %s432 = sshll.u32 [#allocation14], 4
          %s433 = int_to_ptr.vmem [resolvable:$true] %s432
          %438 = dma.hbm_to_vmem [thread:$0]  %s4, 2048, %s433, [#allocation13], 128, 128, 8
        $region28: #{tpu_custom_call.1} parent=11 // pred_fallthru
          _
        // Predicated region
        $region29: #{tpu_custom_call.1} parent=11 // pred_check
          %p439 = pneg %p176
        $region30: #{tpu_custom_call.1} parent=11 // pred_check_branch
          %441 = sbr.rel (%p439) target = $region32
        $region31: #{tpu_custom_call.1} parent=11 // pred_region
          %s443 = ssub.s32 16, 16
          %444 = vsyncadd [#allocation16], %s443
          %s446 = sshll.u32 [#allocation15], 4
          %s447 = int_to_ptr.vmem [resolvable:$true] %s446
          %449 = dma.hbm_to_vmem [thread:$0]  %s5, 16, %s447, [#allocation16]
        $region32: #{tpu_custom_call.1} parent=11 // pred_fallthru
          _
        // Predicated region
        $region33: #{tpu_custom_call.1} parent=11 // pred_check
          %p450 = pneg %p197
        $region34: #{tpu_custom_call.1} parent=11 // pred_check_branch
          %452 = sbr.rel (%p450) target = $region36
        $region35: #{tpu_custom_call.1} parent=11 // pred_region
          %s454 = ssub.s32 8192, 8192
          %455 = vsyncadd [#allocation16], %s454
          %s456 = sshll.u32 [#allocation17], 4
          %s457 = int_to_ptr.vmem [resolvable:$true] %s456
          %462 = dma.hbm_to_vmem [thread:$0]  %s6, 8192, %s457, [#allocation16], 512, 512, 32
        $region36: #{tpu_custom_call.1} parent=11 // pred_fallthru
          _
        // Predicated region
        $region37: #{tpu_custom_call.1} parent=11 // pred_check
          %p463 = pneg %p218
        $region38: #{tpu_custom_call.1} parent=11 // pred_check_branch
          %465 = sbr.rel (%p463) target = $region40
        $region39: #{tpu_custom_call.1} parent=11 // pred_region
          %s467 = ssub.s32 64, 64
          %468 = vsyncadd [#allocation19], %s467
          %s470 = sshll.u32 [#allocation18], 4
          %s471 = int_to_ptr.vmem [resolvable:$true] %s470
          %473 = dma.hbm_to_vmem [thread:$0]  %s7, 64, %s471, [#allocation19]
        $region40: #{tpu_custom_call.1} parent=11 // pred_fallthru
          _
        // Predicated region
        $region41: #{tpu_custom_call.1} parent=11 // pred_check
          %p474 = pneg %p239
        $region42: #{tpu_custom_call.1} parent=11 // pred_check_branch
          %476 = sbr.rel (%p474) target = $region44
        $region43: #{tpu_custom_call.1} parent=11 // pred_region
          %s478 = ssub.s32 8192, 8192
          %479 = vsyncadd [#allocation19], %s478
          %s480 = sshll.u32 [#allocation20], 4
          %s481 = int_to_ptr.vmem [resolvable:$true] %s480
          %486 = dma.hbm_to_vmem [thread:$0]  %s8, 8192, %s481, [#allocation19], 128, 128, 8
        $region44: #{tpu_custom_call.1} parent=11 // pred_fallthru
          _
        // Predicated region
        $region45: #{tpu_custom_call.1} parent=11 // pred_check
          %p487 = pneg %p260
        $region46: #{tpu_custom_call.1} parent=11 // pred_check_branch
          %489 = sbr.rel (%p487) target = $region48
        $region47: #{tpu_custom_call.1} parent=11 // pred_region
          %s491 = ssub.s32 16, 16
          %492 = vsyncadd [#allocation22], %s491
          %s494 = sshll.u32 [#allocation21], 4
          %s495 = int_to_ptr.vmem [resolvable:$true] %s494
          %497 = dma.hbm_to_vmem [thread:$0]  %s9, 16, %s495, [#allocation22]
        $region48: #{tpu_custom_call.1} parent=11 // pred_fallthru
          _
        // Predicated region
        $region49: #{tpu_custom_call.1} parent=11 // pred_check
          %p498 = pneg %p281
        $region50: #{tpu_custom_call.1} parent=11 // pred_check_branch
          %500 = sbr.rel (%p498) target = $region52
        $region51: #{tpu_custom_call.1} parent=11 // pred_region
          %s502 = ssub.s32 16, 16
          %503 = vsyncadd [#allocation22], %s502
          %s505 = sshll.u32 [#allocation23], 4
          %s506 = int_to_ptr.vmem [resolvable:$true] %s505
          %508 = dma.hbm_to_vmem [thread:$0]  %s10, 16, %s506, [#allocation22]
        $region52: #{tpu_custom_call.1} parent=11 // pred_fallthru
          _
        // Predicated region
        $region53: #{tpu_custom_call.1} parent=11 // pred_check
          %p509 = pneg %p302
        $region54: #{tpu_custom_call.1} parent=11 // pred_check_branch
          %511 = sbr.rel (%p509) target = $region56
        $region55: #{tpu_custom_call.1} parent=11 // pred_region
          %s513 = ssub.s32 16, 16
          %514 = vsyncadd [#allocation25], %s513
          %s516 = sshll.u32 [#allocation24], 4
          %s517 = int_to_ptr.vmem [resolvable:$true] %s516
          %519 = dma.hbm_to_vmem [thread:$0]  %s11, 16, %s517, [#allocation25]
        $region56: #{tpu_custom_call.1} parent=11 // pred_fallthru
          _
        // Predicated region
        $region57: #{tpu_custom_call.1} parent=11 // pred_check
          %p520 = pneg %p323
        $region58: #{tpu_custom_call.1} parent=11 // pred_check_branch
          %522 = sbr.rel (%p520) target = $region60
        $region59: #{tpu_custom_call.1} parent=11 // pred_region
          %s524 = ssub.s32 16, 16
          %525 = vsyncadd [#allocation25], %s524
          %s527 = sshll.u32 [#allocation26], 4
          %s528 = int_to_ptr.vmem [resolvable:$true] %s527
          %530 = dma.hbm_to_vmem [thread:$0]  %s12, 16, %s528, [#allocation25]
        $region60: #{tpu_custom_call.1} parent=11 // pred_fallthru
          _
        // Predicated region
        $region61: #{tpu_custom_call.1} parent=11 // pred_check
          %p531 = pneg %p344
        $region62: #{tpu_custom_call.1} parent=11 // pred_check_branch
          %533 = sbr.rel (%p531) target = $region64
        $region63: #{tpu_custom_call.1} parent=11 // pred_region
          %s535 = ssub.s32 16, 16
          %536 = vsyncadd [#allocation28], %s535
          %s538 = sshll.u32 [#allocation27], 4
          %s539 = int_to_ptr.vmem [resolvable:$true] %s538
          %541 = dma.hbm_to_vmem [thread:$0]  %s13, 16, %s539, [#allocation28]
        $region64: #{tpu_custom_call.1} parent=11 // pred_fallthru
          _
      $region12: #{tpu_custom_call.1} parent=5 // pred_fallthru
        _
      %p542 = scmp.lt.s32.totalorder %s33, 4
      // Predicated region
      $region65: #{tpu_custom_call.1} parent=5 // pred_check
        %p543 = pneg %p542
      $region66: #{tpu_custom_call.1} parent=5 // pred_check_branch
        %545 = sbr.rel (%p543) target = $region68
      $region67: #{tpu_custom_call.1} parent=5 // pred_region
        // Predicated region
        $region69: #{tpu_custom_call.1} parent=67 // pred_check
          %p546 = pneg %p65
        $region70: #{tpu_custom_call.1} parent=67 // pred_check_branch
          %548 = sbr.rel (%p546) target = $region72
        $region71: #{tpu_custom_call.1} parent=67 // pred_region
          %s549 = sand.u32 %s55, 1
          %s550 = scalar_lea.sflag [#allocation7], %s549
          %s551 = sand.u32 %s55, 1
          %s552 = smul.addr %s551, 128
          %s553 = scalar_lea.vmem [#allocation6], %s552
          %s555 = ssub.s32 2048, 2048
          %556 = vsyncadd %s550, %s555
          %s557 = smul.addr %s40, 16
          %s558 = smul.addr %s557, 128
          %s559 = scalar_lea.hbm %s0, %s558
          %s560 = sshll.u32 %s553, 4
          %s561 = int_to_ptr.vmem [resolvable:$true] %s560
          %566 = dma.hbm_to_vmem [thread:$0]  %s559, 2048, %s561, %s550, 128, 128, 8
        $region72: #{tpu_custom_call.1} parent=67 // pred_fallthru
          _
      $region68: #{tpu_custom_call.1} parent=5 // pred_fallthru
        _
      %p567 = scmp.le.s32.totalorder 1, %s33
      %p568 = scmp.lt.s32.totalorder %s33, 5
      %p569 = pnand %p567, %p568
      %p570 = pneg %p569
      // Predicated region
      $region73: #{tpu_custom_call.1} parent=5 // pred_check
        _
      $region74: #{tpu_custom_call.1} parent=5 // pred_check_branch
        %572 = sbr.rel (%p569) target = $region76
      $region75: #{tpu_custom_call.1} parent=5 // pred_region
        %s573 = ssub.s32 %s33, 1
        %s574 = sand.u32 %s58, 1
        %s575 = scalar_lea.sflag [#allocation7], %s574
        %s576 = sand.u32 %s58, 1
        %s577 = smul.addr %s576, 128
        %s578 = scalar_lea.vmem [#allocation6], %s577
        // Predicated region
        $region77: #{tpu_custom_call.1} parent=75 // pred_check
          %p579 = pneg %p71
        $region78: #{tpu_custom_call.1} parent=75 // pred_check_branch
          %581 = sbr.rel (%p579) target = $region80
        $region79: #{tpu_custom_call.1} parent=75 // pred_region
          %582 = dma.done %s575, 2048
        $region80: #{tpu_custom_call.1} parent=75 // pred_fallthru
          _
        // Predicated region
        $region81: #{tpu_custom_call.1} parent=75 // pred_check
          %p583 = pneg %p92
        $region82: #{tpu_custom_call.1} parent=75 // pred_check_branch
          %585 = sbr.rel (%p583) target = $region84
        $region83: #{tpu_custom_call.1} parent=75 // pred_region
          %586 = dma.done [#allocation10], 2048
        $region84: #{tpu_custom_call.1} parent=75 // pred_fallthru
          _
        // Predicated region
        $region85: #{tpu_custom_call.1} parent=75 // pred_check
          %p587 = pneg %p113
        $region86: #{tpu_custom_call.1} parent=75 // pred_check_branch
          %589 = sbr.rel (%p587) target = $region88
        $region87: #{tpu_custom_call.1} parent=75 // pred_region
          %590 = dma.done [#allocation10], 2048
        $region88: #{tpu_custom_call.1} parent=75 // pred_fallthru
          _
        // Predicated region
        $region89: #{tpu_custom_call.1} parent=75 // pred_check
          %p591 = pneg %p134
        $region90: #{tpu_custom_call.1} parent=75 // pred_check_branch
          %593 = sbr.rel (%p591) target = $region92
        $region91: #{tpu_custom_call.1} parent=75 // pred_region
          %594 = dma.done [#allocation13], 2048
        $region92: #{tpu_custom_call.1} parent=75 // pred_fallthru
          _
        // Predicated region
        $region93: #{tpu_custom_call.1} parent=75 // pred_check
          %p595 = pneg %p155
        $region94: #{tpu_custom_call.1} parent=75 // pred_check_branch
          %597 = sbr.rel (%p595) target = $region96
        $region95: #{tpu_custom_call.1} parent=75 // pred_region
          %598 = dma.done [#allocation13], 2048
        $region96: #{tpu_custom_call.1} parent=75 // pred_fallthru
          _
        // Predicated region
        $region97: #{tpu_custom_call.1} parent=75 // pred_check
          %p599 = pneg %p176
        $region98: #{tpu_custom_call.1} parent=75 // pred_check_branch
          %601 = sbr.rel (%p599) target = $region100
        $region99: #{tpu_custom_call.1} parent=75 // pred_region
          %602 = dma.done [#allocation16], 16
        $region100: #{tpu_custom_call.1} parent=75 // pred_fallthru
          _
        // Predicated region
        $region101: #{tpu_custom_call.1} parent=75 // pred_check
          %p603 = pneg %p197
        $region102: #{tpu_custom_call.1} parent=75 // pred_check_branch
          %605 = sbr.rel (%p603) target = $region104
        $region103: #{tpu_custom_call.1} parent=75 // pred_region
          %606 = dma.done [#allocation16], 8192
        $region104: #{tpu_custom_call.1} parent=75 // pred_fallthru
          _
        // Predicated region
        $region105: #{tpu_custom_call.1} parent=75 // pred_check
          %p607 = pneg %p218
        $region106: #{tpu_custom_call.1} parent=75 // pred_check_branch
          %609 = sbr.rel (%p607) target = $region108
        $region107: #{tpu_custom_call.1} parent=75 // pred_region
          %610 = dma.done [#allocation19], 64
        $region108: #{tpu_custom_call.1} parent=75 // pred_fallthru
          _
        // Predicated region
        $region109: #{tpu_custom_call.1} parent=75 // pred_check
          %p611 = pneg %p239
        $region110: #{tpu_custom_call.1} parent=75 // pred_check_branch
          %613 = sbr.rel (%p611) target = $region112
        $region111: #{tpu_custom_call.1} parent=75 // pred_region
          %614 = dma.done [#allocation19], 8192
        $region112: #{tpu_custom_call.1} parent=75 // pred_fallthru
          _
        // Predicated region
        $region113: #{tpu_custom_call.1} parent=75 // pred_check
          %p615 = pneg %p260
        $region114: #{tpu_custom_call.1} parent=75 // pred_check_branch
          %617 = sbr.rel (%p615) target = $region116
        $region115: #{tpu_custom_call.1} parent=75 // pred_region
          %618 = dma.done [#allocation22], 16
        $region116: #{tpu_custom_call.1} parent=75 // pred_fallthru
          _
        // Predicated region
        $region117: #{tpu_custom_call.1} parent=75 // pred_check
          %p619 = pneg %p281
        $region118: #{tpu_custom_call.1} parent=75 // pred_check_branch
          %621 = sbr.rel (%p619) target = $region120
        $region119: #{tpu_custom_call.1} parent=75 // pred_region
          %622 = dma.done [#allocation22], 16
        $region120: #{tpu_custom_call.1} parent=75 // pred_fallthru
          _
        // Predicated region
        $region121: #{tpu_custom_call.1} parent=75 // pred_check
          %p623 = pneg %p302
        $region122: #{tpu_custom_call.1} parent=75 // pred_check_branch
          %625 = sbr.rel (%p623) target = $region124
        $region123: #{tpu_custom_call.1} parent=75 // pred_region
          %626 = dma.done [#allocation25], 16
        $region124: #{tpu_custom_call.1} parent=75 // pred_fallthru
          _
        // Predicated region
        $region125: #{tpu_custom_call.1} parent=75 // pred_check
          %p627 = pneg %p323
        $region126: #{tpu_custom_call.1} parent=75 // pred_check_branch
          %629 = sbr.rel (%p627) target = $region128
        $region127: #{tpu_custom_call.1} parent=75 // pred_region
          %630 = dma.done [#allocation25], 16
        $region128: #{tpu_custom_call.1} parent=75 // pred_fallthru
          _
        // Predicated region
        $region129: #{tpu_custom_call.1} parent=75 // pred_check
          %p631 = pneg %p344
        $region130: #{tpu_custom_call.1} parent=75 // pred_check_branch
          %633 = sbr.rel (%p631) target = $region132
        $region131: #{tpu_custom_call.1} parent=75 // pred_region
          %634 = dma.done [#allocation28], 16
        $region132: #{tpu_custom_call.1} parent=75 // pred_fallthru
          _
        %s635 = sand.u32 %s58, 1
        %s636 = scalar_lea.sflag [#allocation7], %s635
        %s637 = sand.u32 %s58, 1
        %s638 = smul.addr %s637, 128
        %s639 = scalar_lea.vmem [#allocation6], %s638
        %p640 = pneg %p71
        %p641 = pneg %p68
        %p642 = pneg %p92
        %p643 = pneg %p89
        %p644 = pneg %p113
        %p645 = pneg %p110
        %p646 = pneg %p134
        %p647 = pneg %p131
        %p648 = pneg %p155
        %p649 = pneg %p152
        %p650 = pneg %p176
        %p651 = pneg %p173
        %p652 = pneg %p197
        %p653 = pneg %p194
        %p654 = pneg %p218
        %p655 = pneg %p215
        %p656 = pneg %p239
        %p657 = pneg %p236
        %p658 = pneg %p260
        %p659 = pneg %p257
        %p660 = pneg %p281
        %p661 = pneg %p278
        %p662 = pneg %p302
        %p663 = pneg %p299
        %p664 = pneg %p323
        %p665 = pneg %p320
        %p666 = pneg %p344
        %p667 = pneg %p341
        %p668 = pneg %p372
        %p669 = pneg %p369
        %s670 = sand.u32 %s359, 1
        %s671 = scalar_lea.sflag [#allocation8], %s670
        %s672 = sand.u32 %s359, 1
        %s673 = smul.addr %s672, 64
        %s674 = scalar_lea.vmem [#allocation29], %s673
        %s675 = smul.u32 8, %s43
        %v676 = vld [vmem:[#allocation23] sm:$0x1]
        %v677 = vld [vmem:[#allocation24] sm:$0x1]
        %p678 = scmp.eq.s32.totalorder %s43, 0
        // Predicated region
        $region133: #{tpu_custom_call.1} parent=75 // pred_check
          %p679 = pneg %p678
        $region134: #{tpu_custom_call.1} parent=75 // pred_check_branch
          %681 = sbr.rel (%p679) target = $region136
        $region135: #{tpu_custom_call.1} parent=75 // pred_region
          %v682 = vld [vmem:[%s578] sm:$0xff]
          %v683 = vld [vmem:[%s578 + $0x8] sm:$0xff]
          %v684 = vld [vmem:[%s578 + $0x10] sm:$0xff]
          %v685 = vld [vmem:[%s578 + $0x18] sm:$0xff]
          %v686 = vld [vmem:[%s578 + $0x20] sm:$0xff]
          %v687 = vld [vmem:[%s578 + $0x28] sm:$0xff]
          %v688 = vld [vmem:[%s578 + $0x30] sm:$0xff]
          %v689 = vld [vmem:[%s578 + $0x38] sm:$0xff]
          %v690 = vld [vmem:[%s578 + $0x40] sm:$0xff]
          %v691 = vld [vmem:[%s578 + $0x48] sm:$0xff]
          %v692 = vld [vmem:[%s578 + $0x50] sm:$0xff]
          %v693 = vld [vmem:[%s578 + $0x58] sm:$0xff]
          %v694 = vld [vmem:[%s578 + $0x60] sm:$0xff]
          %v695 = vld [vmem:[%s578 + $0x68] sm:$0xff]
          %v696 = vld [vmem:[%s578 + $0x70] sm:$0xff]
          %v697 = vld [vmem:[%s578 + $0x78] sm:$0xff]
          %698 = vadd.xlane.f32.xlu0 %v682
          %v699 = vpop.xlane.xlu0 %698
          %700 = vadd.xlane.f32.xlu0 %v683
          %v701 = vpop.xlane.xlu0 %700
          %702 = vadd.xlane.f32.xlu0 %v684
          %v703 = vpop.xlane.xlu0 %702
          %704 = vadd.xlane.f32.xlu0 %v685
          %v705 = vpop.xlane.xlu0 %704
          %706 = vadd.xlane.f32.xlu0 %v686
          %v707 = vpop.xlane.xlu0 %706
          %708 = vadd.xlane.f32.xlu0 %v687
          %v709 = vpop.xlane.xlu0 %708
          %710 = vadd.xlane.f32.xlu0 %v688
          %v711 = vpop.xlane.xlu0 %710
          %712 = vadd.xlane.f32.xlu0 %v689
          %v713 = vpop.xlane.xlu0 %712
          %714 = vadd.xlane.f32.xlu0 %v690
          %v715 = vpop.xlane.xlu0 %714
          %716 = vadd.xlane.f32.xlu0 %v691
          %v717 = vpop.xlane.xlu0 %716
          %718 = vadd.xlane.f32.xlu0 %v692
          %v719 = vpop.xlane.xlu0 %718
          %720 = vadd.xlane.f32.xlu0 %v693
          %v721 = vpop.xlane.xlu0 %720
          %722 = vadd.xlane.f32.xlu0 %v694
          %v723 = vpop.xlane.xlu0 %722
          %724 = vadd.xlane.f32.xlu0 %v695
          %v725 = vpop.xlane.xlu0 %724
          %726 = vadd.xlane.f32.xlu0 %v696
          %v727 = vpop.xlane.xlu0 %726
          %728 = vadd.xlane.f32.xlu0 %v697
          %v729 = vpop.xlane.xlu0 %728
          %v730 = vrcp.pop 128.0
          %v731 = vmul.f32 %v699, %v730
          %v732 = vmul.f32 %v701, %v730
          %v733 = vmul.f32 %v703, %v730
          %v734 = vmul.f32 %v705, %v730
          %v735 = vmul.f32 %v707, %v730
          %v736 = vmul.f32 %v709, %v730
          %v737 = vmul.f32 %v711, %v730
          %v738 = vmul.f32 %v713, %v730
          %v739 = vmul.f32 %v715, %v730
          %v740 = vmul.f32 %v717, %v730
          %v741 = vmul.f32 %v719, %v730
          %v742 = vmul.f32 %v721, %v730
          %v743 = vmul.f32 %v723, %v730
          %v744 = vmul.f32 %v725, %v730
          %v745 = vmul.f32 %v727, %v730
          %v746 = vmul.f32 %v729, %v730
          %v747 = vsub.f32 %v682, %v731
          %v748 = vsub.f32 %v683, %v732
          %v749 = vsub.f32 %v684, %v733
          %v750 = vsub.f32 %v685, %v734
          %v751 = vsub.f32 %v686, %v735
          %v752 = vsub.f32 %v687, %v736
          %v753 = vsub.f32 %v688, %v737
          %v754 = vsub.f32 %v689, %v738
          %v755 = vsub.f32 %v690, %v739
          %v756 = vsub.f32 %v691, %v740
          %v757 = vsub.f32 %v692, %v741
          %v758 = vsub.f32 %v693, %v742
          %v759 = vsub.f32 %v694, %v743
          %v760 = vsub.f32 %v695, %v744
          %v761 = vsub.f32 %v696, %v745
          %v762 = vsub.f32 %v697, %v746
          %v763 = vmul.f32 %v747, %v747
          %v764 = vmul.f32 %v748, %v748
          %v765 = vmul.f32 %v749, %v749
          %v766 = vmul.f32 %v750, %v750
          %v767 = vmul.f32 %v751, %v751
          %v768 = vmul.f32 %v752, %v752
          %v769 = vmul.f32 %v753, %v753
          %v770 = vmul.f32 %v754, %v754
          %v771 = vmul.f32 %v755, %v755
          %v772 = vmul.f32 %v756, %v756
          %v773 = vmul.f32 %v757, %v757
          %v774 = vmul.f32 %v758, %v758
          %v775 = vmul.f32 %v759, %v759
          %v776 = vmul.f32 %v760, %v760
          %v777 = vmul.f32 %v761, %v761
          %v778 = vmul.f32 %v762, %v762
          %779 = vadd.xlane.f32.xlu0 %v763
          %v780 = vpop.xlane.xlu0 %779
          %781 = vadd.xlane.f32.xlu0 %v764
          %v782 = vpop.xlane.xlu0 %781
          %783 = vadd.xlane.f32.xlu0 %v765
          %v784 = vpop.xlane.xlu0 %783
          %785 = vadd.xlane.f32.xlu0 %v766
          %v786 = vpop.xlane.xlu0 %785
          %787 = vadd.xlane.f32.xlu0 %v767
          %v788 = vpop.xlane.xlu0 %787
          %789 = vadd.xlane.f32.xlu0 %v768
          %v790 = vpop.xlane.xlu0 %789
          %791 = vadd.xlane.f32.xlu0 %v769
          %v792 = vpop.xlane.xlu0 %791
          %793 = vadd.xlane.f32.xlu0 %v770
          %v794 = vpop.xlane.xlu0 %793
          %795 = vadd.xlane.f32.xlu0 %v771
          %v796 = vpop.xlane.xlu0 %795
          %797 = vadd.xlane.f32.xlu0 %v772
          %v798 = vpop.xlane.xlu0 %797
          %799 = vadd.xlane.f32.xlu0 %v773
          %v800 = vpop.xlane.xlu0 %799
          %801 = vadd.xlane.f32.xlu0 %v774
          %v802 = vpop.xlane.xlu0 %801
          %803 = vadd.xlane.f32.xlu0 %v775
          %v804 = vpop.xlane.xlu0 %803
          %805 = vadd.xlane.f32.xlu0 %v776
          %v806 = vpop.xlane.xlu0 %805
          %807 = vadd.xlane.f32.xlu0 %v777
          %v808 = vpop.xlane.xlu0 %807
          %809 = vadd.xlane.f32.xlu0 %v778
          %v810 = vpop.xlane.xlu0 %809
          %v811 = vmul.f32 %v780, %v730
          %v812 = vmul.f32 %v782, %v730
          %v813 = vmul.f32 %v784, %v730
          %v814 = vmul.f32 %v786, %v730
          %v815 = vmul.f32 %v788, %v730
          %v816 = vmul.f32 %v790, %v730
          %v817 = vmul.f32 %v792, %v730
          %v818 = vmul.f32 %v794, %v730
          %v819 = vmul.f32 %v796, %v730
          %v820 = vmul.f32 %v798, %v730
          %v821 = vmul.f32 %v800, %v730
          %v822 = vmul.f32 %v802, %v730
          %v823 = vmul.f32 %v804, %v730
          %v824 = vmul.f32 %v806, %v730
          %v825 = vmul.f32 %v808, %v730
          %v826 = vmul.f32 %v810, %v730
          %v827 = vadd.f32 %v811, 1e-05
          %v828 = vadd.f32 %v812, 1e-05
          %v829 = vadd.f32 %v813, 1e-05
          %v830 = vadd.f32 %v814, 1e-05
          %v831 = vadd.f32 %v815, 1e-05
          %v832 = vadd.f32 %v816, 1e-05
          %v833 = vadd.f32 %v817, 1e-05
          %v834 = vadd.f32 %v818, 1e-05
          %v835 = vadd.f32 %v819, 1e-05
          %v836 = vadd.f32 %v820, 1e-05
          %v837 = vadd.f32 %v821, 1e-05
          %v838 = vadd.f32 %v822, 1e-05
          %v839 = vadd.f32 %v823, 1e-05
          %v840 = vadd.f32 %v824, 1e-05
          %v841 = vadd.f32 %v825, 1e-05
          %v842 = vadd.f32 %v826, 1e-05
          %v843 = vrsqrt.pop %v827
          %v844 = vmul.f32 %v827, %v843
          %vm845 = vcmp.eq.f32.partialorder %v827, inf
          %v846 = vsel %vm845, %v827, %v844
          %vm847 = vcmp.eq.f32.partialorder %v827, 0.0
          %v848 = vand.u32 %v827, 2147483648
          %v849 = vsel %vm847, %v848, %v846
          %v850 = vrsqrt.pop %v828
          %v851 = vmul.f32 %v828, %v850
          %vm852 = vcmp.eq.f32.partialorder %v828, inf
          %v853 = vsel %vm852, %v828, %v851
          %vm854 = vcmp.eq.f32.partialorder %v828, 0.0
          %v855 = vand.u32 %v828, 2147483648
          %v856 = vsel %vm854, %v855, %v853
          %v857 = vrsqrt.pop %v829
          %v858 = vmul.f32 %v829, %v857
          %vm859 = vcmp.eq.f32.partialorder %v829, inf
          %v860 = vsel %vm859, %v829, %v858
          %vm861 = vcmp.eq.f32.partialorder %v829, 0.0
          %v862 = vand.u32 %v829, 2147483648
          %v863 = vsel %vm861, %v862, %v860
          %v864 = vrsqrt.pop %v830
          %v865 = vmul.f32 %v830, %v864
          %vm866 = vcmp.eq.f32.partialorder %v830, inf
          %v867 = vsel %vm866, %v830, %v865
          %vm868 = vcmp.eq.f32.partialorder %v830, 0.0
          %v869 = vand.u32 %v830, 2147483648
          %v870 = vsel %vm868, %v869, %v867
          %v871 = vrsqrt.pop %v831
          %v872 = vmul.f32 %v831, %v871
          %vm873 = vcmp.eq.f32.partialorder %v831, inf
          %v874 = vsel %vm873, %v831, %v872
          %vm875 = vcmp.eq.f32.partialorder %v831, 0.0
          %v876 = vand.u32 %v831, 2147483648
          %v877 = vsel %vm875, %v876, %v874
          %v878 = vrsqrt.pop %v832
          %v879 = vmul.f32 %v832, %v878
          %vm880 = vcmp.eq.f32.partialorder %v832, inf
          %v881 = vsel %vm880, %v832, %v879
          %vm882 = vcmp.eq.f32.partialorder %v832, 0.0
          %v883 = vand.u32 %v832, 2147483648
          %v884 = vsel %vm882, %v883, %v881
          %v885 = vrsqrt.pop %v833
          %v886 = vmul.f32 %v833, %v885
          %vm887 = vcmp.eq.f32.partialorder %v833, inf
          %v888 = vsel %vm887, %v833, %v886
          %vm889 = vcmp.eq.f32.partialorder %v833, 0.0
          %v890 = vand.u32 %v833, 2147483648
          %v891 = vsel %vm889, %v890, %v888
          %v892 = vrsqrt.pop %v834
          %v893 = vmul.f32 %v834, %v892
          %vm894 = vcmp.eq.f32.partialorder %v834, inf
          %v895 = vsel %vm894, %v834, %v893
          %vm896 = vcmp.eq.f32.partialorder %v834, 0.0
          %v897 = vand.u32 %v834, 2147483648
          %v898 = vsel %vm896, %v897, %v895
          %v899 = vrsqrt.pop %v835
          %v900 = vmul.f32 %v835, %v899
          %vm901 = vcmp.eq.f32.partialorder %v835, inf
          %v902 = vsel %vm901, %v835, %v900
          %vm903 = vcmp.eq.f32.partialorder %v835, 0.0
          %v904 = vand.u32 %v835, 2147483648
          %v905 = vsel %vm903, %v904, %v902
          %v906 = vrsqrt.pop %v836
          %v907 = vmul.f32 %v836, %v906
          %vm908 = vcmp.eq.f32.partialorder %v836, inf
          %v909 = vsel %vm908, %v836, %v907
          %vm910 = vcmp.eq.f32.partialorder %v836, 0.0
          %v911 = vand.u32 %v836, 2147483648
          %v912 = vsel %vm910, %v911, %v909
          %v913 = vrsqrt.pop %v837
          %v914 = vmul.f32 %v837, %v913
          %vm915 = vcmp.eq.f32.partialorder %v837, inf
          %v916 = vsel %vm915, %v837, %v914
          %vm917 = vcmp.eq.f32.partialorder %v837, 0.0
          %v918 = vand.u32 %v837, 2147483648
          %v919 = vsel %vm917, %v918, %v916
          %v920 = vrsqrt.pop %v838
          %v921 = vmul.f32 %v838, %v920
          %vm922 = vcmp.eq.f32.partialorder %v838, inf
          %v923 = vsel %vm922, %v838, %v921
          %vm924 = vcmp.eq.f32.partialorder %v838, 0.0
          %v925 = vand.u32 %v838, 2147483648
          %v926 = vsel %vm924, %v925, %v923
          %v927 = vrsqrt.pop %v839
          %v928 = vmul.f32 %v839, %v927
          %vm929 = vcmp.eq.f32.partialorder %v839, inf
          %v930 = vsel %vm929, %v839, %v928
          %vm931 = vcmp.eq.f32.partialorder %v839, 0.0
          %v932 = vand.u32 %v839, 2147483648
          %v933 = vsel %vm931, %v932, %v930
          %v934 = vrsqrt.pop %v840
          %v935 = vmul.f32 %v840, %v934
          %vm936 = vcmp.eq.f32.partialorder %v840, inf
          %v937 = vsel %vm936, %v840, %v935
          %vm938 = vcmp.eq.f32.partialorder %v840, 0.0
          %v939 = vand.u32 %v840, 2147483648
          %v940 = vsel %vm938, %v939, %v937
          %v941 = vrsqrt.pop %v841
          %v942 = vmul.f32 %v841, %v941
          %vm943 = vcmp.eq.f32.partialorder %v841, inf
          %v944 = vsel %vm943, %v841, %v942
          %vm945 = vcmp.eq.f32.partialorder %v841, 0.0
          %v946 = vand.u32 %v841, 2147483648
          %v947 = vsel %vm945, %v946, %v944
          %v948 = vrsqrt.pop %v842
          %v949 = vmul.f32 %v842, %v948
          %vm950 = vcmp.eq.f32.partialorder %v842, inf
          %v951 = vsel %vm950, %v842, %v949
          %vm952 = vcmp.eq.f32.partialorder %v842, 0.0
          %v953 = vand.u32 %v842, 2147483648
          %v954 = vsel %vm952, %v953, %v951
          %v955 = vrcp.pop %v849
          %v956 = vmul.f32 %v747, %v955
          %v957 = vrcp.pop %v856
          %v958 = vmul.f32 %v748, %v957
          %v959 = vrcp.pop %v863
          %v960 = vmul.f32 %v749, %v959
          %v961 = vrcp.pop %v870
          %v962 = vmul.f32 %v750, %v961
          %v963 = vrcp.pop %v877
          %v964 = vmul.f32 %v751, %v963
          %v965 = vrcp.pop %v884
          %v966 = vmul.f32 %v752, %v965
          %v967 = vrcp.pop %v891
          %v968 = vmul.f32 %v753, %v967
          %v969 = vrcp.pop %v898
          %v970 = vmul.f32 %v754, %v969
          %v971 = vrcp.pop %v905
          %v972 = vmul.f32 %v755, %v971
          %v973 = vrcp.pop %v912
          %v974 = vmul.f32 %v756, %v973
          %v975 = vrcp.pop %v919
          %v976 = vmul.f32 %v757, %v975
          %v977 = vrcp.pop %v926
          %v978 = vmul.f32 %v758, %v977
          %v979 = vrcp.pop %v933
          %v980 = vmul.f32 %v759, %v979
          %v981 = vrcp.pop %v940
          %v982 = vmul.f32 %v760, %v981
          %v983 = vrcp.pop %v947
          %v984 = vmul.f32 %v761, %v983
          %v985 = vrcp.pop %v954
          %v986 = vmul.f32 %v762, %v985
          %v988 = vlaneseq
          %v989 = vshrl.u32 %v988, 7
          %v990 = vsub.s32 0, %v989
          %v991 = vrot.slane %v676, %v990
          %v993 = vmul.f32 %v991, %v956
          %v994 = vmul.f32 %v991, %v958
          %v995 = vmul.f32 %v991, %v960
          %v996 = vmul.f32 %v991, %v962
          %v997 = vmul.f32 %v991, %v964
          %v998 = vmul.f32 %v991, %v966
          %v999 = vmul.f32 %v991, %v968
          %v1000 = vmul.f32 %v991, %v970
          %v1001 = vmul.f32 %v991, %v972
          %v1002 = vmul.f32 %v991, %v974
          %v1003 = vmul.f32 %v991, %v976
          %v1004 = vmul.f32 %v991, %v978
          %v1005 = vmul.f32 %v991, %v980
          %v1006 = vmul.f32 %v991, %v982
          %v1007 = vmul.f32 %v991, %v984
          %v1008 = vmul.f32 %v991, %v986
          %v1010 = vlaneseq
          %v1011 = vshrl.u32 %v1010, 7
          %v1012 = vsub.s32 0, %v1011
          %v1013 = vrot.slane %v677, %v1012
          %v1015 = vadd.f32 %v993, %v1013
          %v1016 = vadd.f32 %v994, %v1013
          %v1017 = vadd.f32 %v995, %v1013
          %v1018 = vadd.f32 %v996, %v1013
          %v1019 = vadd.f32 %v997, %v1013
          %v1020 = vadd.f32 %v998, %v1013
          %v1021 = vadd.f32 %v999, %v1013
          %v1022 = vadd.f32 %v1000, %v1013
          %v1023 = vadd.f32 %v1001, %v1013
          %v1024 = vadd.f32 %v1002, %v1013
          %v1025 = vadd.f32 %v1003, %v1013
          %v1026 = vadd.f32 %v1004, %v1013
          %v1027 = vadd.f32 %v1005, %v1013
          %v1028 = vadd.f32 %v1006, %v1013
          %v1029 = vadd.f32 %v1007, %v1013
          %v1030 = vadd.f32 %v1008, %v1013
          %v1031 = vld [vmem:[#allocation11] sm:$0xff]
          %v1032 = vld [vmem:[#allocation11 + $0x8] sm:$0xff]
          %v1033 = vld [vmem:[#allocation11 + $0x10] sm:$0xff]
          %v1034 = vld [vmem:[#allocation11 + $0x18] sm:$0xff]
          %v1035 = vld [vmem:[#allocation11 + $0x20] sm:$0xff]
          %v1036 = vld [vmem:[#allocation11 + $0x28] sm:$0xff]
          %v1037 = vld [vmem:[#allocation11 + $0x30] sm:$0xff]
          %v1038 = vld [vmem:[#allocation11 + $0x38] sm:$0xff]
          %v1039 = vld [vmem:[#allocation11 + $0x40] sm:$0xff]
          %v1040 = vld [vmem:[#allocation11 + $0x48] sm:$0xff]
          %v1041 = vld [vmem:[#allocation11 + $0x50] sm:$0xff]
          %v1042 = vld [vmem:[#allocation11 + $0x58] sm:$0xff]
          %v1043 = vld [vmem:[#allocation11 + $0x60] sm:$0xff]
          %v1044 = vld [vmem:[#allocation11 + $0x68] sm:$0xff]
          %v1045 = vld [vmem:[#allocation11 + $0x70] sm:$0xff]
          %v1046 = vld [vmem:[#allocation11 + $0x78] sm:$0xff]
          %1047 = vmatprep.subr.mxu0 0.0
          %1048 = vmatpush1.msra.mxu0 %v1031
          %1049 = vmatprep.subr.mxu0 0.0
          %1050 = vmatpush1.msra.mxu0 %v1032
          %1051 = vmatprep.subr.mxu0 0.0
          %1052 = vmatpush1.msra.mxu0 %v1033
          %1053 = vmatprep.subr.mxu0 0.0
          %1054 = vmatpush1.msra.mxu0 %v1034
          %1055 = vmatprep.subr.mxu0 0.0
          %1056 = vmatpush1.msra.mxu0 %v1035
          %1057 = vmatprep.subr.mxu0 0.0
          %1058 = vmatpush1.msra.mxu0 %v1036
          %1059 = vmatprep.subr.mxu0 0.0
          %1060 = vmatpush1.msra.mxu0 %v1037
          %1061 = vmatprep.subr.mxu0 0.0
          %1062 = vmatpush1.msra.mxu0 %v1038
          %1063 = vmatprep.subr.mxu0 0.0
          %1064 = vmatpush1.msra.mxu0 %v1039
          %1065 = vmatprep.subr.mxu0 0.0
          %1066 = vmatpush1.msra.mxu0 %v1040
          %1067 = vmatprep.subr.mxu0 0.0
          %1068 = vmatpush1.msra.mxu0 %v1041
          %1069 = vmatprep.subr.mxu0 0.0
          %1070 = vmatpush1.msra.mxu0 %v1042
          %1071 = vmatprep.subr.mxu0 0.0
          %1072 = vmatpush1.msra.mxu0 %v1043
          %1073 = vmatprep.subr.mxu0 0.0
          %1074 = vmatpush1.msra.mxu0 %v1044
          %1075 = vmatprep.subr.mxu0 0.0
          %1076 = vmatpush1.msra.mxu0 %v1045
          %1077 = vmatprep.subr.mxu0 0.0
          %1078 = vmatpush1.msra.mxu0 %v1046
          %1079 = vmatprep.subr.mxu0 0.0
          %1080 = vmatpush1.msra.mxu0 0.0
          %1081 = vmatprep.subr.mxu0 0.0
          %1082 = vmatpush1.msra.mxu0 0.0
          %1083 = vmatprep.subr.mxu0 0.0
          %1084 = vmatpush1.msra.mxu0 0.0
          %1085 = vmatprep.subr.mxu0 0.0
          %1086 = vmatpush1.msra.mxu0 0.0
          %1087 = vmatprep.subr.mxu0 0.0
          %1088 = vmatpush1.msra.mxu0 0.0
          %1089 = vmatprep.subr.mxu0 0.0
          %1090 = vmatpush1.msra.mxu0 0.0
          %1091 = vmatprep.subr.mxu0 0.0
          %1092 = vmatpush1.msra.mxu0 0.0
          %1093 = vmatprep.subr.mxu0 0.0
          %1094 = vmatpush1.msra.mxu0 0.0
          %1095 = vmatprep.subr.mxu0 0.0
          %1096 = vmatpush1.msra.mxu0 0.0
          %1097 = vmatprep.subr.mxu0 0.0
          %1098 = vmatpush1.msra.mxu0 0.0
          %1099 = vmatprep.subr.mxu0 0.0
          %1100 = vmatpush1.msra.mxu0 0.0
          %1101 = vmatprep.subr.mxu0 0.0
          %1102 = vmatpush1.msra.mxu0 0.0
          %1103 = vmatprep.subr.mxu0 0.0
          %1104 = vmatpush1.msra.mxu0 0.0
          %1105 = vmatprep.subr.mxu0 0.0
          %1106 = vmatpush1.msra.mxu0 0.0
          %1107 = vmatprep.subr.mxu0 0.0
          %1108 = vmatpush1.msra.mxu0 0.0
          %1109 = vmatprep.subr.mxu0 0.0
          %1110 = vmatpush1.msra.mxu0 0.0
          %1111 = vmatprep.mubr.f32.mxu0 0.0
          %1112 = vmatmul.mubr.f32.gmra.mrb[0].mxu0 %v1015
          %v1113 = vpop.f32.mrb[0].mxu0
          %v1114 = vadd.f32 0.0, %v1113
          %v1115 = vpop.f32.mrb[0].mxu0
          %1116 = vmatprep.mubr.f32.mxu0 0.0
          %1117 = vmatmul.mubr.f32.gmra.mrb[0].mxu0 %v1016
          %v1118 = vpop.f32.mrb[0].mxu0
          %v1119 = vadd.f32 0.0, %v1118
          %v1120 = vpop.f32.mrb[0].mxu0
          %1121 = vmatprep.mubr.f32.mxu0 0.0
          %1122 = vmatmul.mubr.f32.gmra.mrb[0].mxu0 %v1017
          %v1123 = vpop.f32.mrb[0].mxu0
          %v1124 = vadd.f32 0.0, %v1123
          %v1125 = vpop.f32.mrb[0].mxu0
          %1126 = vmatprep.mubr.f32.mxu0 0.0
          %1127 = vmatmul.mubr.f32.gmra.mrb[0].mxu0 %v1018
          %v1128 = vpop.f32.mrb[0].mxu0
          %v1129 = vadd.f32 0.0, %v1128
          %v1130 = vpop.f32.mrb[0].mxu0
          %1131 = vmatprep.mubr.f32.mxu0 0.0
          %1132 = vmatmul.mubr.f32.gmra.mrb[0].mxu0 %v1019
          %v1133 = vpop.f32.mrb[0].mxu0
          %v1134 = vadd.f32 0.0, %v1133
          %v1135 = vpop.f32.mrb[0].mxu0
          %1136 = vmatprep.mubr.f32.mxu0 0.0
          %1137 = vmatmul.mubr.f32.gmra.mrb[0].mxu0 %v1020
          %v1138 = vpop.f32.mrb[0].mxu0
          %v1139 = vadd.f32 0.0, %v1138
          %v1140 = vpop.f32.mrb[0].mxu0
          %1141 = vmatprep.mubr.f32.mxu0 0.0
          %1142 = vmatmul.mubr.f32.gmra.mrb[0].mxu0 %v1021
          %v1143 = vpop.f32.mrb[0].mxu0
          %v1144 = vadd.f32 0.0, %v1143
          %v1145 = vpop.f32.mrb[0].mxu0
          %1146 = vmatprep.mubr.f32.mxu0 0.0
          %1147 = vmatmul.mubr.f32.gmra.mrb[0].mxu0 %v1022
          %v1148 = vpop.f32.mrb[0].mxu0
          %v1149 = vadd.f32 0.0, %v1148
          %v1150 = vpop.f32.mrb[0].mxu0
          %1151 = vmatprep.mubr.f32.mxu0 0.0
          %1152 = vmatmul.mubr.f32.gmra.mrb[0].mxu0 %v1023
          %v1153 = vpop.f32.mrb[0].mxu0
          %v1154 = vadd.f32 0.0, %v1153
          %v1155 = vpop.f32.mrb[0].mxu0
          %1156 = vmatprep.mubr.f32.mxu0 0.0
          %1157 = vmatmul.mubr.f32.gmra.mrb[0].mxu0 %v1024
          %v1158 = vpop.f32.mrb[0].mxu0
          %v1159 = vadd.f32 0.0, %v1158
          %v1160 = vpop.f32.mrb[0].mxu0
          %1161 = vmatprep.mubr.f32.mxu0 0.0
          %1162 = vmatmul.mubr.f32.gmra.mrb[0].mxu0 %v1025
          %v1163 = vpop.f32.mrb[0].mxu0
          %v1164 = vadd.f32 0.0, %v1163
          %v1165 = vpop.f32.mrb[0].mxu0
          %1166 = vmatprep.mubr.f32.mxu0 0.0
          %1167 = vmatmul.mubr.f32.gmra.mrb[0].mxu0 %v1026
          %v1168 = vpop.f32.mrb[0].mxu0
          %v1169 = vadd.f32 0.0, %v1168
          %v1170 = vpop.f32.mrb[0].mxu0
          %1171 = vmatprep.mubr.f32.mxu0 0.0
          %1172 = vmatmul.mubr.f32.gmra.mrb[0].mxu0 %v1027
          %v1173 = vpop.f32.mrb[0].mxu0
          %v1174 = vadd.f32 0.0, %v1173
          %v1175 = vpop.f32.mrb[0].mxu0
          %1176 = vmatprep.mubr.f32.mxu0 0.0
          %1177 = vmatmul.mubr.f32.gmra.mrb[0].mxu0 %v1028
          %v1178 = vpop.f32.mrb[0].mxu0
          %v1179 = vadd.f32 0.0, %v1178
          %v1180 = vpop.f32.mrb[0].mxu0
          %1181 = vmatprep.mubr.f32.mxu0 0.0
          %1182 = vmatmul.mubr.f32.gmra.mrb[0].mxu0 %v1029
          %v1183 = vpop.f32.mrb[0].mxu0
          %v1184 = vadd.f32 0.0, %v1183
          %v1185 = vpop.f32.mrb[0].mxu0
          %1186 = vmatprep.mubr.f32.mxu0 0.0
          %1187 = vmatmul.mubr.f32.gmra.mrb[0].mxu0 %v1030
          %v1188 = vpop.f32.mrb[0].mxu0
          %v1189 = vadd.f32 0.0, %v1188
          %v1190 = vpop.f32.mrb[0].mxu0
          %1191 = vdwg.mxu0
          %v1192 = vld [vmem:[#allocation12] sm:$0xff]
          %v1193 = vld [vmem:[#allocation12 + $0x8] sm:$0xff]
          %v1194 = vld [vmem:[#allocation12 + $0x10] sm:$0xff]
          %v1195 = vld [vmem:[#allocation12 + $0x18] sm:$0xff]
          %v1196 = vld [vmem:[#allocation12 + $0x20] sm:$0xff]
          %v1197 = vld [vmem:[#allocation12 + $0x28] sm:$0xff]
          %v1198 = vld [vmem:[#allocation12 + $0x30] sm:$0xff]
          %v1199 = vld [vmem:[#allocation12 + $0x38] sm:$0xff]
          %v1200 = vld [vmem:[#allocation12 + $0x40] sm:$0xff]
          %v1201 = vld [vmem:[#allocation12 + $0x48] sm:$0xff]
          %v1202 = vld [vmem:[#allocation12 + $0x50] sm:$0xff]
          %v1203 = vld [vmem:[#allocation12 + $0x58] sm:$0xff]
          %v1204 = vld [vmem:[#allocation12 + $0x60] sm:$0xff]
          %v1205 = vld [vmem:[#allocation12 + $0x68] sm:$0xff]
          %v1206 = vld [vmem:[#allocation12 + $0x70] sm:$0xff]
          %v1207 = vld [vmem:[#allocation12 + $0x78] sm:$0xff]
          %1208 = vmatprep.subr.mxu0 0.0
          %1209 = vmatpush1.msra.mxu0 %v1192
          %1210 = vmatprep.subr.mxu0 0.0
          %1211 = vmatpush1.msra.mxu0 %v1193
          %1212 = vmatprep.subr.mxu0 0.0
          %1213 = vmatpush1.msra.mxu0 %v1194
          %1214 = vmatprep.subr.mxu0 0.0
          %1215 = vmatpush1.msra.mxu0 %v1195
          %1216 = vmatprep.subr.mxu0 0.0
          %1217 = vmatpush1.msra.mxu0 %v1196
          %1218 = vmatprep.subr.mxu0 0.0
          %1219 = vmatpush1.msra.mxu0 %v1197
          %1220 = vmatprep.subr.mxu0 0.0
          %1221 = vmatpush1.msra.mxu0 %v1198
          %1222 = vmatprep.subr.mxu0 0.0
          %1223 = vmatpush1.msra.mxu0 %v1199
          %1224 = vmatprep.subr.mxu0 0.0
          %1225 = vmatpush1.msra.mxu0 %v1200
          %1226 = vmatprep.subr.mxu0 0.0
          %1227 = vmatpush1.msra.mxu0 %v1201
          %1228 = vmatprep.subr.mxu0 0.0
          %1229 = vmatpush1.msra.mxu0 %v1202
          %1230 = vmatprep.subr.mxu0 0.0
          %1231 = vmatpush1.msra.mxu0 %v1203
          %1232 = vmatprep.subr.mxu0 0.0
          %1233 = vmatpush1.msra.mxu0 %v1204
          %1234 = vmatprep.subr.mxu0 0.0
          %1235 = vmatpush1.msra.mxu0 %v1205
          %1236 = vmatprep.subr.mxu0 0.0
          %1237 = vmatpush1.msra.mxu0 %v1206
          %1238 = vmatprep.subr.mxu0 0.0
          %1239 = vmatpush1.msra.mxu0 %v1207
          %1240 = vmatprep.subr.mxu0 0.0
          %1241 = vmatpush1.msra.mxu0 0.0
          %1242 = vmatprep.subr.mxu0 0.0
          %1243 = vmatpush1.msra.mxu0 0.0
          %1244 = vmatprep.subr.mxu0 0.0
          %1245 = vmatpush1.msra.mxu0 0.0
          %1246 = vmatprep.subr.mxu0 0.0
          %1247 = vmatpush1.msra.mxu0 0.0
          %1248 = vmatprep.subr.mxu0 0.0
          %1249 = vmatpush1.msra.mxu0 0.0
          %1250 = vmatprep.subr.mxu0 0.0
          %1251 = vmatpush1.msra.mxu0 0.0
          %1252 = vmatprep.subr.mxu0 0.0
          %1253 = vmatpush1.msra.mxu0 0.0
          %1254 = vmatprep.subr.mxu0 0.0
          %1255 = vmatpush1.msra.mxu0 0.0
          %1256 = vmatprep.subr.mxu0 0.0
          %1257 = vmatpush1.msra.mxu0 0.0
          %1258 = vmatprep.subr.mxu0 0.0
          %1259 = vmatpush1.msra.mxu0 0.0
          %1260 = vmatprep.subr.mxu0 0.0
          %1261 = vmatpush1.msra.mxu0 0.0
          %1262 = vmatprep.subr.mxu0 0.0
          %1263 = vmatpush1.msra.mxu0 0.0
          %1264 = vmatprep.subr.mxu0 0.0
          %1265 = vmatpush1.msra.mxu0 0.0
          %1266 = vmatprep.subr.mxu0 0.0
          %1267 = vmatpush1.msra.mxu0 0.0
          %1268 = vmatprep.subr.mxu0 0.0
          %1269 = vmatpush1.msra.mxu0 0.0
          %1270 = vmatprep.subr.mxu0 0.0
          %1271 = vmatpush1.msra.mxu0 0.0
          %1272 = vmatprep.mubr.f32.mxu0 0.0
          %1273 = vmatmul.mubr.f32.gmra.mrb[0].mxu0 %v1015
          %v1274 = vpop.f32.mrb[0].mxu0
          %v1275 = vadd.f32 0.0, %v1274
          %v1276 = vpop.f32.mrb[0].mxu0
          %1277 = vmatprep.mubr.f32.mxu0 0.0
          %1278 = vmatmul.mubr.f32.gmra.mrb[0].mxu0 %v1016
          %v1279 = vpop.f32.mrb[0].mxu0
          %v1280 = vadd.f32 0.0, %v1279
          %v1281 = vpop.f32.mrb[0].mxu0
          %1282 = vmatprep.mubr.f32.mxu0 0.0
          %1283 = vmatmul.mubr.f32.gmra.mrb[0].mxu0 %v1017
          %v1284 = vpop.f32.mrb[0].mxu0
          %v1285 = vadd.f32 0.0, %v1284
          %v1286 = vpop.f32.mrb[0].mxu0
          %1287 = vmatprep.mubr.f32.mxu0 0.0
          %1288 = vmatmul.mubr.f32.gmra.mrb[0].mxu0 %v1018
          %v1289 = vpop.f32.mrb[0].mxu0
          %v1290 = vadd.f32 0.0, %v1289
          %v1291 = vpop.f32.mrb[0].mxu0
          %1292 = vmatprep.mubr.f32.mxu0 0.0
          %1293 = vmatmul.mubr.f32.gmra.mrb[0].mxu0 %v1019
          %v1294 = vpop.f32.mrb[0].mxu0
          %v1295 = vadd.f32 0.0, %v1294
          %v1296 = vpop.f32.mrb[0].mxu0
          %1297 = vmatprep.mubr.f32.mxu0 0.0
          %1298 = vmatmul.mubr.f32.gmra.mrb[0].mxu0 %v1020
          %v1299 = vpop.f32.mrb[0].mxu0
          %v1300 = vadd.f32 0.0, %v1299
          %v1301 = vpop.f32.mrb[0].mxu0
          %1302 = vmatprep.mubr.f32.mxu0 0.0
          %1303 = vmatmul.mubr.f32.gmra.mrb[0].mxu0 %v1021
          %v1304 = vpop.f32.mrb[0].mxu0
          %v1305 = vadd.f32 0.0, %v1304
          %v1306 = vpop.f32.mrb[0].mxu0
          %1307 = vmatprep.mubr.f32.mxu0 0.0
          %1308 = vmatmul.mubr.f32.gmra.mrb[0].mxu0 %v1022
          %v1309 = vpop.f32.mrb[0].mxu0
          %v1310 = vadd.f32 0.0, %v1309
          %v1311 = vpop.f32.mrb[0].mxu0
          %1312 = vmatprep.mubr.f32.mxu0 0.0
          %1313 = vmatmul.mubr.f32.gmra.mrb[0].mxu0 %v1023
          %v1314 = vpop.f32.mrb[0].mxu0
          %v1315 = vadd.f32 0.0, %v1314
          %v1316 = vpop.f32.mrb[0].mxu0
          %1317 = vmatprep.mubr.f32.mxu0 0.0
          %1318 = vmatmul.mubr.f32.gmra.mrb[0].mxu0 %v1024
          %v1319 = vpop.f32.mrb[0].mxu0
          %v1320 = vadd.f32 0.0, %v1319
          %v1321 = vpop.f32.mrb[0].mxu0
          %1322 = vmatprep.mubr.f32.mxu0 0.0
          %1323 = vmatmul.mubr.f32.gmra.mrb[0].mxu0 %v1025
          %v1324 = vpop.f32.mrb[0].mxu0
          %v1325 = vadd.f32 0.0, %v1324
          %v1326 = vpop.f32.mrb[0].mxu0
          %1327 = vmatprep.mubr.f32.mxu0 0.0
          %1328 = vmatmul.mubr.f32.gmra.mrb[0].mxu0 %v1026
          %v1329 = vpop.f32.mrb[0].mxu0
          %v1330 = vadd.f32 0.0, %v1329
          %v1331 = vpop.f32.mrb[0].mxu0
          %1332 = vmatprep.mubr.f32.mxu0 0.0
          %1333 = vmatmul.mubr.f32.gmra.mrb[0].mxu0 %v1027
          %v1334 = vpop.f32.mrb[0].mxu0
          %v1335 = vadd.f32 0.0, %v1334
          %v1336 = vpop.f32.mrb[0].mxu0
          %1337 = vmatprep.mubr.f32.mxu0 0.0
          %1338 = vmatmul.mubr.f32.gmra.mrb[0].mxu0 %v1028
          %v1339 = vpop.f32.mrb[0].mxu0
          %v1340 = vadd.f32 0.0, %v1339
          %v1341 = vpop.f32.mrb[0].mxu0
          %1342 = vmatprep.mubr.f32.mxu0 0.0
          %1343 = vmatmul.mubr.f32.gmra.mrb[0].mxu0 %v1029
          %v1344 = vpop.f32.mrb[0].mxu0
          %v1345 = vadd.f32 0.0, %v1344
          %v1346 = vpop.f32.mrb[0].mxu0
          %1347 = vmatprep.mubr.f32.mxu0 0.0
          %1348 = vmatmul.mubr.f32.gmra.mrb[0].mxu0 %v1030
          %v1349 = vpop.f32.mrb[0].mxu0
          %v1350 = vadd.f32 0.0, %v1349
          %v1351 = vpop.f32.mrb[0].mxu0
          %1352 = vdwg.mxu0
          %vm1353 = vcmask 261120
          %1354 = vst.msk [vmem:[#allocation2] sm:$0xff] %vm1353, %v1114
          %1355 = vst.msk [vmem:[#allocation2 + $0x8] sm:$0xff] %vm1353, %v1119
          %1356 = vst.msk [vmem:[#allocation2 + $0x10] sm:$0xff] %vm1353, %v1124
          %1357 = vst.msk [vmem:[#allocation2 + $0x18] sm:$0xff] %vm1353, %v1129
          %1358 = vst.msk [vmem:[#allocation2 + $0x20] sm:$0xff] %vm1353, %v1134
          %1359 = vst.msk [vmem:[#allocation2 + $0x28] sm:$0xff] %vm1353, %v1139
          %1360 = vst.msk [vmem:[#allocation2 + $0x30] sm:$0xff] %vm1353, %v1144
          %1361 = vst.msk [vmem:[#allocation2 + $0x38] sm:$0xff] %vm1353, %v1149
          %1362 = vst.msk [vmem:[#allocation3] sm:$0xff] %vm1353, %v1275
          %1363 = vst.msk [vmem:[#allocation3 + $0x8] sm:$0xff] %vm1353, %v1280
          %1364 = vst.msk [vmem:[#allocation3 + $0x10] sm:$0xff] %vm1353, %v1285
          %1365 = vst.msk [vmem:[#allocation3 + $0x18] sm:$0xff] %vm1353, %v1290
          %1366 = vst.msk [vmem:[#allocation3 + $0x20] sm:$0xff] %vm1353, %v1295
          %1367 = vst.msk [vmem:[#allocation3 + $0x28] sm:$0xff] %vm1353, %v1300
          %1368 = vst.msk [vmem:[#allocation3 + $0x30] sm:$0xff] %vm1353, %v1305
          %1369 = vst.msk [vmem:[#allocation3 + $0x38] sm:$0xff] %vm1353, %v1310
          %1378 = vrot.lane.b32.xlu0 %v1114, 96
          %v1379 = vpop.permute.xlu0 %1378
          %1380 = vrot.lane.b32.xlu0 %v1119, 96
          %v1381 = vpop.permute.xlu0 %1380
          %1382 = vrot.lane.b32.xlu0 %v1124, 96
          %v1383 = vpop.permute.xlu0 %1382
          %1384 = vrot.lane.b32.xlu0 %v1129, 96
          %v1385 = vpop.permute.xlu0 %1384
          %1386 = vrot.lane.b32.xlu0 %v1134, 96
          %v1387 = vpop.permute.xlu0 %1386
          %1388 = vrot.lane.b32.xlu0 %v1139, 96
          %v1389 = vpop.permute.xlu0 %1388
          %1390 = vrot.lane.b32.xlu0 %v1144, 96
          %v1391 = vpop.permute.xlu0 %1390
          %1392 = vrot.lane.b32.xlu0 %v1149, 96
          %v1393 = vpop.permute.xlu0 %1392
          %s1402 = scalar_lea.vmem [#allocation2], 64
          %1403 = vst.msk [vmem:[%s1402] sm:$0xff] %vm1353, %v1379
          %1404 = vst.msk [vmem:[%s1402 + $0x8] sm:$0xff] %vm1353, %v1381
          %1405 = vst.msk [vmem:[%s1402 + $0x10] sm:$0xff] %vm1353, %v1383
          %1406 = vst.msk [vmem:[%s1402 + $0x18] sm:$0xff] %vm1353, %v1385
          %1407 = vst.msk [vmem:[%s1402 + $0x20] sm:$0xff] %vm1353, %v1387
          %1408 = vst.msk [vmem:[%s1402 + $0x28] sm:$0xff] %vm1353, %v1389
          %1409 = vst.msk [vmem:[%s1402 + $0x30] sm:$0xff] %vm1353, %v1391
          %1410 = vst.msk [vmem:[%s1402 + $0x38] sm:$0xff] %vm1353, %v1393
          %1419 = vrot.lane.b32.xlu0 %v1275, 96
          %v1420 = vpop.permute.xlu0 %1419
          %1421 = vrot.lane.b32.xlu0 %v1280, 96
          %v1422 = vpop.permute.xlu0 %1421
          %1423 = vrot.lane.b32.xlu0 %v1285, 96
          %v1424 = vpop.permute.xlu0 %1423
          %1425 = vrot.lane.b32.xlu0 %v1290, 96
          %v1426 = vpop.permute.xlu0 %1425
          %1427 = vrot.lane.b32.xlu0 %v1295, 96
          %v1428 = vpop.permute.xlu0 %1427
          %1429 = vrot.lane.b32.xlu0 %v1300, 96
          %v1430 = vpop.permute.xlu0 %1429
          %1431 = vrot.lane.b32.xlu0 %v1305, 96
          %v1432 = vpop.permute.xlu0 %1431
          %1433 = vrot.lane.b32.xlu0 %v1310, 96
          %v1434 = vpop.permute.xlu0 %1433
          %s1443 = scalar_lea.vmem [#allocation3], 64
          %1444 = vst.msk [vmem:[%s1443] sm:$0xff] %vm1353, %v1420
          %1445 = vst.msk [vmem:[%s1443 + $0x8] sm:$0xff] %vm1353, %v1422
          %1446 = vst.msk [vmem:[%s1443 + $0x10] sm:$0xff] %vm1353, %v1424
          %1447 = vst.msk [vmem:[%s1443 + $0x18] sm:$0xff] %vm1353, %v1426
          %1448 = vst.msk [vmem:[%s1443 + $0x20] sm:$0xff] %vm1353, %v1428
          %1449 = vst.msk [vmem:[%s1443 + $0x28] sm:$0xff] %vm1353, %v1430
          %1450 = vst.msk [vmem:[%s1443 + $0x30] sm:$0xff] %vm1353, %v1432
          %1451 = vst.msk [vmem:[%s1443 + $0x38] sm:$0xff] %vm1353, %v1434
          %1452 = vrot.lane.b32.xlu0 %v1114, 64
          %v1453 = vpop.permute.xlu0 %1452
          %1454 = vrot.lane.b32.xlu0 %v1119, 64
          %v1455 = vpop.permute.xlu0 %1454
          %1456 = vrot.lane.b32.xlu0 %v1124, 64
          %v1457 = vpop.permute.xlu0 %1456
          %1458 = vrot.lane.b32.xlu0 %v1129, 64
          %v1459 = vpop.permute.xlu0 %1458
          %1460 = vrot.lane.b32.xlu0 %v1134, 64
          %v1461 = vpop.permute.xlu0 %1460
          %1462 = vrot.lane.b32.xlu0 %v1139, 64
          %v1463 = vpop.permute.xlu0 %1462
          %1464 = vrot.lane.b32.xlu0 %v1144, 64
          %v1465 = vpop.permute.xlu0 %1464
          %1466 = vrot.lane.b32.xlu0 %v1149, 64
          %v1467 = vpop.permute.xlu0 %1466
          %s1476 = scalar_lea.vmem [#allocation2], 128
          %1477 = vst.msk [vmem:[%s1476] sm:$0xff] %vm1353, %v1453
          %1478 = vst.msk [vmem:[%s1476 + $0x8] sm:$0xff] %vm1353, %v1455
          %1479 = vst.msk [vmem:[%s1476 + $0x10] sm:$0xff] %vm1353, %v1457
          %1480 = vst.msk [vmem:[%s1476 + $0x18] sm:$0xff] %vm1353, %v1459
          %1481 = vst.msk [vmem:[%s1476 + $0x20] sm:$0xff] %vm1353, %v1461
          %1482 = vst.msk [vmem:[%s1476 + $0x28] sm:$0xff] %vm1353, %v1463
          %1483 = vst.msk [vmem:[%s1476 + $0x30] sm:$0xff] %vm1353, %v1465
          %1484 = vst.msk [vmem:[%s1476 + $0x38] sm:$0xff] %vm1353, %v1467
          %1485 = vrot.lane.b32.xlu0 %v1275, 64
          %v1486 = vpop.permute.xlu0 %1485
          %1487 = vrot.lane.b32.xlu0 %v1280, 64
          %v1488 = vpop.permute.xlu0 %1487
          %1489 = vrot.lane.b32.xlu0 %v1285, 64
          %v1490 = vpop.permute.xlu0 %1489
          %1491 = vrot.lane.b32.xlu0 %v1290, 64
          %v1492 = vpop.permute.xlu0 %1491
          %1493 = vrot.lane.b32.xlu0 %v1295, 64
          %v1494 = vpop.permute.xlu0 %1493
          %1495 = vrot.lane.b32.xlu0 %v1300, 64
          %v1496 = vpop.permute.xlu0 %1495
          %1497 = vrot.lane.b32.xlu0 %v1305, 64
          %v1498 = vpop.permute.xlu0 %1497
          %1499 = vrot.lane.b32.xlu0 %v1310, 64
          %v1500 = vpop.permute.xlu0 %1499
          %s1509 = scalar_lea.vmem [#allocation3], 128
          %1510 = vst.msk [vmem:[%s1509] sm:$0xff] %vm1353, %v1486
          %1511 = vst.msk [vmem:[%s1509 + $0x8] sm:$0xff] %vm1353, %v1488
          %1512 = vst.msk [vmem:[%s1509 + $0x10] sm:$0xff] %vm1353, %v1490
          %1513 = vst.msk [vmem:[%s1509 + $0x18] sm:$0xff] %vm1353, %v1492
          %1514 = vst.msk [vmem:[%s1509 + $0x20] sm:$0xff] %vm1353, %v1494
          %1515 = vst.msk [vmem:[%s1509 + $0x28] sm:$0xff] %vm1353, %v1496
          %1516 = vst.msk [vmem:[%s1509 + $0x30] sm:$0xff] %vm1353, %v1498
          %1517 = vst.msk [vmem:[%s1509 + $0x38] sm:$0xff] %vm1353, %v1500
          %1518 = vrot.lane.b32.xlu0 %v1114, 32
          %v1519 = vpop.permute.xlu0 %1518
          %1520 = vrot.lane.b32.xlu0 %v1119, 32
          %v1521 = vpop.permute.xlu0 %1520
          %1522 = vrot.lane.b32.xlu0 %v1124, 32
          %v1523 = vpop.permute.xlu0 %1522
          %1524 = vrot.lane.b32.xlu0 %v1129, 32
          %v1525 = vpop.permute.xlu0 %1524
          %1526 = vrot.lane.b32.xlu0 %v1134, 32
          %v1527 = vpop.permute.xlu0 %1526
          %1528 = vrot.lane.b32.xlu0 %v1139, 32
          %v1529 = vpop.permute.xlu0 %1528
          %1530 = vrot.lane.b32.xlu0 %v1144, 32
          %v1531 = vpop.permute.xlu0 %1530
          %1532 = vrot.lane.b32.xlu0 %v1149, 32
          %v1533 = vpop.permute.xlu0 %1532
          %s1542 = scalar_lea.vmem [#allocation2], 192
          %1543 = vst.msk [vmem:[%s1542] sm:$0xff] %vm1353, %v1519
          %1544 = vst.msk [vmem:[%s1542 + $0x8] sm:$0xff] %vm1353, %v1521
          %1545 = vst.msk [vmem:[%s1542 + $0x10] sm:$0xff] %vm1353, %v1523
          %1546 = vst.msk [vmem:[%s1542 + $0x18] sm:$0xff] %vm1353, %v1525
          %1547 = vst.msk [vmem:[%s1542 + $0x20] sm:$0xff] %vm1353, %v1527
          %1548 = vst.msk [vmem:[%s1542 + $0x28] sm:$0xff] %vm1353, %v1529
          %1549 = vst.msk [vmem:[%s1542 + $0x30] sm:$0xff] %vm1353, %v1531
          %1550 = vst.msk [vmem:[%s1542 + $0x38] sm:$0xff] %vm1353, %v1533
          %1551 = vrot.lane.b32.xlu0 %v1275, 32
          %v1552 = vpop.permute.xlu0 %1551
          %1553 = vrot.lane.b32.xlu0 %v1280, 32
          %v1554 = vpop.permute.xlu0 %1553
          %1555 = vrot.lane.b32.xlu0 %v1285, 32
          %v1556 = vpop.permute.xlu0 %1555
          %1557 = vrot.lane.b32.xlu0 %v1290, 32
          %v1558 = vpop.permute.xlu0 %1557
          %1559 = vrot.lane.b32.xlu0 %v1295, 32
          %v1560 = vpop.permute.xlu0 %1559
          %1561 = vrot.lane.b32.xlu0 %v1300, 32
          %v1562 = vpop.permute.xlu0 %1561
          %1563 = vrot.lane.b32.xlu0 %v1305, 32
          %v1564 = vpop.permute.xlu0 %1563
          %1565 = vrot.lane.b32.xlu0 %v1310, 32
          %v1566 = vpop.permute.xlu0 %1565
          %s1575 = scalar_lea.vmem [#allocation3], 192
          %1576 = vst.msk [vmem:[%s1575] sm:$0xff] %vm1353, %v1552
          %1577 = vst.msk [vmem:[%s1575 + $0x8] sm:$0xff] %vm1353, %v1554
          %1578 = vst.msk [vmem:[%s1575 + $0x10] sm:$0xff] %vm1353, %v1556
          %1579 = vst.msk [vmem:[%s1575 + $0x18] sm:$0xff] %vm1353, %v1558
          %1580 = vst.msk [vmem:[%s1575 + $0x20] sm:$0xff] %vm1353, %v1560
          %1581 = vst.msk [vmem:[%s1575 + $0x28] sm:$0xff] %vm1353, %v1562
          %1582 = vst.msk [vmem:[%s1575 + $0x30] sm:$0xff] %vm1353, %v1564
          %1583 = vst.msk [vmem:[%s1575 + $0x38] sm:$0xff] %vm1353, %v1566
          %s1584 = scalar_lea.vmem [#allocation2], 256
          %1585 = vst.msk [vmem:[%s1584] sm:$0xff] %vm1353, %v1154
          %1586 = vst.msk [vmem:[%s1584 + $0x8] sm:$0xff] %vm1353, %v1159
          %1587 = vst.msk [vmem:[%s1584 + $0x10] sm:$0xff] %vm1353, %v1164
          %1588 = vst.msk [vmem:[%s1584 + $0x18] sm:$0xff] %vm1353, %v1169
          %1589 = vst.msk [vmem:[%s1584 + $0x20] sm:$0xff] %vm1353, %v1174
          %1590 = vst.msk [vmem:[%s1584 + $0x28] sm:$0xff] %vm1353, %v1179
          %1591 = vst.msk [vmem:[%s1584 + $0x30] sm:$0xff] %vm1353, %v1184
          %1592 = vst.msk [vmem:[%s1584 + $0x38] sm:$0xff] %vm1353, %v1189
          %s1593 = scalar_lea.vmem [#allocation3], 256
          %1594 = vst.msk [vmem:[%s1593] sm:$0xff] %vm1353, %v1315
          %1595 = vst.msk [vmem:[%s1593 + $0x8] sm:$0xff] %vm1353, %v1320
          %1596 = vst.msk [vmem:[%s1593 + $0x10] sm:$0xff] %vm1353, %v1325
          %1597 = vst.msk [vmem:[%s1593 + $0x18] sm:$0xff] %vm1353, %v1330
          %1598 = vst.msk [vmem:[%s1593 + $0x20] sm:$0xff] %vm1353, %v1335
          %1599 = vst.msk [vmem:[%s1593 + $0x28] sm:$0xff] %vm1353, %v1340
          %1600 = vst.msk [vmem:[%s1593 + $0x30] sm:$0xff] %vm1353, %v1345
          %1601 = vst.msk [vmem:[%s1593 + $0x38] sm:$0xff] %vm1353, %v1350
          %1610 = vrot.lane.b32.xlu0 %v1154, 96
          %v1611 = vpop.permute.xlu0 %1610
          %1612 = vrot.lane.b32.xlu0 %v1159, 96
          %v1613 = vpop.permute.xlu0 %1612
          %1614 = vrot.lane.b32.xlu0 %v1164, 96
          %v1615 = vpop.permute.xlu0 %1614
          %1616 = vrot.lane.b32.xlu0 %v1169, 96
          %v1617 = vpop.permute.xlu0 %1616
          %1618 = vrot.lane.b32.xlu0 %v1174, 96
          %v1619 = vpop.permute.xlu0 %1618
          %1620 = vrot.lane.b32.xlu0 %v1179, 96
          %v1621 = vpop.permute.xlu0 %1620
          %1622 = vrot.lane.b32.xlu0 %v1184, 96
          %v1623 = vpop.permute.xlu0 %1622
          %1624 = vrot.lane.b32.xlu0 %v1189, 96
          %v1625 = vpop.permute.xlu0 %1624
          %s1634 = scalar_lea.vmem [#allocation2], 320
          %1635 = vst.msk [vmem:[%s1634] sm:$0xff] %vm1353, %v1611
          %1636 = vst.msk [vmem:[%s1634 + $0x8] sm:$0xff] %vm1353, %v1613
          %1637 = vst.msk [vmem:[%s1634 + $0x10] sm:$0xff] %vm1353, %v1615
          %1638 = vst.msk [vmem:[%s1634 + $0x18] sm:$0xff] %vm1353, %v1617
          %1639 = vst.msk [vmem:[%s1634 + $0x20] sm:$0xff] %vm1353, %v1619
          %1640 = vst.msk [vmem:[%s1634 + $0x28] sm:$0xff] %vm1353, %v1621
          %1641 = vst.msk [vmem:[%s1634 + $0x30] sm:$0xff] %vm1353, %v1623
          %1642 = vst.msk [vmem:[%s1634 + $0x38] sm:$0xff] %vm1353, %v1625
          %1651 = vrot.lane.b32.xlu0 %v1315, 96
          %v1652 = vpop.permute.xlu0 %1651
          %1653 = vrot.lane.b32.xlu0 %v1320, 96
          %v1654 = vpop.permute.xlu0 %1653
          %1655 = vrot.lane.b32.xlu0 %v1325, 96
          %v1656 = vpop.permute.xlu0 %1655
          %1657 = vrot.lane.b32.xlu0 %v1330, 96
          %v1658 = vpop.permute.xlu0 %1657
          %1659 = vrot.lane.b32.xlu0 %v1335, 96
          %v1660 = vpop.permute.xlu0 %1659
          %1661 = vrot.lane.b32.xlu0 %v1340, 96
          %v1662 = vpop.permute.xlu0 %1661
          %1663 = vrot.lane.b32.xlu0 %v1345, 96
          %v1664 = vpop.permute.xlu0 %1663
          %1665 = vrot.lane.b32.xlu0 %v1350, 96
          %v1666 = vpop.permute.xlu0 %1665
          %s1675 = scalar_lea.vmem [#allocation3], 320
          %1676 = vst.msk [vmem:[%s1675] sm:$0xff] %vm1353, %v1652
          %1677 = vst.msk [vmem:[%s1675 + $0x8] sm:$0xff] %vm1353, %v1654
          %1678 = vst.msk [vmem:[%s1675 + $0x10] sm:$0xff] %vm1353, %v1656
          %1679 = vst.msk [vmem:[%s1675 + $0x18] sm:$0xff] %vm1353, %v1658
          %1680 = vst.msk [vmem:[%s1675 + $0x20] sm:$0xff] %vm1353, %v1660
          %1681 = vst.msk [vmem:[%s1675 + $0x28] sm:$0xff] %vm1353, %v1662
          %1682 = vst.msk [vmem:[%s1675 + $0x30] sm:$0xff] %vm1353, %v1664
          %1683 = vst.msk [vmem:[%s1675 + $0x38] sm:$0xff] %vm1353, %v1666
          %1684 = vrot.lane.b32.xlu0 %v1154, 64
          %v1685 = vpop.permute.xlu0 %1684
          %1686 = vrot.lane.b32.xlu0 %v1159, 64
          %v1687 = vpop.permute.xlu0 %1686
          %1688 = vrot.lane.b32.xlu0 %v1164, 64
          %v1689 = vpop.permute.xlu0 %1688
          %1690 = vrot.lane.b32.xlu0 %v1169, 64
          %v1691 = vpop.permute.xlu0 %1690
          %1692 = vrot.lane.b32.xlu0 %v1174, 64
          %v1693 = vpop.permute.xlu0 %1692
          %1694 = vrot.lane.b32.xlu0 %v1179, 64
          %v1695 = vpop.permute.xlu0 %1694
          %1696 = vrot.lane.b32.xlu0 %v1184, 64
          %v1697 = vpop.permute.xlu0 %1696
          %1698 = vrot.lane.b32.xlu0 %v1189, 64
          %v1699 = vpop.permute.xlu0 %1698
          %s1708 = scalar_lea.vmem [#allocation2], 384
          %1709 = vst.msk [vmem:[%s1708] sm:$0xff] %vm1353, %v1685
          %1710 = vst.msk [vmem:[%s1708 + $0x8] sm:$0xff] %vm1353, %v1687
          %1711 = vst.msk [vmem:[%s1708 + $0x10] sm:$0xff] %vm1353, %v1689
          %1712 = vst.msk [vmem:[%s1708 + $0x18] sm:$0xff] %vm1353, %v1691
          %1713 = vst.msk [vmem:[%s1708 + $0x20] sm:$0xff] %vm1353, %v1693
          %1714 = vst.msk [vmem:[%s1708 + $0x28] sm:$0xff] %vm1353, %v1695
          %1715 = vst.msk [vmem:[%s1708 + $0x30] sm:$0xff] %vm1353, %v1697
          %1716 = vst.msk [vmem:[%s1708 + $0x38] sm:$0xff] %vm1353, %v1699
          %1717 = vrot.lane.b32.xlu0 %v1315, 64
          %v1718 = vpop.permute.xlu0 %1717
          %1719 = vrot.lane.b32.xlu0 %v1320, 64
          %v1720 = vpop.permute.xlu0 %1719
          %1721 = vrot.lane.b32.xlu0 %v1325, 64
          %v1722 = vpop.permute.xlu0 %1721
          %1723 = vrot.lane.b32.xlu0 %v1330, 64
          %v1724 = vpop.permute.xlu0 %1723
          %1725 = vrot.lane.b32.xlu0 %v1335, 64
          %v1726 = vpop.permute.xlu0 %1725
          %1727 = vrot.lane.b32.xlu0 %v1340, 64
          %v1728 = vpop.permute.xlu0 %1727
          %1729 = vrot.lane.b32.xlu0 %v1345, 64
          %v1730 = vpop.permute.xlu0 %1729
          %1731 = vrot.lane.b32.xlu0 %v1350, 64
          %v1732 = vpop.permute.xlu0 %1731
          %s1741 = scalar_lea.vmem [#allocation3], 384
          %1742 = vst.msk [vmem:[%s1741] sm:$0xff] %vm1353, %v1718
          %1743 = vst.msk [vmem:[%s1741 + $0x8] sm:$0xff] %vm1353, %v1720
          %1744 = vst.msk [vmem:[%s1741 + $0x10] sm:$0xff] %vm1353, %v1722
          %1745 = vst.msk [vmem:[%s1741 + $0x18] sm:$0xff] %vm1353, %v1724
          %1746 = vst.msk [vmem:[%s1741 + $0x20] sm:$0xff] %vm1353, %v1726
          %1747 = vst.msk [vmem:[%s1741 + $0x28] sm:$0xff] %vm1353, %v1728
          %1748 = vst.msk [vmem:[%s1741 + $0x30] sm:$0xff] %vm1353, %v1730
          %1749 = vst.msk [vmem:[%s1741 + $0x38] sm:$0xff] %vm1353, %v1732
          %1750 = vrot.lane.b32.xlu0 %v1154, 32
          %v1751 = vpop.permute.xlu0 %1750
          %1752 = vrot.lane.b32.xlu0 %v1159, 32
          %v1753 = vpop.permute.xlu0 %1752
          %1754 = vrot.lane.b32.xlu0 %v1164, 32
          %v1755 = vpop.permute.xlu0 %1754
          %1756 = vrot.lane.b32.xlu0 %v1169, 32
          %v1757 = vpop.permute.xlu0 %1756
          %1758 = vrot.lane.b32.xlu0 %v1174, 32
          %v1759 = vpop.permute.xlu0 %1758
          %1760 = vrot.lane.b32.xlu0 %v1179, 32
          %v1761 = vpop.permute.xlu0 %1760
          %1762 = vrot.lane.b32.xlu0 %v1184, 32
          %v1763 = vpop.permute.xlu0 %1762
          %1764 = vrot.lane.b32.xlu0 %v1189, 32
          %v1765 = vpop.permute.xlu0 %1764
          %s1774 = scalar_lea.vmem [#allocation2], 448
          %1775 = vst.msk [vmem:[%s1774] sm:$0xff] %vm1353, %v1751
          %1776 = vst.msk [vmem:[%s1774 + $0x8] sm:$0xff] %vm1353, %v1753
          %1777 = vst.msk [vmem:[%s1774 + $0x10] sm:$0xff] %vm1353, %v1755
          %1778 = vst.msk [vmem:[%s1774 + $0x18] sm:$0xff] %vm1353, %v1757
          %1779 = vst.msk [vmem:[%s1774 + $0x20] sm:$0xff] %vm1353, %v1759
          %1780 = vst.msk [vmem:[%s1774 + $0x28] sm:$0xff] %vm1353, %v1761
          %1781 = vst.msk [vmem:[%s1774 + $0x30] sm:$0xff] %vm1353, %v1763
          %1782 = vst.msk [vmem:[%s1774 + $0x38] sm:$0xff] %vm1353, %v1765
          %1783 = vrot.lane.b32.xlu0 %v1315, 32
          %v1784 = vpop.permute.xlu0 %1783
          %1785 = vrot.lane.b32.xlu0 %v1320, 32
          %v1786 = vpop.permute.xlu0 %1785
          %1787 = vrot.lane.b32.xlu0 %v1325, 32
          %v1788 = vpop.permute.xlu0 %1787
          %1789 = vrot.lane.b32.xlu0 %v1330, 32
          %v1790 = vpop.permute.xlu0 %1789
          %1791 = vrot.lane.b32.xlu0 %v1335, 32
          %v1792 = vpop.permute.xlu0 %1791
          %1793 = vrot.lane.b32.xlu0 %v1340, 32
          %v1794 = vpop.permute.xlu0 %1793
          %1795 = vrot.lane.b32.xlu0 %v1345, 32
          %v1796 = vpop.permute.xlu0 %1795
          %1797 = vrot.lane.b32.xlu0 %v1350, 32
          %v1798 = vpop.permute.xlu0 %1797
          %s1807 = scalar_lea.vmem [#allocation3], 448
          %1808 = vst.msk [vmem:[%s1807] sm:$0xff] %vm1353, %v1784
          %1809 = vst.msk [vmem:[%s1807 + $0x8] sm:$0xff] %vm1353, %v1786
          %1810 = vst.msk [vmem:[%s1807 + $0x10] sm:$0xff] %vm1353, %v1788
          %1811 = vst.msk [vmem:[%s1807 + $0x18] sm:$0xff] %vm1353, %v1790
          %1812 = vst.msk [vmem:[%s1807 + $0x20] sm:$0xff] %vm1353, %v1792
          %1813 = vst.msk [vmem:[%s1807 + $0x28] sm:$0xff] %vm1353, %v1794
          %1814 = vst.msk [vmem:[%s1807 + $0x30] sm:$0xff] %vm1353, %v1796
          %1815 = vst.msk [vmem:[%s1807 + $0x38] sm:$0xff] %vm1353, %v1798
        $region136: #{tpu_custom_call.1} parent=75 // pred_fallthru
          _
        %s1816 = smul.u32 %s43, 64
        %s1817 = scalar_lea.vmem %s578, %s1816 [#allocation6]
        %v1818 = vld [vmem:[%s1817] sm:$0xff]
        %v1819 = vld [vmem:[%s1817 + $0x8] sm:$0xff]
        %v1820 = vld [vmem:[%s1817 + $0x10] sm:$0xff]
        %v1821 = vld [vmem:[%s1817 + $0x18] sm:$0xff]
        %v1822 = vld [vmem:[%s1817 + $0x20] sm:$0xff]
        %v1823 = vld [vmem:[%s1817 + $0x28] sm:$0xff]
        %v1824 = vld [vmem:[%s1817 + $0x30] sm:$0xff]
        %v1825 = vld [vmem:[%s1817 + $0x38] sm:$0xff]
        %1826 = vadd.xlane.f32.xlu0 %v1818
        %v1827 = vpop.xlane.xlu0 %1826
        %1828 = vadd.xlane.f32.xlu0 %v1819
        %v1829 = vpop.xlane.xlu0 %1828
        %1830 = vadd.xlane.f32.xlu0 %v1820
        %v1831 = vpop.xlane.xlu0 %1830
        %1832 = vadd.xlane.f32.xlu0 %v1821
        %v1833 = vpop.xlane.xlu0 %1832
        %1834 = vadd.xlane.f32.xlu0 %v1822
        %v1835 = vpop.xlane.xlu0 %1834
        %1836 = vadd.xlane.f32.xlu0 %v1823
        %v1837 = vpop.xlane.xlu0 %1836
        %1838 = vadd.xlane.f32.xlu0 %v1824
        %v1839 = vpop.xlane.xlu0 %1838
        %1840 = vadd.xlane.f32.xlu0 %v1825
        %v1841 = vpop.xlane.xlu0 %1840
        %v1842 = vrcp.pop 128.0
        %v1843 = vmul.f32 %v1827, %v1842
        %v1844 = vmul.f32 %v1829, %v1842
        %v1845 = vmul.f32 %v1831, %v1842
        %v1846 = vmul.f32 %v1833, %v1842
        %v1847 = vmul.f32 %v1835, %v1842
        %v1848 = vmul.f32 %v1837, %v1842
        %v1849 = vmul.f32 %v1839, %v1842
        %v1850 = vmul.f32 %v1841, %v1842
        %v1851 = vsub.f32 %v1818, %v1843
        %v1852 = vsub.f32 %v1819, %v1844
        %v1853 = vsub.f32 %v1820, %v1845
        %v1854 = vsub.f32 %v1821, %v1846
        %v1855 = vsub.f32 %v1822, %v1847
        %v1856 = vsub.f32 %v1823, %v1848
        %v1857 = vsub.f32 %v1824, %v1849
        %v1858 = vsub.f32 %v1825, %v1850
        %v1859 = vmul.f32 %v1851, %v1851
        %v1860 = vmul.f32 %v1852, %v1852
        %v1861 = vmul.f32 %v1853, %v1853
        %v1862 = vmul.f32 %v1854, %v1854
        %v1863 = vmul.f32 %v1855, %v1855
        %v1864 = vmul.f32 %v1856, %v1856
        %v1865 = vmul.f32 %v1857, %v1857
        %v1866 = vmul.f32 %v1858, %v1858
        %1867 = vadd.xlane.f32.xlu0 %v1859
        %v1868 = vpop.xlane.xlu0 %1867
        %1869 = vadd.xlane.f32.xlu0 %v1860
        %v1870 = vpop.xlane.xlu0 %1869
        %1871 = vadd.xlane.f32.xlu0 %v1861
        %v1872 = vpop.xlane.xlu0 %1871
        %1873 = vadd.xlane.f32.xlu0 %v1862
        %v1874 = vpop.xlane.xlu0 %1873
        %1875 = vadd.xlane.f32.xlu0 %v1863
        %v1876 = vpop.xlane.xlu0 %1875
        %1877 = vadd.xlane.f32.xlu0 %v1864
        %v1878 = vpop.xlane.xlu0 %1877
        %1879 = vadd.xlane.f32.xlu0 %v1865
        %v1880 = vpop.xlane.xlu0 %1879
        %1881 = vadd.xlane.f32.xlu0 %v1866
        %v1882 = vpop.xlane.xlu0 %1881
        %v1883 = vmul.f32 %v1868, %v1842
        %v1884 = vmul.f32 %v1870, %v1842
        %v1885 = vmul.f32 %v1872, %v1842
        %v1886 = vmul.f32 %v1874, %v1842
        %v1887 = vmul.f32 %v1876, %v1842
        %v1888 = vmul.f32 %v1878, %v1842
        %v1889 = vmul.f32 %v1880, %v1842
        %v1890 = vmul.f32 %v1882, %v1842
        %v1891 = vadd.f32 %v1883, 1e-05
        %v1892 = vadd.f32 %v1884, 1e-05
        %v1893 = vadd.f32 %v1885, 1e-05
        %v1894 = vadd.f32 %v1886, 1e-05
        %v1895 = vadd.f32 %v1887, 1e-05
        %v1896 = vadd.f32 %v1888, 1e-05
        %v1897 = vadd.f32 %v1889, 1e-05
        %v1898 = vadd.f32 %v1890, 1e-05
        %v1899 = vrsqrt.pop %v1891
        %v1900 = vmul.f32 %v1891, %v1899
        %vm1901 = vcmp.eq.f32.partialorder %v1891, inf
        %v1902 = vsel %vm1901, %v1891, %v1900
        %vm1903 = vcmp.eq.f32.partialorder %v1891, 0.0
        %v1904 = vand.u32 %v1891, 2147483648
        %v1905 = vsel %vm1903, %v1904, %v1902
        %v1906 = vrsqrt.pop %v1892
        %v1907 = vmul.f32 %v1892, %v1906
        %vm1908 = vcmp.eq.f32.partialorder %v1892, inf
        %v1909 = vsel %vm1908, %v1892, %v1907
        %vm1910 = vcmp.eq.f32.partialorder %v1892, 0.0
        %v1911 = vand.u32 %v1892, 2147483648
        %v1912 = vsel %vm1910, %v1911, %v1909
        %v1913 = vrsqrt.pop %v1893
        %v1914 = vmul.f32 %v1893, %v1913
        %vm1915 = vcmp.eq.f32.partialorder %v1893, inf
        %v1916 = vsel %vm1915, %v1893, %v1914
        %vm1917 = vcmp.eq.f32.partialorder %v1893, 0.0
        %v1918 = vand.u32 %v1893, 2147483648
        %v1919 = vsel %vm1917, %v1918, %v1916
        %v1920 = vrsqrt.pop %v1894
        %v1921 = vmul.f32 %v1894, %v1920
        %vm1922 = vcmp.eq.f32.partialorder %v1894, inf
        %v1923 = vsel %vm1922, %v1894, %v1921
        %vm1924 = vcmp.eq.f32.partialorder %v1894, 0.0
        %v1925 = vand.u32 %v1894, 2147483648
        %v1926 = vsel %vm1924, %v1925, %v1923
        %v1927 = vrsqrt.pop %v1895
        %v1928 = vmul.f32 %v1895, %v1927
        %vm1929 = vcmp.eq.f32.partialorder %v1895, inf
        %v1930 = vsel %vm1929, %v1895, %v1928
        %vm1931 = vcmp.eq.f32.partialorder %v1895, 0.0
        %v1932 = vand.u32 %v1895, 2147483648
        %v1933 = vsel %vm1931, %v1932, %v1930
        %v1934 = vrsqrt.pop %v1896
        %v1935 = vmul.f32 %v1896, %v1934
        %vm1936 = vcmp.eq.f32.partialorder %v1896, inf
        %v1937 = vsel %vm1936, %v1896, %v1935
        %vm1938 = vcmp.eq.f32.partialorder %v1896, 0.0
        %v1939 = vand.u32 %v1896, 2147483648
        %v1940 = vsel %vm1938, %v1939, %v1937
        %v1941 = vrsqrt.pop %v1897
        %v1942 = vmul.f32 %v1897, %v1941
        %vm1943 = vcmp.eq.f32.partialorder %v1897, inf
        %v1944 = vsel %vm1943, %v1897, %v1942
        %vm1945 = vcmp.eq.f32.partialorder %v1897, 0.0
        %v1946 = vand.u32 %v1897, 2147483648
        %v1947 = vsel %vm1945, %v1946, %v1944
        %v1948 = vrsqrt.pop %v1898
        %v1949 = vmul.f32 %v1898, %v1948
        %vm1950 = vcmp.eq.f32.partialorder %v1898, inf
        %v1951 = vsel %vm1950, %v1898, %v1949
        %vm1952 = vcmp.eq.f32.partialorder %v1898, 0.0
        %v1953 = vand.u32 %v1898, 2147483648
        %v1954 = vsel %vm1952, %v1953, %v1951
        %v1955 = vrcp.pop %v1905
        %v1956 = vmul.f32 %v1851, %v1955
        %v1957 = vrcp.pop %v1912
        %v1958 = vmul.f32 %v1852, %v1957
        %v1959 = vrcp.pop %v1919
        %v1960 = vmul.f32 %v1853, %v1959
        %v1961 = vrcp.pop %v1926
        %v1962 = vmul.f32 %v1854, %v1961
        %v1963 = vrcp.pop %v1933
        %v1964 = vmul.f32 %v1855, %v1963
        %v1965 = vrcp.pop %v1940
        %v1966 = vmul.f32 %v1856, %v1965
        %v1967 = vrcp.pop %v1947
        %v1968 = vmul.f32 %v1857, %v1967
        %v1969 = vrcp.pop %v1954
        %v1970 = vmul.f32 %v1858, %v1969
        %v1972 = vlaneseq
        %v1973 = vshrl.u32 %v1972, 7
        %v1974 = vsub.s32 0, %v1973
        %v1975 = vrot.slane %v676, %v1974
        %v1977 = vmul.f32 %v1975, %v1956
        %v1978 = vmul.f32 %v1975, %v1958
        %v1979 = vmul.f32 %v1975, %v1960
        %v1980 = vmul.f32 %v1975, %v1962
        %v1981 = vmul.f32 %v1975, %v1964
        %v1982 = vmul.f32 %v1975, %v1966
        %v1983 = vmul.f32 %v1975, %v1968
        %v1984 = vmul.f32 %v1975, %v1970
        %v1986 = vlaneseq
        %v1987 = vshrl.u32 %v1986, 7
        %v1988 = vsub.s32 0, %v1987
        %v1989 = vrot.slane %v677, %v1988
        %v1991 = vadd.f32 %v1977, %v1989
        %v1992 = vadd.f32 %v1978, %v1989
        %v1993 = vadd.f32 %v1979, %v1989
        %v1994 = vadd.f32 %v1980, %v1989
        %v1995 = vadd.f32 %v1981, %v1989
        %v1996 = vadd.f32 %v1982, %v1989
        %v1997 = vadd.f32 %v1983, %v1989
        %v1998 = vadd.f32 %v1984, %v1989
        %v1999 = vld [vmem:[#allocation9] sm:$0xff]
        %v2000 = vld [vmem:[#allocation9 + $0x8] sm:$0xff]
        %v2001 = vld [vmem:[#allocation9 + $0x10] sm:$0xff]
        %v2002 = vld [vmem:[#allocation9 + $0x18] sm:$0xff]
        %v2003 = vld [vmem:[#allocation9 + $0x20] sm:$0xff]
        %v2004 = vld [vmem:[#allocation9 + $0x28] sm:$0xff]
        %v2005 = vld [vmem:[#allocation9 + $0x30] sm:$0xff]
        %v2006 = vld [vmem:[#allocation9 + $0x38] sm:$0xff]
        %v2007 = vld [vmem:[#allocation9 + $0x40] sm:$0xff]
        %v2008 = vld [vmem:[#allocation9 + $0x48] sm:$0xff]
        %v2009 = vld [vmem:[#allocation9 + $0x50] sm:$0xff]
        %v2010 = vld [vmem:[#allocation9 + $0x58] sm:$0xff]
        %v2011 = vld [vmem:[#allocation9 + $0x60] sm:$0xff]
        %v2012 = vld [vmem:[#allocation9 + $0x68] sm:$0xff]
        %v2013 = vld [vmem:[#allocation9 + $0x70] sm:$0xff]
        %v2014 = vld [vmem:[#allocation9 + $0x78] sm:$0xff]
        %2015 = vmatprep.subr.mxu0 0.0
        %2016 = vmatpush1.msra.mxu0 %v1999
        %2017 = vmatprep.subr.mxu0 0.0
        %2018 = vmatpush1.msra.mxu0 %v2000
        %2019 = vmatprep.subr.mxu0 0.0
        %2020 = vmatpush1.msra.mxu0 %v2001
        %2021 = vmatprep.subr.mxu0 0.0
        %2022 = vmatpush1.msra.mxu0 %v2002
        %2023 = vmatprep.subr.mxu0 0.0
        %2024 = vmatpush1.msra.mxu0 %v2003
        %2025 = vmatprep.subr.mxu0 0.0
        %2026 = vmatpush1.msra.mxu0 %v2004
        %2027 = vmatprep.subr.mxu0 0.0
        %2028 = vmatpush1.msra.mxu0 %v2005
        %2029 = vmatprep.subr.mxu0 0.0
        %2030 = vmatpush1.msra.mxu0 %v2006
        %2031 = vmatprep.subr.mxu0 0.0
        %2032 = vmatpush1.msra.mxu0 %v2007
        %2033 = vmatprep.subr.mxu0 0.0
        %2034 = vmatpush1.msra.mxu0 %v2008
        %2035 = vmatprep.subr.mxu0 0.0
        %2036 = vmatpush1.msra.mxu0 %v2009
        %2037 = vmatprep.subr.mxu0 0.0
        %2038 = vmatpush1.msra.mxu0 %v2010
        %2039 = vmatprep.subr.mxu0 0.0
        %2040 = vmatpush1.msra.mxu0 %v2011
        %2041 = vmatprep.subr.mxu0 0.0
        %2042 = vmatpush1.msra.mxu0 %v2012
        %2043 = vmatprep.subr.mxu0 0.0
        %2044 = vmatpush1.msra.mxu0 %v2013
        %2045 = vmatprep.subr.mxu0 0.0
        %2046 = vmatpush1.msra.mxu0 %v2014
        %2047 = vmatprep.subr.mxu0 0.0
        %2048 = vmatpush1.msra.mxu0 0.0
        %2049 = vmatprep.subr.mxu0 0.0
        %2050 = vmatpush1.msra.mxu0 0.0
        %2051 = vmatprep.subr.mxu0 0.0
        %2052 = vmatpush1.msra.mxu0 0.0
        %2053 = vmatprep.subr.mxu0 0.0
        %2054 = vmatpush1.msra.mxu0 0.0
        %2055 = vmatprep.subr.mxu0 0.0
        %2056 = vmatpush1.msra.mxu0 0.0
        %2057 = vmatprep.subr.mxu0 0.0
        %2058 = vmatpush1.msra.mxu0 0.0
        %2059 = vmatprep.subr.mxu0 0.0
        %2060 = vmatpush1.msra.mxu0 0.0
        %2061 = vmatprep.subr.mxu0 0.0
        %2062 = vmatpush1.msra.mxu0 0.0
        %2063 = vmatprep.subr.mxu0 0.0
        %2064 = vmatpush1.msra.mxu0 0.0
        %2065 = vmatprep.subr.mxu0 0.0
        %2066 = vmatpush1.msra.mxu0 0.0
        %2067 = vmatprep.subr.mxu0 0.0
        %2068 = vmatpush1.msra.mxu0 0.0
        %2069 = vmatprep.subr.mxu0 0.0
        %2070 = vmatpush1.msra.mxu0 0.0
        %2071 = vmatprep.subr.mxu0 0.0
        %2072 = vmatpush1.msra.mxu0 0.0
        %2073 = vmatprep.subr.mxu0 0.0
        %2074 = vmatpush1.msra.mxu0 0.0
        %2075 = vmatprep.subr.mxu0 0.0
        %2076 = vmatpush1.msra.mxu0 0.0
        %2077 = vmatprep.subr.mxu0 0.0
        %2078 = vmatpush1.msra.mxu0 0.0
        %2079 = vmatprep.mubr.f32.mxu0 0.0
        %2080 = vmatmul.mubr.f32.gmra.mrb[0].mxu0 %v1991
        %v2081 = vpop.f32.mrb[0].mxu0
        %v2082 = vadd.f32 0.0, %v2081
        %v2083 = vpop.f32.mrb[0].mxu0
        %2084 = vmatprep.mubr.f32.mxu0 0.0
        %2085 = vmatmul.mubr.f32.gmra.mrb[0].mxu0 %v1992
        %v2086 = vpop.f32.mrb[0].mxu0
        %v2087 = vadd.f32 0.0, %v2086
        %v2088 = vpop.f32.mrb[0].mxu0
        %2089 = vmatprep.mubr.f32.mxu0 0.0
        %2090 = vmatmul.mubr.f32.gmra.mrb[0].mxu0 %v1993
        %v2091 = vpop.f32.mrb[0].mxu0
        %v2092 = vadd.f32 0.0, %v2091
        %v2093 = vpop.f32.mrb[0].mxu0
        %2094 = vmatprep.mubr.f32.mxu0 0.0
        %2095 = vmatmul.mubr.f32.gmra.mrb[0].mxu0 %v1994
        %v2096 = vpop.f32.mrb[0].mxu0
        %v2097 = vadd.f32 0.0, %v2096
        %v2098 = vpop.f32.mrb[0].mxu0
        %2099 = vmatprep.mubr.f32.mxu0 0.0
        %2100 = vmatmul.mubr.f32.gmra.mrb[0].mxu0 %v1995
        %v2101 = vpop.f32.mrb[0].mxu0
        %v2102 = vadd.f32 0.0, %v2101
        %v2103 = vpop.f32.mrb[0].mxu0
        %2104 = vmatprep.mubr.f32.mxu0 0.0
        %2105 = vmatmul.mubr.f32.gmra.mrb[0].mxu0 %v1996
        %v2106 = vpop.f32.mrb[0].mxu0
        %v2107 = vadd.f32 0.0, %v2106
        %v2108 = vpop.f32.mrb[0].mxu0
        %2109 = vmatprep.mubr.f32.mxu0 0.0
        %2110 = vmatmul.mubr.f32.gmra.mrb[0].mxu0 %v1997
        %v2111 = vpop.f32.mrb[0].mxu0
        %v2112 = vadd.f32 0.0, %v2111
        %v2113 = vpop.f32.mrb[0].mxu0
        %2114 = vmatprep.mubr.f32.mxu0 0.0
        %2115 = vmatmul.mubr.f32.gmra.mrb[0].mxu0 %v1998
        %v2116 = vpop.f32.mrb[0].mxu0
        %v2117 = vadd.f32 0.0, %v2116
        %v2118 = vpop.f32.mrb[0].mxu0
        %2119 = vdwg.mxu0
        %v2120 = vmul.f32 %v2082, 0.17677669
        %v2121 = vmul.f32 %v2087, 0.17677669
        %v2122 = vmul.f32 %v2092, 0.17677669
        %v2123 = vmul.f32 %v2097, 0.17677669
        %v2124 = vmul.f32 %v2102, 0.17677669
        %v2125 = vmul.f32 %v2107, 0.17677669
        %v2126 = vmul.f32 %v2112, 0.17677669
        %v2127 = vmul.f32 %v2117, 0.17677669
        %vm2128 = vcmask 261120
        %2129 = vst.msk [vmem:[#allocation4] sm:$0xff] %vm2128, %v2120
        %2130 = vst.msk [vmem:[#allocation4 + $0x8] sm:$0xff] %vm2128, %v2121
        %2131 = vst.msk [vmem:[#allocation4 + $0x10] sm:$0xff] %vm2128, %v2122
        %2132 = vst.msk [vmem:[#allocation4 + $0x18] sm:$0xff] %vm2128, %v2123
        %2133 = vst.msk [vmem:[#allocation4 + $0x20] sm:$0xff] %vm2128, %v2124
        %2134 = vst.msk [vmem:[#allocation4 + $0x28] sm:$0xff] %vm2128, %v2125
        %2135 = vst.msk [vmem:[#allocation4 + $0x30] sm:$0xff] %vm2128, %v2126
        %2136 = vst.msk [vmem:[#allocation4 + $0x38] sm:$0xff] %vm2128, %v2127
        %2145 = vrot.lane.b32.xlu0 %v2120, 96
        %v2146 = vpop.permute.xlu0 %2145
        %2147 = vrot.lane.b32.xlu0 %v2121, 96
        %v2148 = vpop.permute.xlu0 %2147
        %2149 = vrot.lane.b32.xlu0 %v2122, 96
        %v2150 = vpop.permute.xlu0 %2149
        %2151 = vrot.lane.b32.xlu0 %v2123, 96
        %v2152 = vpop.permute.xlu0 %2151
        %2153 = vrot.lane.b32.xlu0 %v2124, 96
        %v2154 = vpop.permute.xlu0 %2153
        %2155 = vrot.lane.b32.xlu0 %v2125, 96
        %v2156 = vpop.permute.xlu0 %2155
        %2157 = vrot.lane.b32.xlu0 %v2126, 96
        %v2158 = vpop.permute.xlu0 %2157
        %2159 = vrot.lane.b32.xlu0 %v2127, 96
        %v2160 = vpop.permute.xlu0 %2159
        %s2169 = scalar_lea.vmem [#allocation4], 64
        %2170 = vst.msk [vmem:[%s2169] sm:$0xff] %vm2128, %v2146
        %2171 = vst.msk [vmem:[%s2169 + $0x8] sm:$0xff] %vm2128, %v2148
        %2172 = vst.msk [vmem:[%s2169 + $0x10] sm:$0xff] %vm2128, %v2150
        %2173 = vst.msk [vmem:[%s2169 + $0x18] sm:$0xff] %vm2128, %v2152
        %2174 = vst.msk [vmem:[%s2169 + $0x20] sm:$0xff] %vm2128, %v2154
        %2175 = vst.msk [vmem:[%s2169 + $0x28] sm:$0xff] %vm2128, %v2156
        %2176 = vst.msk [vmem:[%s2169 + $0x30] sm:$0xff] %vm2128, %v2158
        %2177 = vst.msk [vmem:[%s2169 + $0x38] sm:$0xff] %vm2128, %v2160
        %2178 = vrot.lane.b32.xlu0 %v2120, 64
        %v2179 = vpop.permute.xlu0 %2178
        %2180 = vrot.lane.b32.xlu0 %v2121, 64
        %v2181 = vpop.permute.xlu0 %2180
        %2182 = vrot.lane.b32.xlu0 %v2122, 64
        %v2183 = vpop.permute.xlu0 %2182
        %2184 = vrot.lane.b32.xlu0 %v2123, 64
        %v2185 = vpop.permute.xlu0 %2184
        %2186 = vrot.lane.b32.xlu0 %v2124, 64
        %v2187 = vpop.permute.xlu0 %2186
        %2188 = vrot.lane.b32.xlu0 %v2125, 64
        %v2189 = vpop.permute.xlu0 %2188
        %2190 = vrot.lane.b32.xlu0 %v2126, 64
        %v2191 = vpop.permute.xlu0 %2190
        %2192 = vrot.lane.b32.xlu0 %v2127, 64
        %v2193 = vpop.permute.xlu0 %2192
        %s2202 = scalar_lea.vmem [#allocation4], 128
        %2203 = vst.msk [vmem:[%s2202] sm:$0xff] %vm2128, %v2179
        %2204 = vst.msk [vmem:[%s2202 + $0x8] sm:$0xff] %vm2128, %v2181
        %2205 = vst.msk [vmem:[%s2202 + $0x10] sm:$0xff] %vm2128, %v2183
        %2206 = vst.msk [vmem:[%s2202 + $0x18] sm:$0xff] %vm2128, %v2185
        %2207 = vst.msk [vmem:[%s2202 + $0x20] sm:$0xff] %vm2128, %v2187
        %2208 = vst.msk [vmem:[%s2202 + $0x28] sm:$0xff] %vm2128, %v2189
        %2209 = vst.msk [vmem:[%s2202 + $0x30] sm:$0xff] %vm2128, %v2191
        %2210 = vst.msk [vmem:[%s2202 + $0x38] sm:$0xff] %vm2128, %v2193
        %2211 = vrot.lane.b32.xlu0 %v2120, 32
        %v2212 = vpop.permute.xlu0 %2211
        %2213 = vrot.lane.b32.xlu0 %v2121, 32
        %v2214 = vpop.permute.xlu0 %2213
        %2215 = vrot.lane.b32.xlu0 %v2122, 32
        %v2216 = vpop.permute.xlu0 %2215
        %2217 = vrot.lane.b32.xlu0 %v2123, 32
        %v2218 = vpop.permute.xlu0 %2217
        %2219 = vrot.lane.b32.xlu0 %v2124, 32
        %v2220 = vpop.permute.xlu0 %2219
        %2221 = vrot.lane.b32.xlu0 %v2125, 32
        %v2222 = vpop.permute.xlu0 %2221
        %2223 = vrot.lane.b32.xlu0 %v2126, 32
        %v2224 = vpop.permute.xlu0 %2223
        %2225 = vrot.lane.b32.xlu0 %v2127, 32
        %v2226 = vpop.permute.xlu0 %2225
        %s2235 = scalar_lea.vmem [#allocation4], 192
        %2236 = vst.msk [vmem:[%s2235] sm:$0xff] %vm2128, %v2212
        %2237 = vst.msk [vmem:[%s2235 + $0x8] sm:$0xff] %vm2128, %v2214
        %2238 = vst.msk [vmem:[%s2235 + $0x10] sm:$0xff] %vm2128, %v2216
        %2239 = vst.msk [vmem:[%s2235 + $0x18] sm:$0xff] %vm2128, %v2218
        %2240 = vst.msk [vmem:[%s2235 + $0x20] sm:$0xff] %vm2128, %v2220
        %2241 = vst.msk [vmem:[%s2235 + $0x28] sm:$0xff] %vm2128, %v2222
        %2242 = vst.msk [vmem:[%s2235 + $0x30] sm:$0xff] %vm2128, %v2224
        %2243 = vst.msk [vmem:[%s2235 + $0x38] sm:$0xff] %vm2128, %v2226
        %v2244 = vld [vmem:[#allocation4] sm:$0xff]
        %v2245 = vld [vmem:[#allocation4 + $0x8] sm:$0xff]
        %v2246 = vld [vmem:[#allocation4 + $0x10] sm:$0xff]
        %v2247 = vld [vmem:[#allocation4 + $0x18] sm:$0xff]
        %v2248 = vld [vmem:[#allocation4 + $0x20] sm:$0xff]
        %v2249 = vld [vmem:[#allocation4 + $0x28] sm:$0xff]
        %v2250 = vld [vmem:[#allocation4 + $0x30] sm:$0xff]
        %v2251 = vld [vmem:[#allocation4 + $0x38] sm:$0xff]
        %v2252 = vld [vmem:[#allocation4 + $0x40] sm:$0xff]
        %v2253 = vld [vmem:[#allocation4 + $0x48] sm:$0xff]
        %v2254 = vld [vmem:[#allocation4 + $0x50] sm:$0xff]
        %v2255 = vld [vmem:[#allocation4 + $0x58] sm:$0xff]
        %v2256 = vld [vmem:[#allocation4 + $0x60] sm:$0xff]
        %v2257 = vld [vmem:[#allocation4 + $0x68] sm:$0xff]
        %v2258 = vld [vmem:[#allocation4 + $0x70] sm:$0xff]
        %v2259 = vld [vmem:[#allocation4 + $0x78] sm:$0xff]
        %v2260 = vld [vmem:[#allocation4 + $0x80] sm:$0xff]
        %v2261 = vld [vmem:[#allocation4 + $0x88] sm:$0xff]
        %v2262 = vld [vmem:[#allocation4 + $0x90] sm:$0xff]
        %v2263 = vld [vmem:[#allocation4 + $0x98] sm:$0xff]
        %v2264 = vld [vmem:[#allocation4 + $0xa0] sm:$0xff]
        %v2265 = vld [vmem:[#allocation4 + $0xa8] sm:$0xff]
        %v2266 = vld [vmem:[#allocation4 + $0xb0] sm:$0xff]
        %v2267 = vld [vmem:[#allocation4 + $0xb8] sm:$0xff]
        %v2268 = vld [vmem:[#allocation4 + $0xc0] sm:$0xff]
        %v2269 = vld [vmem:[#allocation4 + $0xc8] sm:$0xff]
        %v2270 = vld [vmem:[#allocation4 + $0xd0] sm:$0xff]
        %v2271 = vld [vmem:[#allocation4 + $0xd8] sm:$0xff]
        %v2272 = vld [vmem:[#allocation4 + $0xe0] sm:$0xff]
        %v2273 = vld [vmem:[#allocation4 + $0xe8] sm:$0xff]
        %v2274 = vld [vmem:[#allocation4 + $0xf0] sm:$0xff]
        %v2275 = vld [vmem:[#allocation4 + $0xf8] sm:$0xff]
        %v2276 = vlaneseq
        %v2277 = vshrl.u32 %v2276, 7
        %v2278 = vadd.s32 %v2277, 8
        %v2279 = vadd.s32 %v2277, 16
        %v2280 = vadd.s32 %v2277, 24
        %v2281 = vadd.s32 %v2277, 32
        %v2282 = vadd.s32 %v2277, 40
        %v2283 = vadd.s32 %v2277, 48
        %v2284 = vadd.s32 %v2277, 56
        %v2285 = vstv %s1816
        %v2286 = vadd.s32 %v2285, %v2277
        %v2287 = vadd.s32 %v2285, %v2278
        %v2288 = vadd.s32 %v2285, %v2279
        %v2289 = vadd.s32 %v2285, %v2280
        %v2290 = vadd.s32 %v2285, %v2281
        %v2291 = vadd.s32 %v2285, %v2282
        %v2292 = vadd.s32 %v2285, %v2283
        %v2293 = vadd.s32 %v2285, %v2284
        %s2294 = sadd.s32 %s43, 1
        // While loop
        $region137: #{tpu_custom_call.1} parent=75 // loop_pre_header
          _
        $region138: #{tpu_custom_call.1} parent=75 // loop_header
          %s2296 = sphi 0, %s2298
          %p2297 = scmp.ge.s32.totalorder %s2296, %s2294
          %v2301 = vphi -1e+30, %v3194
          %v2302 = vphi -1e+30, %v3195
          %v2303 = vphi -1e+30, %v3196
          %v2304 = vphi -1e+30, %v3197
          %v2305 = vphi -1e+30, %v3198
          %v2306 = vphi -1e+30, %v3199
          %v2307 = vphi -1e+30, %v3200
          %v2308 = vphi -1e+30, %v3201
          %v2309 = vphi -1e+30, %v3202
          %v2310 = vphi -1e+30, %v3203
          %v2311 = vphi -1e+30, %v3204
          %v2312 = vphi -1e+30, %v3205
          %v2313 = vphi -1e+30, %v3206
          %v2314 = vphi -1e+30, %v3207
          %v2315 = vphi -1e+30, %v3208
          %v2316 = vphi -1e+30, %v3209
          %v2317 = vphi -1e+30, %v3210
          %v2318 = vphi -1e+30, %v3211
          %v2319 = vphi -1e+30, %v3212
          %v2320 = vphi -1e+30, %v3213
          %v2321 = vphi -1e+30, %v3214
          %v2322 = vphi -1e+30, %v3215
          %v2323 = vphi -1e+30, %v3216
          %v2324 = vphi -1e+30, %v3217
          %v2325 = vphi -1e+30, %v3218
          %v2326 = vphi -1e+30, %v3219
          %v2327 = vphi -1e+30, %v3220
          %v2328 = vphi -1e+30, %v3221
          %v2329 = vphi -1e+30, %v3222
          %v2330 = vphi -1e+30, %v3223
          %v2331 = vphi -1e+30, %v3224
          %v2332 = vphi -1e+30, %v3225
          %v2333 = vphi 0.0, %v3546
          %v2334 = vphi 0.0, %v3547
          %v2335 = vphi 0.0, %v3548
          %v2336 = vphi 0.0, %v3549
          %v2337 = vphi 0.0, %v3550
          %v2338 = vphi 0.0, %v3551
          %v2339 = vphi 0.0, %v3552
          %v2340 = vphi 0.0, %v3553
          %v2341 = vphi 0.0, %v3554
          %v2342 = vphi 0.0, %v3555
          %v2343 = vphi 0.0, %v3556
          %v2344 = vphi 0.0, %v3557
          %v2345 = vphi 0.0, %v3558
          %v2346 = vphi 0.0, %v3559
          %v2347 = vphi 0.0, %v3560
          %v2348 = vphi 0.0, %v3561
          %v2349 = vphi 0.0, %v3562
          %v2350 = vphi 0.0, %v3563
          %v2351 = vphi 0.0, %v3564
          %v2352 = vphi 0.0, %v3565
          %v2353 = vphi 0.0, %v3566
          %v2354 = vphi 0.0, %v3567
          %v2355 = vphi 0.0, %v3568
          %v2356 = vphi 0.0, %v3569
          %v2357 = vphi 0.0, %v3570
          %v2358 = vphi 0.0, %v3571
          %v2359 = vphi 0.0, %v3572
          %v2360 = vphi 0.0, %v3573
          %v2361 = vphi 0.0, %v3574
          %v2362 = vphi 0.0, %v3575
          %v2363 = vphi 0.0, %v3576
          %v2364 = vphi 0.0, %v3577
          %v2365 = vphi 0.0, %v4126
          %v2366 = vphi 0.0, %v4127
          %v2367 = vphi 0.0, %v4128
          %v2368 = vphi 0.0, %v4129
          %v2369 = vphi 0.0, %v4130
          %v2370 = vphi 0.0, %v4131
          %v2371 = vphi 0.0, %v4132
          %v2372 = vphi 0.0, %v4133
          %v2373 = vphi 0.0, %v4134
          %v2374 = vphi 0.0, %v4135
          %v2375 = vphi 0.0, %v4136
          %v2376 = vphi 0.0, %v4137
          %v2377 = vphi 0.0, %v4138
          %v2378 = vphi 0.0, %v4139
          %v2379 = vphi 0.0, %v4140
          %v2380 = vphi 0.0, %v4141
          %v2381 = vphi 0.0, %v4142
          %v2382 = vphi 0.0, %v4143
          %v2383 = vphi 0.0, %v4144
          %v2384 = vphi 0.0, %v4145
          %v2385 = vphi 0.0, %v4146
          %v2386 = vphi 0.0, %v4147
          %v2387 = vphi 0.0, %v4148
          %v2388 = vphi 0.0, %v4149
          %v2389 = vphi 0.0, %v4150
          %v2390 = vphi 0.0, %v4151
          %v2391 = vphi 0.0, %v4152
          %v2392 = vphi 0.0, %v4153
          %v2393 = vphi 0.0, %v4154
          %v2394 = vphi 0.0, %v4155
          %v2395 = vphi 0.0, %v4156
          %v2396 = vphi 0.0, %v4157
        $region139: #{tpu_custom_call.1} parent=75 // loop_header_branch
          %2300 = sbr.rel (%p2297) target = $region143
        $region140: #{tpu_custom_call.1} parent=75 // loop_body
          %s2397 = smul.u32 %s2296, 256
          %s2398 = scalar_lea.vmem [#allocation2], %s2397
          %v2399 = vld [vmem:[%s2398] sm:$0xff]
          %v2400 = vld [vmem:[%s2398 + $0x8] sm:$0xff]
          %v2401 = vld [vmem:[%s2398 + $0x10] sm:$0xff]
          %v2402 = vld [vmem:[%s2398 + $0x18] sm:$0xff]
          %v2403 = vld [vmem:[%s2398 + $0x20] sm:$0xff]
          %v2404 = vld [vmem:[%s2398 + $0x28] sm:$0xff]
          %v2405 = vld [vmem:[%s2398 + $0x30] sm:$0xff]
          %v2406 = vld [vmem:[%s2398 + $0x38] sm:$0xff]
          %v2407 = vld [vmem:[%s2398 + $0x40] sm:$0xff]
          %v2408 = vld [vmem:[%s2398 + $0x48] sm:$0xff]
          %v2409 = vld [vmem:[%s2398 + $0x50] sm:$0xff]
          %v2410 = vld [vmem:[%s2398 + $0x58] sm:$0xff]
          %v2411 = vld [vmem:[%s2398 + $0x60] sm:$0xff]
          %v2412 = vld [vmem:[%s2398 + $0x68] sm:$0xff]
          %v2413 = vld [vmem:[%s2398 + $0x70] sm:$0xff]
          %v2414 = vld [vmem:[%s2398 + $0x78] sm:$0xff]
          %v2415 = vld [vmem:[%s2398 + $0x80] sm:$0xff]
          %v2416 = vld [vmem:[%s2398 + $0x88] sm:$0xff]
          %v2417 = vld [vmem:[%s2398 + $0x90] sm:$0xff]
          %v2418 = vld [vmem:[%s2398 + $0x98] sm:$0xff]
          %v2419 = vld [vmem:[%s2398 + $0xa0] sm:$0xff]
          %v2420 = vld [vmem:[%s2398 + $0xa8] sm:$0xff]
          %v2421 = vld [vmem:[%s2398 + $0xb0] sm:$0xff]
          %v2422 = vld [vmem:[%s2398 + $0xb8] sm:$0xff]
          %v2423 = vld [vmem:[%s2398 + $0xc0] sm:$0xff]
          %v2424 = vld [vmem:[%s2398 + $0xc8] sm:$0xff]
          %v2425 = vld [vmem:[%s2398 + $0xd0] sm:$0xff]
          %v2426 = vld [vmem:[%s2398 + $0xd8] sm:$0xff]
          %v2427 = vld [vmem:[%s2398 + $0xe0] sm:$0xff]
          %v2428 = vld [vmem:[%s2398 + $0xe8] sm:$0xff]
          %v2429 = vld [vmem:[%s2398 + $0xf0] sm:$0xff]
          %v2430 = vld [vmem:[%s2398 + $0xf8] sm:$0xff]
          %s2431 = scalar_lea.vmem [#allocation3], %s2397
          %v2432 = vld [vmem:[%s2431] sm:$0xff]
          %v2433 = vld [vmem:[%s2431 + $0x8] sm:$0xff]
          %v2434 = vld [vmem:[%s2431 + $0x10] sm:$0xff]
          %v2435 = vld [vmem:[%s2431 + $0x18] sm:$0xff]
          %v2436 = vld [vmem:[%s2431 + $0x20] sm:$0xff]
          %v2437 = vld [vmem:[%s2431 + $0x28] sm:$0xff]
          %v2438 = vld [vmem:[%s2431 + $0x30] sm:$0xff]
          %v2439 = vld [vmem:[%s2431 + $0x38] sm:$0xff]
          %v2440 = vld [vmem:[%s2431 + $0x40] sm:$0xff]
          %v2441 = vld [vmem:[%s2431 + $0x48] sm:$0xff]
          %v2442 = vld [vmem:[%s2431 + $0x50] sm:$0xff]
          %v2443 = vld [vmem:[%s2431 + $0x58] sm:$0xff]
          %v2444 = vld [vmem:[%s2431 + $0x60] sm:$0xff]
          %v2445 = vld [vmem:[%s2431 + $0x68] sm:$0xff]
          %v2446 = vld [vmem:[%s2431 + $0x70] sm:$0xff]
          %v2447 = vld [vmem:[%s2431 + $0x78] sm:$0xff]
          %v2448 = vld [vmem:[%s2431 + $0x80] sm:$0xff]
          %v2449 = vld [vmem:[%s2431 + $0x88] sm:$0xff]
          %v2450 = vld [vmem:[%s2431 + $0x90] sm:$0xff]
          %v2451 = vld [vmem:[%s2431 + $0x98] sm:$0xff]
          %v2452 = vld [vmem:[%s2431 + $0xa0] sm:$0xff]
          %v2453 = vld [vmem:[%s2431 + $0xa8] sm:$0xff]
          %v2454 = vld [vmem:[%s2431 + $0xb0] sm:$0xff]
          %v2455 = vld [vmem:[%s2431 + $0xb8] sm:$0xff]
          %v2456 = vld [vmem:[%s2431 + $0xc0] sm:$0xff]
          %v2457 = vld [vmem:[%s2431 + $0xc8] sm:$0xff]
          %v2458 = vld [vmem:[%s2431 + $0xd0] sm:$0xff]
          %v2459 = vld [vmem:[%s2431 + $0xd8] sm:$0xff]
          %v2460 = vld [vmem:[%s2431 + $0xe0] sm:$0xff]
          %v2461 = vld [vmem:[%s2431 + $0xe8] sm:$0xff]
          %v2462 = vld [vmem:[%s2431 + $0xf0] sm:$0xff]
          %v2463 = vld [vmem:[%s2431 + $0xf8] sm:$0xff]
          %s2464 = smul.u32 %s2296, 64
          %v2465 = vlaneseq
          %v2466 = vand.u32 %v2465, 127
          %v2467 = vstv %s2464
          %v2468 = vadd.s32 %v2467, %v2466
          %vm2469 = vcmp.gt.s32.totalorder %v2468, %v2286
          %vm2470 = vcmp.gt.s32.totalorder %v2468, %v2287
          %vm2471 = vcmp.gt.s32.totalorder %v2468, %v2288
          %vm2472 = vcmp.gt.s32.totalorder %v2468, %v2289
          %vm2473 = vcmp.gt.s32.totalorder %v2468, %v2290
          %vm2474 = vcmp.gt.s32.totalorder %v2468, %v2291
          %vm2475 = vcmp.gt.s32.totalorder %v2468, %v2292
          %vm2476 = vcmp.gt.s32.totalorder %v2468, %v2293
          %v2477 = vsel %vm2469, -1e+30, 0.0
          %v2478 = vsel %vm2470, -1e+30, 0.0
          %v2479 = vsel %vm2471, -1e+30, 0.0
          %v2480 = vsel %vm2472, -1e+30, 0.0
          %v2481 = vsel %vm2473, -1e+30, 0.0
          %v2482 = vsel %vm2474, -1e+30, 0.0
          %v2483 = vsel %vm2475, -1e+30, 0.0
          %v2484 = vsel %vm2476, -1e+30, 0.0
          %v2486 = vsel %vm2128, %v2244, 0
          %v2489 = vsel %vm2128, %v2245, 0
          %v2492 = vsel %vm2128, %v2246, 0
          %v2495 = vsel %vm2128, %v2247, 0
          %v2498 = vsel %vm2128, %v2248, 0
          %v2501 = vsel %vm2128, %v2249, 0
          %v2504 = vsel %vm2128, %v2250, 0
          %v2507 = vsel %vm2128, %v2251, 0
          %v2510 = vsel %vm2128, %v2399, 0
          %v2513 = vsel %vm2128, %v2400, 0
          %v2516 = vsel %vm2128, %v2401, 0
          %v2519 = vsel %vm2128, %v2402, 0
          %v2522 = vsel %vm2128, %v2403, 0
          %v2525 = vsel %vm2128, %v2404, 0
          %v2528 = vsel %vm2128, %v2405, 0
          %v2531 = vsel %vm2128, %v2406, 0
          %2533 = vmatprep.subr.mxu0 0.0
          %2534 = vmatpush1.xpose.msra.mxu0 %v2510
          %2535 = vmatprep.subr.mxu0 0.0
          %2536 = vmatpush1.xpose.msra.mxu0 %v2513
          %2537 = vmatprep.subr.mxu0 0.0
          %2538 = vmatpush1.xpose.msra.mxu0 %v2516
          %2539 = vmatprep.subr.mxu0 0.0
          %2540 = vmatpush1.xpose.msra.mxu0 %v2519
          %2541 = vmatprep.subr.mxu0 0.0
          %2542 = vmatpush1.xpose.msra.mxu0 %v2522
          %2543 = vmatprep.subr.mxu0 0.0
          %2544 = vmatpush1.xpose.msra.mxu0 %v2525
          %2545 = vmatprep.subr.mxu0 0.0
          %2546 = vmatpush1.xpose.msra.mxu0 %v2528
          %2547 = vmatprep.subr.mxu0 0.0
          %2548 = vmatpush1.xpose.msra.mxu0 %v2531
          %2549 = vmatprep.subr.mxu0 0.0
          %2550 = vmatpush1.xpose.msra.mxu0 0.0
          %2551 = vmatprep.subr.mxu0 0.0
          %2552 = vmatpush1.xpose.msra.mxu0 0.0
          %2553 = vmatprep.subr.mxu0 0.0
          %2554 = vmatpush1.xpose.msra.mxu0 0.0
          %2555 = vmatprep.subr.mxu0 0.0
          %2556 = vmatpush1.xpose.msra.mxu0 0.0
          %2557 = vmatprep.subr.mxu0 0.0
          %2558 = vmatpush1.xpose.msra.mxu0 0.0
          %2559 = vmatprep.subr.mxu0 0.0
          %2560 = vmatpush1.xpose.msra.mxu0 0.0
          %2561 = vmatprep.subr.mxu0 0.0
          %2562 = vmatpush1.xpose.msra.mxu0 0.0
          %2563 = vmatprep.subr.mxu0 0.0
          %2564 = vmatpush1.xpose.msra.mxu0 0.0
          %2565 = vmatprep.subr.mxu0 0.0
          %2566 = vmatpush1.xpose.msra.mxu0 0.0
          %2567 = vmatprep.subr.mxu0 0.0
          %2568 = vmatpush1.xpose.msra.mxu0 0.0
          %2569 = vmatprep.subr.mxu0 0.0
          %2570 = vmatpush1.xpose.msra.mxu0 0.0
          %2571 = vmatprep.subr.mxu0 0.0
          %2572 = vmatpush1.xpose.msra.mxu0 0.0
          %2573 = vmatprep.subr.mxu0 0.0
          %2574 = vmatpush1.xpose.msra.mxu0 0.0
          %2575 = vmatprep.subr.mxu0 0.0
          %2576 = vmatpush1.xpose.msra.mxu0 0.0
          %2577 = vmatprep.subr.mxu0 0.0
          %2578 = vmatpush1.xpose.msra.mxu0 0.0
          %2579 = vmatprep.subr.mxu0 0.0
          %2580 = vmatpush1.xpose.msra.mxu0 0.0
          %2581 = vmatprep.subr.mxu0 0.0
          %2582 = vmatpush1.xpose.msra.mxu0 0.0
          %2583 = vmatprep.subr.mxu0 0.0
          %2584 = vmatpush1.xpose.msra.mxu0 0.0
          %2585 = vmatprep.subr.mxu0 0.0
          %2586 = vmatpush1.xpose.msra.mxu0 0.0
          %2587 = vmatprep.subr.mxu0 0.0
          %2588 = vmatpush1.xpose.msra.mxu0 0.0
          %2589 = vmatprep.subr.mxu0 0.0
          %2590 = vmatpush1.xpose.msra.mxu0 0.0
          %2591 = vmatprep.subr.mxu0 0.0
          %2592 = vmatpush1.xpose.msra.mxu0 0.0
          %2593 = vmatprep.subr.mxu0 0.0
          %2594 = vmatpush1.xpose.msra.mxu0 0.0
          %2595 = vmatprep.subr.mxu0 0.0
          %2596 = vmatpush1.xpose.msra.mxu0 0.0
          %2597 = vmatprep.mubr.f32.mxu0 0.0
          %2598 = vmatmul.mubr.f32.gmra.mrb[0].mxu0 %v2486
          %v2599 = vpop.f32.mrb[0].mxu0
          %v2600 = vadd.f32 %v2477, %v2599
          %v2601 = vpop.f32.mrb[0].mxu0
          %2602 = vmatprep.mubr.f32.mxu0 0.0
          %2603 = vmatmul.mubr.f32.gmra.mrb[0].mxu0 %v2489
          %v2604 = vpop.f32.mrb[0].mxu0
          %v2605 = vadd.f32 %v2478, %v2604
          %v2606 = vpop.f32.mrb[0].mxu0
          %2607 = vmatprep.mubr.f32.mxu0 0.0
          %2608 = vmatmul.mubr.f32.gmra.mrb[0].mxu0 %v2492
          %v2609 = vpop.f32.mrb[0].mxu0
          %v2610 = vadd.f32 %v2479, %v2609
          %v2611 = vpop.f32.mrb[0].mxu0
          %2612 = vmatprep.mubr.f32.mxu0 0.0
          %2613 = vmatmul.mubr.f32.gmra.mrb[0].mxu0 %v2495
          %v2614 = vpop.f32.mrb[0].mxu0
          %v2615 = vadd.f32 %v2480, %v2614
          %v2616 = vpop.f32.mrb[0].mxu0
          %2617 = vmatprep.mubr.f32.mxu0 0.0
          %2618 = vmatmul.mubr.f32.gmra.mrb[0].mxu0 %v2498
          %v2619 = vpop.f32.mrb[0].mxu0
          %v2620 = vadd.f32 %v2481, %v2619
          %v2621 = vpop.f32.mrb[0].mxu0
          %2622 = vmatprep.mubr.f32.mxu0 0.0
          %2623 = vmatmul.mubr.f32.gmra.mrb[0].mxu0 %v2501
          %v2624 = vpop.f32.mrb[0].mxu0
          %v2625 = vadd.f32 %v2482, %v2624
          %v2626 = vpop.f32.mrb[0].mxu0
          %2627 = vmatprep.mubr.f32.mxu0 0.0
          %2628 = vmatmul.mubr.f32.gmra.mrb[0].mxu0 %v2504
          %v2629 = vpop.f32.mrb[0].mxu0
          %v2630 = vadd.f32 %v2483, %v2629
          %v2631 = vpop.f32.mrb[0].mxu0
          %2632 = vmatprep.mubr.f32.mxu0 0.0
          %2633 = vmatmul.mubr.f32.gmra.mrb[0].mxu0 %v2507
          %v2634 = vpop.f32.mrb[0].mxu0
          %v2635 = vadd.f32 %v2484, %v2634
          %v2636 = vpop.f32.mrb[0].mxu0
          %2637 = vdwg.mxu0
          %v2639 = vsel %vm2128, %v2252, 0
          %v2642 = vsel %vm2128, %v2253, 0
          %v2645 = vsel %vm2128, %v2254, 0
          %v2648 = vsel %vm2128, %v2255, 0
          %v2651 = vsel %vm2128, %v2256, 0
          %v2654 = vsel %vm2128, %v2257, 0
          %v2657 = vsel %vm2128, %v2258, 0
          %v2660 = vsel %vm2128, %v2259, 0
          %v2663 = vsel %vm2128, %v2407, 0
          %v2666 = vsel %vm2128, %v2408, 0
          %v2669 = vsel %vm2128, %v2409, 0
          %v2672 = vsel %vm2128, %v2410, 0
          %v2675 = vsel %vm2128, %v2411, 0
          %v2678 = vsel %vm2128, %v2412, 0
          %v2681 = vsel %vm2128, %v2413, 0
          %v2684 = vsel %vm2128, %v2414, 0
          %2686 = vmatprep.subr.mxu0 0.0
          %2687 = vmatpush1.xpose.msra.mxu0 %v2663
          %2688 = vmatprep.subr.mxu0 0.0
          %2689 = vmatpush1.xpose.msra.mxu0 %v2666
          %2690 = vmatprep.subr.mxu0 0.0
          %2691 = vmatpush1.xpose.msra.mxu0 %v2669
          %2692 = vmatprep.subr.mxu0 0.0
          %2693 = vmatpush1.xpose.msra.mxu0 %v2672
          %2694 = vmatprep.subr.mxu0 0.0
          %2695 = vmatpush1.xpose.msra.mxu0 %v2675
          %2696 = vmatprep.subr.mxu0 0.0
          %2697 = vmatpush1.xpose.msra.mxu0 %v2678
          %2698 = vmatprep.subr.mxu0 0.0
          %2699 = vmatpush1.xpose.msra.mxu0 %v2681
          %2700 = vmatprep.subr.mxu0 0.0
          %2701 = vmatpush1.xpose.msra.mxu0 %v2684
          %2702 = vmatprep.subr.mxu0 0.0
          %2703 = vmatpush1.xpose.msra.mxu0 0.0
          %2704 = vmatprep.subr.mxu0 0.0
          %2705 = vmatpush1.xpose.msra.mxu0 0.0
          %2706 = vmatprep.subr.mxu0 0.0
          %2707 = vmatpush1.xpose.msra.mxu0 0.0
          %2708 = vmatprep.subr.mxu0 0.0
          %2709 = vmatpush1.xpose.msra.mxu0 0.0
          %2710 = vmatprep.subr.mxu0 0.0
          %2711 = vmatpush1.xpose.msra.mxu0 0.0
          %2712 = vmatprep.subr.mxu0 0.0
          %2713 = vmatpush1.xpose.msra.mxu0 0.0
          %2714 = vmatprep.subr.mxu0 0.0
          %2715 = vmatpush1.xpose.msra.mxu0 0.0
          %2716 = vmatprep.subr.mxu0 0.0
          %2717 = vmatpush1.xpose.msra.mxu0 0.0
          %2718 = vmatprep.subr.mxu0 0.0
          %2719 = vmatpush1.xpose.msra.mxu0 0.0
          %2720 = vmatprep.subr.mxu0 0.0
          %2721 = vmatpush1.xpose.msra.mxu0 0.0
          %2722 = vmatprep.subr.mxu0 0.0
          %2723 = vmatpush1.xpose.msra.mxu0 0.0
          %2724 = vmatprep.subr.mxu0 0.0
          %2725 = vmatpush1.xpose.msra.mxu0 0.0
          %2726 = vmatprep.subr.mxu0 0.0
          %2727 = vmatpush1.xpose.msra.mxu0 0.0
          %2728 = vmatprep.subr.mxu0 0.0
          %2729 = vmatpush1.xpose.msra.mxu0 0.0
          %2730 = vmatprep.subr.mxu0 0.0
          %2731 = vmatpush1.xpose.msra.mxu0 0.0
          %2732 = vmatprep.subr.mxu0 0.0
          %2733 = vmatpush1.xpose.msra.mxu0 0.0
          %2734 = vmatprep.subr.mxu0 0.0
          %2735 = vmatpush1.xpose.msra.mxu0 0.0
          %2736 = vmatprep.subr.mxu0 0.0
          %2737 = vmatpush1.xpose.msra.mxu0 0.0
          %2738 = vmatprep.subr.mxu0 0.0
          %2739 = vmatpush1.xpose.msra.mxu0 0.0
          %2740 = vmatprep.subr.mxu0 0.0
          %2741 = vmatpush1.xpose.msra.mxu0 0.0
          %2742 = vmatprep.subr.mxu0 0.0
          %2743 = vmatpush1.xpose.msra.mxu0 0.0
          %2744 = vmatprep.subr.mxu0 0.0
          %2745 = vmatpush1.xpose.msra.mxu0 0.0
          %2746 = vmatprep.subr.mxu0 0.0
          %2747 = vmatpush1.xpose.msra.mxu0 0.0
          %2748 = vmatprep.subr.mxu0 0.0
          %2749 = vmatpush1.xpose.msra.mxu0 0.0
          %2750 = vmatprep.mubr.f32.mxu0 0.0
          %2751 = vmatmul.mubr.f32.gmra.mrb[0].mxu0 %v2639
          %v2752 = vpop.f32.mrb[0].mxu0
          %v2753 = vadd.f32 %v2477, %v2752
          %v2754 = vpop.f32.mrb[0].mxu0
          %2755 = vmatprep.mubr.f32.mxu0 0.0
          %2756 = vmatmul.mubr.f32.gmra.mrb[0].mxu0 %v2642
          %v2757 = vpop.f32.mrb[0].mxu0
          %v2758 = vadd.f32 %v2478, %v2757
          %v2759 = vpop.f32.mrb[0].mxu0
          %2760 = vmatprep.mubr.f32.mxu0 0.0
          %2761 = vmatmul.mubr.f32.gmra.mrb[0].mxu0 %v2645
          %v2762 = vpop.f32.mrb[0].mxu0
          %v2763 = vadd.f32 %v2479, %v2762
          %v2764 = vpop.f32.mrb[0].mxu0
          %2765 = vmatprep.mubr.f32.mxu0 0.0
          %2766 = vmatmul.mubr.f32.gmra.mrb[0].mxu0 %v2648
          %v2767 = vpop.f32.mrb[0].mxu0
          %v2768 = vadd.f32 %v2480, %v2767
          %v2769 = vpop.f32.mrb[0].mxu0
          %2770 = vmatprep.mubr.f32.mxu0 0.0
          %2771 = vmatmul.mubr.f32.gmra.mrb[0].mxu0 %v2651
          %v2772 = vpop.f32.mrb[0].mxu0
          %v2773 = vadd.f32 %v2481, %v2772
          %v2774 = vpop.f32.mrb[0].mxu0
          %2775 = vmatprep.mubr.f32.mxu0 0.0
          %2776 = vmatmul.mubr.f32.gmra.mrb[0].mxu0 %v2654
          %v2777 = vpop.f32.mrb[0].mxu0
          %v2778 = vadd.f32 %v2482, %v2777
          %v2779 = vpop.f32.mrb[0].mxu0
          %2780 = vmatprep.mubr.f32.mxu0 0.0
          %2781 = vmatmul.mubr.f32.gmra.mrb[0].mxu0 %v2657
          %v2782 = vpop.f32.mrb[0].mxu0
          %v2783 = vadd.f32 %v2483, %v2782
          %v2784 = vpop.f32.mrb[0].mxu0
          %2785 = vmatprep.mubr.f32.mxu0 0.0
          %2786 = vmatmul.mubr.f32.gmra.mrb[0].mxu0 %v2660
          %v2787 = vpop.f32.mrb[0].mxu0
          %v2788 = vadd.f32 %v2484, %v2787
          %v2789 = vpop.f32.mrb[0].mxu0
          %2790 = vdwg.mxu0
          %v2792 = vsel %vm2128, %v2260, 0
          %v2795 = vsel %vm2128, %v2261, 0
          %v2798 = vsel %vm2128, %v2262, 0
          %v2801 = vsel %vm2128, %v2263, 0
          %v2804 = vsel %vm2128, %v2264, 0
          %v2807 = vsel %vm2128, %v2265, 0
          %v2810 = vsel %vm2128, %v2266, 0
          %v2813 = vsel %vm2128, %v2267, 0
          %v2816 = vsel %vm2128, %v2415, 0
          %v2819 = vsel %vm2128, %v2416, 0
          %v2822 = vsel %vm2128, %v2417, 0
          %v2825 = vsel %vm2128, %v2418, 0
          %v2828 = vsel %vm2128, %v2419, 0
          %v2831 = vsel %vm2128, %v2420, 0
          %v2834 = vsel %vm2128, %v2421, 0
          %v2837 = vsel %vm2128, %v2422, 0
          %2839 = vmatprep.subr.mxu0 0.0
          %2840 = vmatpush1.xpose.msra.mxu0 %v2816
          %2841 = vmatprep.subr.mxu0 0.0
          %2842 = vmatpush1.xpose.msra.mxu0 %v2819
          %2843 = vmatprep.subr.mxu0 0.0
          %2844 = vmatpush1.xpose.msra.mxu0 %v2822
          %2845 = vmatprep.subr.mxu0 0.0
          %2846 = vmatpush1.xpose.msra.mxu0 %v2825
          %2847 = vmatprep.subr.mxu0 0.0
          %2848 = vmatpush1.xpose.msra.mxu0 %v2828
          %2849 = vmatprep.subr.mxu0 0.0
          %2850 = vmatpush1.xpose.msra.mxu0 %v2831
          %2851 = vmatprep.subr.mxu0 0.0
          %2852 = vmatpush1.xpose.msra.mxu0 %v2834
          %2853 = vmatprep.subr.mxu0 0.0
          %2854 = vmatpush1.xpose.msra.mxu0 %v2837
          %2855 = vmatprep.subr.mxu0 0.0
          %2856 = vmatpush1.xpose.msra.mxu0 0.0
          %2857 = vmatprep.subr.mxu0 0.0
          %2858 = vmatpush1.xpose.msra.mxu0 0.0
          %2859 = vmatprep.subr.mxu0 0.0
          %2860 = vmatpush1.xpose.msra.mxu0 0.0
          %2861 = vmatprep.subr.mxu0 0.0
          %2862 = vmatpush1.xpose.msra.mxu0 0.0
          %2863 = vmatprep.subr.mxu0 0.0
          %2864 = vmatpush1.xpose.msra.mxu0 0.0
          %2865 = vmatprep.subr.mxu0 0.0
          %2866 = vmatpush1.xpose.msra.mxu0 0.0
          %2867 = vmatprep.subr.mxu0 0.0
          %2868 = vmatpush1.xpose.msra.mxu0 0.0
          %2869 = vmatprep.subr.mxu0 0.0
          %2870 = vmatpush1.xpose.msra.mxu0 0.0
          %2871 = vmatprep.subr.mxu0 0.0
          %2872 = vmatpush1.xpose.msra.mxu0 0.0
          %2873 = vmatprep.subr.mxu0 0.0
          %2874 = vmatpush1.xpose.msra.mxu0 0.0
          %2875 = vmatprep.subr.mxu0 0.0
          %2876 = vmatpush1.xpose.msra.mxu0 0.0
          %2877 = vmatprep.subr.mxu0 0.0
          %2878 = vmatpush1.xpose.msra.mxu0 0.0
          %2879 = vmatprep.subr.mxu0 0.0
          %2880 = vmatpush1.xpose.msra.mxu0 0.0
          %2881 = vmatprep.subr.mxu0 0.0
          %2882 = vmatpush1.xpose.msra.mxu0 0.0
          %2883 = vmatprep.subr.mxu0 0.0
          %2884 = vmatpush1.xpose.msra.mxu0 0.0
          %2885 = vmatprep.subr.mxu0 0.0
          %2886 = vmatpush1.xpose.msra.mxu0 0.0
          %2887 = vmatprep.subr.mxu0 0.0
          %2888 = vmatpush1.xpose.msra.mxu0 0.0
          %2889 = vmatprep.subr.mxu0 0.0
          %2890 = vmatpush1.xpose.msra.mxu0 0.0
          %2891 = vmatprep.subr.mxu0 0.0
          %2892 = vmatpush1.xpose.msra.mxu0 0.0
          %2893 = vmatprep.subr.mxu0 0.0
          %2894 = vmatpush1.xpose.msra.mxu0 0.0
          %2895 = vmatprep.subr.mxu0 0.0
          %2896 = vmatpush1.xpose.msra.mxu0 0.0
          %2897 = vmatprep.subr.mxu0 0.0
          %2898 = vmatpush1.xpose.msra.mxu0 0.0
          %2899 = vmatprep.subr.mxu0 0.0
          %2900 = vmatpush1.xpose.msra.mxu0 0.0
          %2901 = vmatprep.subr.mxu0 0.0
          %2902 = vmatpush1.xpose.msra.mxu0 0.0
          %2903 = vmatprep.mubr.f32.mxu0 0.0
          %2904 = vmatmul.mubr.f32.gmra.mrb[0].mxu0 %v2792
          %v2905 = vpop.f32.mrb[0].mxu0
          %v2906 = vadd.f32 %v2477, %v2905
          %v2907 = vpop.f32.mrb[0].mxu0
          %2908 = vmatprep.mubr.f32.mxu0 0.0
          %2909 = vmatmul.mubr.f32.gmra.mrb[0].mxu0 %v2795
          %v2910 = vpop.f32.mrb[0].mxu0
          %v2911 = vadd.f32 %v2478, %v2910
          %v2912 = vpop.f32.mrb[0].mxu0
          %2913 = vmatprep.mubr.f32.mxu0 0.0
          %2914 = vmatmul.mubr.f32.gmra.mrb[0].mxu0 %v2798
          %v2915 = vpop.f32.mrb[0].mxu0
          %v2916 = vadd.f32 %v2479, %v2915
          %v2917 = vpop.f32.mrb[0].mxu0
          %2918 = vmatprep.mubr.f32.mxu0 0.0
          %2919 = vmatmul.mubr.f32.gmra.mrb[0].mxu0 %v2801
          %v2920 = vpop.f32.mrb[0].mxu0
          %v2921 = vadd.f32 %v2480, %v2920
          %v2922 = vpop.f32.mrb[0].mxu0
          %2923 = vmatprep.mubr.f32.mxu0 0.0
          %2924 = vmatmul.mubr.f32.gmra.mrb[0].mxu0 %v2804
          %v2925 = vpop.f32.mrb[0].mxu0
          %v2926 = vadd.f32 %v2481, %v2925
          %v2927 = vpop.f32.mrb[0].mxu0
          %2928 = vmatprep.mubr.f32.mxu0 0.0
          %2929 = vmatmul.mubr.f32.gmra.mrb[0].mxu0 %v2807
          %v2930 = vpop.f32.mrb[0].mxu0
          %v2931 = vadd.f32 %v2482, %v2930
          %v2932 = vpop.f32.mrb[0].mxu0
          %2933 = vmatprep.mubr.f32.mxu0 0.0
          %2934 = vmatmul.mubr.f32.gmra.mrb[0].mxu0 %v2810
          %v2935 = vpop.f32.mrb[0].mxu0
          %v2936 = vadd.f32 %v2483, %v2935
          %v2937 = vpop.f32.mrb[0].mxu0
          %2938 = vmatprep.mubr.f32.mxu0 0.0
          %2939 = vmatmul.mubr.f32.gmra.mrb[0].mxu0 %v2813
          %v2940 = vpop.f32.mrb[0].mxu0
          %v2941 = vadd.f32 %v2484, %v2940
          %v2942 = vpop.f32.mrb[0].mxu0
          %2943 = vdwg.mxu0
          %v2945 = vsel %vm2128, %v2268, 0
          %v2948 = vsel %vm2128, %v2269, 0
          %v2951 = vsel %vm2128, %v2270, 0
          %v2954 = vsel %vm2128, %v2271, 0
          %v2957 = vsel %vm2128, %v2272, 0
          %v2960 = vsel %vm2128, %v2273, 0
          %v2963 = vsel %vm2128, %v2274, 0
          %v2966 = vsel %vm2128, %v2275, 0
          %v2969 = vsel %vm2128, %v2423, 0
          %v2972 = vsel %vm2128, %v2424, 0
          %v2975 = vsel %vm2128, %v2425, 0
          %v2978 = vsel %vm2128, %v2426, 0
          %v2981 = vsel %vm2128, %v2427, 0
          %v2984 = vsel %vm2128, %v2428, 0
          %v2987 = vsel %vm2128, %v2429, 0
          %v2990 = vsel %vm2128, %v2430, 0
          %2992 = vmatprep.subr.mxu0 0.0
          %2993 = vmatpush1.xpose.msra.mxu0 %v2969
          %2994 = vmatprep.subr.mxu0 0.0
          %2995 = vmatpush1.xpose.msra.mxu0 %v2972
          %2996 = vmatprep.subr.mxu0 0.0
          %2997 = vmatpush1.xpose.msra.mxu0 %v2975
          %2998 = vmatprep.subr.mxu0 0.0
          %2999 = vmatpush1.xpose.msra.mxu0 %v2978
          %3000 = vmatprep.subr.mxu0 0.0
          %3001 = vmatpush1.xpose.msra.mxu0 %v2981
          %3002 = vmatprep.subr.mxu0 0.0
          %3003 = vmatpush1.xpose.msra.mxu0 %v2984
          %3004 = vmatprep.subr.mxu0 0.0
          %3005 = vmatpush1.xpose.msra.mxu0 %v2987
          %3006 = vmatprep.subr.mxu0 0.0
          %3007 = vmatpush1.xpose.msra.mxu0 %v2990
          %3008 = vmatprep.subr.mxu0 0.0
          %3009 = vmatpush1.xpose.msra.mxu0 0.0
          %3010 = vmatprep.subr.mxu0 0.0
          %3011 = vmatpush1.xpose.msra.mxu0 0.0
          %3012 = vmatprep.subr.mxu0 0.0
          %3013 = vmatpush1.xpose.msra.mxu0 0.0
          %3014 = vmatprep.subr.mxu0 0.0
          %3015 = vmatpush1.xpose.msra.mxu0 0.0
          %3016 = vmatprep.subr.mxu0 0.0
          %3017 = vmatpush1.xpose.msra.mxu0 0.0
          %3018 = vmatprep.subr.mxu0 0.0
          %3019 = vmatpush1.xpose.msra.mxu0 0.0
          %3020 = vmatprep.subr.mxu0 0.0
          %3021 = vmatpush1.xpose.msra.mxu0 0.0
          %3022 = vmatprep.subr.mxu0 0.0
          %3023 = vmatpush1.xpose.msra.mxu0 0.0
          %3024 = vmatprep.subr.mxu0 0.0
          %3025 = vmatpush1.xpose.msra.mxu0 0.0
          %3026 = vmatprep.subr.mxu0 0.0
          %3027 = vmatpush1.xpose.msra.mxu0 0.0
          %3028 = vmatprep.subr.mxu0 0.0
          %3029 = vmatpush1.xpose.msra.mxu0 0.0
          %3030 = vmatprep.subr.mxu0 0.0
          %3031 = vmatpush1.xpose.msra.mxu0 0.0
          %3032 = vmatprep.subr.mxu0 0.0
          %3033 = vmatpush1.xpose.msra.mxu0 0.0
          %3034 = vmatprep.subr.mxu0 0.0
          %3035 = vmatpush1.xpose.msra.mxu0 0.0
          %3036 = vmatprep.subr.mxu0 0.0
          %3037 = vmatpush1.xpose.msra.mxu0 0.0
          %3038 = vmatprep.subr.mxu0 0.0
          %3039 = vmatpush1.xpose.msra.mxu0 0.0
          %3040 = vmatprep.subr.mxu0 0.0
          %3041 = vmatpush1.xpose.msra.mxu0 0.0
          %3042 = vmatprep.subr.mxu0 0.0
          %3043 = vmatpush1.xpose.msra.mxu0 0.0
          %3044 = vmatprep.subr.mxu0 0.0
          %3045 = vmatpush1.xpose.msra.mxu0 0.0
          %3046 = vmatprep.subr.mxu0 0.0
          %3047 = vmatpush1.xpose.msra.mxu0 0.0
          %3048 = vmatprep.subr.mxu0 0.0
          %3049 = vmatpush1.xpose.msra.mxu0 0.0
          %3050 = vmatprep.subr.mxu0 0.0
          %3051 = vmatpush1.xpose.msra.mxu0 0.0
          %3052 = vmatprep.subr.mxu0 0.0
          %3053 = vmatpush1.xpose.msra.mxu0 0.0
          %3054 = vmatprep.subr.mxu0 0.0
          %3055 = vmatpush1.xpose.msra.mxu0 0.0
          %3056 = vmatprep.mubr.f32.mxu0 0.0
          %3057 = vmatmul.mubr.f32.gmra.mrb[0].mxu0 %v2945
          %v3058 = vpop.f32.mrb[0].mxu0
          %v3059 = vadd.f32 %v2477, %v3058
          %v3060 = vpop.f32.mrb[0].mxu0
          %3061 = vmatprep.mubr.f32.mxu0 0.0
          %3062 = vmatmul.mubr.f32.gmra.mrb[0].mxu0 %v2948
          %v3063 = vpop.f32.mrb[0].mxu0
          %v3064 = vadd.f32 %v2478, %v3063
          %v3065 = vpop.f32.mrb[0].mxu0
          %3066 = vmatprep.mubr.f32.mxu0 0.0
          %3067 = vmatmul.mubr.f32.gmra.mrb[0].mxu0 %v2951
          %v3068 = vpop.f32.mrb[0].mxu0
          %v3069 = vadd.f32 %v2479, %v3068
          %v3070 = vpop.f32.mrb[0].mxu0
          %3071 = vmatprep.mubr.f32.mxu0 0.0
          %3072 = vmatmul.mubr.f32.gmra.mrb[0].mxu0 %v2954
          %v3073 = vpop.f32.mrb[0].mxu0
          %v3074 = vadd.f32 %v2480, %v3073
          %v3075 = vpop.f32.mrb[0].mxu0
          %3076 = vmatprep.mubr.f32.mxu0 0.0
          %3077 = vmatmul.mubr.f32.gmra.mrb[0].mxu0 %v2957
          %v3078 = vpop.f32.mrb[0].mxu0
          %v3079 = vadd.f32 %v2481, %v3078
          %v3080 = vpop.f32.mrb[0].mxu0
          %3081 = vmatprep.mubr.f32.mxu0 0.0
          %3082 = vmatmul.mubr.f32.gmra.mrb[0].mxu0 %v2960
          %v3083 = vpop.f32.mrb[0].mxu0
          %v3084 = vadd.f32 %v2482, %v3083
          %v3085 = vpop.f32.mrb[0].mxu0
          %3086 = vmatprep.mubr.f32.mxu0 0.0
          %3087 = vmatmul.mubr.f32.gmra.mrb[0].mxu0 %v2963
          %v3088 = vpop.f32.mrb[0].mxu0
          %v3089 = vadd.f32 %v2483, %v3088
          %v3090 = vpop.f32.mrb[0].mxu0
          %3091 = vmatprep.mubr.f32.mxu0 0.0
          %3092 = vmatmul.mubr.f32.gmra.mrb[0].mxu0 %v2966
          %v3093 = vpop.f32.mrb[0].mxu0
          %v3094 = vadd.f32 %v2484, %v3093
          %v3095 = vpop.f32.mrb[0].mxu0
          %3096 = vdwg.mxu0
          %vm3097 = vcmask 523264
          %v3098 = vsel %vm3097, %v2600, -inf
          %3099 = vmax.xlane.f32.xlu0 %v3098
          %v3100 = vpop.xlane.xlu0 %3099
          %v3101 = vsel %vm3097, %v2605, -inf
          %3102 = vmax.xlane.f32.xlu0 %v3101
          %v3103 = vpop.xlane.xlu0 %3102
          %v3104 = vsel %vm3097, %v2610, -inf
          %3105 = vmax.xlane.f32.xlu0 %v3104
          %v3106 = vpop.xlane.xlu0 %3105
          %v3107 = vsel %vm3097, %v2615, -inf
          %3108 = vmax.xlane.f32.xlu0 %v3107
          %v3109 = vpop.xlane.xlu0 %3108
          %v3110 = vsel %vm3097, %v2620, -inf
          %3111 = vmax.xlane.f32.xlu0 %v3110
          %v3112 = vpop.xlane.xlu0 %3111
          %v3113 = vsel %vm3097, %v2625, -inf
          %3114 = vmax.xlane.f32.xlu0 %v3113
          %v3115 = vpop.xlane.xlu0 %3114
          %v3116 = vsel %vm3097, %v2630, -inf
          %3117 = vmax.xlane.f32.xlu0 %v3116
          %v3118 = vpop.xlane.xlu0 %3117
          %v3119 = vsel %vm3097, %v2635, -inf
          %3120 = vmax.xlane.f32.xlu0 %v3119
          %v3121 = vpop.xlane.xlu0 %3120
          %v3122 = vsel %vm3097, %v2753, -inf
          %3123 = vmax.xlane.f32.xlu0 %v3122
          %v3124 = vpop.xlane.xlu0 %3123
          %v3125 = vsel %vm3097, %v2758, -inf
          %3126 = vmax.xlane.f32.xlu0 %v3125
          %v3127 = vpop.xlane.xlu0 %3126
          %v3128 = vsel %vm3097, %v2763, -inf
          %3129 = vmax.xlane.f32.xlu0 %v3128
          %v3130 = vpop.xlane.xlu0 %3129
          %v3131 = vsel %vm3097, %v2768, -inf
          %3132 = vmax.xlane.f32.xlu0 %v3131
          %v3133 = vpop.xlane.xlu0 %3132
          %v3134 = vsel %vm3097, %v2773, -inf
          %3135 = vmax.xlane.f32.xlu0 %v3134
          %v3136 = vpop.xlane.xlu0 %3135
          %v3137 = vsel %vm3097, %v2778, -inf
          %3138 = vmax.xlane.f32.xlu0 %v3137
          %v3139 = vpop.xlane.xlu0 %3138
          %v3140 = vsel %vm3097, %v2783, -inf
          %3141 = vmax.xlane.f32.xlu0 %v3140
          %v3142 = vpop.xlane.xlu0 %3141
          %v3143 = vsel %vm3097, %v2788, -inf
          %3144 = vmax.xlane.f32.xlu0 %v3143
          %v3145 = vpop.xlane.xlu0 %3144
          %v3146 = vsel %vm3097, %v2906, -inf
          %3147 = vmax.xlane.f32.xlu0 %v3146
          %v3148 = vpop.xlane.xlu0 %3147
          %v3149 = vsel %vm3097, %v2911, -inf
          %3150 = vmax.xlane.f32.xlu0 %v3149
          %v3151 = vpop.xlane.xlu0 %3150
          %v3152 = vsel %vm3097, %v2916, -inf
          %3153 = vmax.xlane.f32.xlu0 %v3152
          %v3154 = vpop.xlane.xlu0 %3153
          %v3155 = vsel %vm3097, %v2921, -inf
          %3156 = vmax.xlane.f32.xlu0 %v3155
          %v3157 = vpop.xlane.xlu0 %3156
          %v3158 = vsel %vm3097, %v2926, -inf
          %3159 = vmax.xlane.f32.xlu0 %v3158
          %v3160 = vpop.xlane.xlu0 %3159
          %v3161 = vsel %vm3097, %v2931, -inf
          %3162 = vmax.xlane.f32.xlu0 %v3161
          %v3163 = vpop.xlane.xlu0 %3162
          %v3164 = vsel %vm3097, %v2936, -inf
          %3165 = vmax.xlane.f32.xlu0 %v3164
          %v3166 = vpop.xlane.xlu0 %3165
          %v3167 = vsel %vm3097, %v2941, -inf
          %3168 = vmax.xlane.f32.xlu0 %v3167
          %v3169 = vpop.xlane.xlu0 %3168
          %v3170 = vsel %vm3097, %v3059, -inf
          %3171 = vmax.xlane.f32.xlu0 %v3170
          %v3172 = vpop.xlane.xlu0 %3171
          %v3173 = vsel %vm3097, %v3064, -inf
          %3174 = vmax.xlane.f32.xlu0 %v3173
          %v3175 = vpop.xlane.xlu0 %3174
          %v3176 = vsel %vm3097, %v3069, -inf
          %3177 = vmax.xlane.f32.xlu0 %v3176
          %v3178 = vpop.xlane.xlu0 %3177
          %v3179 = vsel %vm3097, %v3074, -inf
          %3180 = vmax.xlane.f32.xlu0 %v3179
          %v3181 = vpop.xlane.xlu0 %3180
          %v3182 = vsel %vm3097, %v3079, -inf
          %3183 = vmax.xlane.f32.xlu0 %v3182
          %v3184 = vpop.xlane.xlu0 %3183
          %v3185 = vsel %vm3097, %v3084, -inf
          %3186 = vmax.xlane.f32.xlu0 %v3185
          %v3187 = vpop.xlane.xlu0 %3186
          %v3188 = vsel %vm3097, %v3089, -inf
          %3189 = vmax.xlane.f32.xlu0 %v3188
          %v3190 = vpop.xlane.xlu0 %3189
          %v3191 = vsel %vm3097, %v3094, -inf
          %3192 = vmax.xlane.f32.xlu0 %v3191
          %v3193 = vpop.xlane.xlu0 %3192
          %v3194 = vmax.f32 %v2301, %v3100
          %v3195 = vmax.f32 %v2302, %v3103
          %v3196 = vmax.f32 %v2303, %v3106
          %v3197 = vmax.f32 %v2304, %v3109
          %v3198 = vmax.f32 %v2305, %v3112
          %v3199 = vmax.f32 %v2306, %v3115
          %v3200 = vmax.f32 %v2307, %v3118
          %v3201 = vmax.f32 %v2308, %v3121
          %v3202 = vmax.f32 %v2309, %v3124
          %v3203 = vmax.f32 %v2310, %v3127
          %v3204 = vmax.f32 %v2311, %v3130
          %v3205 = vmax.f32 %v2312, %v3133
          %v3206 = vmax.f32 %v2313, %v3136
          %v3207 = vmax.f32 %v2314, %v3139
          %v3208 = vmax.f32 %v2315, %v3142
          %v3209 = vmax.f32 %v2316, %v3145
          %v3210 = vmax.f32 %v2317, %v3148
          %v3211 = vmax.f32 %v2318, %v3151
          %v3212 = vmax.f32 %v2319, %v3154
          %v3213 = vmax.f32 %v2320, %v3157
          %v3214 = vmax.f32 %v2321, %v3160
          %v3215 = vmax.f32 %v2322, %v3163
          %v3216 = vmax.f32 %v2323, %v3166
          %v3217 = vmax.f32 %v2324, %v3169
          %v3218 = vmax.f32 %v2325, %v3172
          %v3219 = vmax.f32 %v2326, %v3175
          %v3220 = vmax.f32 %v2327, %v3178
          %v3221 = vmax.f32 %v2328, %v3181
          %v3222 = vmax.f32 %v2329, %v3184
          %v3223 = vmax.f32 %v2330, %v3187
          %v3224 = vmax.f32 %v2331, %v3190
          %v3225 = vmax.f32 %v2332, %v3193
          %v3226 = vsub.f32 %v2301, %v3194
          %v3227 = vsub.f32 %v2302, %v3195
          %v3228 = vsub.f32 %v2303, %v3196
          %v3229 = vsub.f32 %v2304, %v3197
          %v3230 = vsub.f32 %v2305, %v3198
          %v3231 = vsub.f32 %v2306, %v3199
          %v3232 = vsub.f32 %v2307, %v3200
          %v3233 = vsub.f32 %v2308, %v3201
          %v3234 = vsub.f32 %v2309, %v3202
          %v3235 = vsub.f32 %v2310, %v3203
          %v3236 = vsub.f32 %v2311, %v3204
          %v3237 = vsub.f32 %v2312, %v3205
          %v3238 = vsub.f32 %v2313, %v3206
          %v3239 = vsub.f32 %v2314, %v3207
          %v3240 = vsub.f32 %v2315, %v3208
          %v3241 = vsub.f32 %v2316, %v3209
          %v3242 = vsub.f32 %v2317, %v3210
          %v3243 = vsub.f32 %v2318, %v3211
          %v3244 = vsub.f32 %v2319, %v3212
          %v3245 = vsub.f32 %v2320, %v3213
          %v3246 = vsub.f32 %v2321, %v3214
          %v3247 = vsub.f32 %v2322, %v3215
          %v3248 = vsub.f32 %v2323, %v3216
          %v3249 = vsub.f32 %v2324, %v3217
          %v3250 = vsub.f32 %v2325, %v3218
          %v3251 = vsub.f32 %v2326, %v3219
          %v3252 = vsub.f32 %v2327, %v3220
          %v3253 = vsub.f32 %v2328, %v3221
          %v3254 = vsub.f32 %v2329, %v3222
          %v3255 = vsub.f32 %v2330, %v3223
          %v3256 = vsub.f32 %v2331, %v3224
          %v3257 = vsub.f32 %v2332, %v3225
          %v3258 = vmul.f32 %v3226, 1.442695
          %v3259 = vpow.pop %v3258
          %v3260 = vmul.f32 %v3227, 1.442695
          %v3261 = vpow.pop %v3260
          %v3262 = vmul.f32 %v3228, 1.442695
          %v3263 = vpow.pop %v3262
          %v3264 = vmul.f32 %v3229, 1.442695
          %v3265 = vpow.pop %v3264
          %v3266 = vmul.f32 %v3230, 1.442695
          %v3267 = vpow.pop %v3266
          %v3268 = vmul.f32 %v3231, 1.442695
          %v3269 = vpow.pop %v3268
          %v3270 = vmul.f32 %v3232, 1.442695
          %v3271 = vpow.pop %v3270
          %v3272 = vmul.f32 %v3233, 1.442695
          %v3273 = vpow.pop %v3272
          %v3274 = vmul.f32 %v3234, 1.442695
          %v3275 = vpow.pop %v3274
          %v3276 = vmul.f32 %v3235, 1.442695
          %v3277 = vpow.pop %v3276
          %v3278 = vmul.f32 %v3236, 1.442695
          %v3279 = vpow.pop %v3278
          %v3280 = vmul.f32 %v3237, 1.442695
          %v3281 = vpow.pop %v3280
          %v3282 = vmul.f32 %v3238, 1.442695
          %v3283 = vpow.pop %v3282
          %v3284 = vmul.f32 %v3239, 1.442695
          %v3285 = vpow.pop %v3284
          %v3286 = vmul.f32 %v3240, 1.442695
          %v3287 = vpow.pop %v3286
          %v3288 = vmul.f32 %v3241, 1.442695
          %v3289 = vpow.pop %v3288
          %v3290 = vmul.f32 %v3242, 1.442695
          %v3291 = vpow.pop %v3290
          %v3292 = vmul.f32 %v3243, 1.442695
          %v3293 = vpow.pop %v3292
          %v3294 = vmul.f32 %v3244, 1.442695
          %v3295 = vpow.pop %v3294
          %v3296 = vmul.f32 %v3245, 1.442695
          %v3297 = vpow.pop %v3296
          %v3298 = vmul.f32 %v3246, 1.442695
          %v3299 = vpow.pop %v3298
          %v3300 = vmul.f32 %v3247, 1.442695
          %v3301 = vpow.pop %v3300
          %v3302 = vmul.f32 %v3248, 1.442695
          %v3303 = vpow.pop %v3302
          %v3304 = vmul.f32 %v3249, 1.442695
          %v3305 = vpow.pop %v3304
          %v3306 = vmul.f32 %v3250, 1.442695
          %v3307 = vpow.pop %v3306
          %v3308 = vmul.f32 %v3251, 1.442695
          %v3309 = vpow.pop %v3308
          %v3310 = vmul.f32 %v3252, 1.442695
          %v3311 = vpow.pop %v3310
          %v3312 = vmul.f32 %v3253, 1.442695
          %v3313 = vpow.pop %v3312
          %v3314 = vmul.f32 %v3254, 1.442695
          %v3315 = vpow.pop %v3314
          %v3316 = vmul.f32 %v3255, 1.442695
          %v3317 = vpow.pop %v3316
          %v3318 = vmul.f32 %v3256, 1.442695
          %v3319 = vpow.pop %v3318
          %v3320 = vmul.f32 %v3257, 1.442695
          %v3321 = vpow.pop %v3320
          %v3322 = vsub.f32 %v2600, %v3194
          %v3323 = vsub.f32 %v2605, %v3195
          %v3324 = vsub.f32 %v2610, %v3196
          %v3325 = vsub.f32 %v2615, %v3197
          %v3326 = vsub.f32 %v2620, %v3198
          %v3327 = vsub.f32 %v2625, %v3199
          %v3328 = vsub.f32 %v2630, %v3200
          %v3329 = vsub.f32 %v2635, %v3201
          %v3330 = vsub.f32 %v2753, %v3202
          %v3331 = vsub.f32 %v2758, %v3203
          %v3332 = vsub.f32 %v2763, %v3204
          %v3333 = vsub.f32 %v2768, %v3205
          %v3334 = vsub.f32 %v2773, %v3206
          %v3335 = vsub.f32 %v2778, %v3207
          %v3336 = vsub.f32 %v2783, %v3208
          %v3337 = vsub.f32 %v2788, %v3209
          %v3338 = vsub.f32 %v2906, %v3210
          %v3339 = vsub.f32 %v2911, %v3211
          %v3340 = vsub.f32 %v2916, %v3212
          %v3341 = vsub.f32 %v2921, %v3213
          %v3342 = vsub.f32 %v2926, %v3214
          %v3343 = vsub.f32 %v2931, %v3215
          %v3344 = vsub.f32 %v2936, %v3216
          %v3345 = vsub.f32 %v2941, %v3217
          %v3346 = vsub.f32 %v3059, %v3218
          %v3347 = vsub.f32 %v3064, %v3219
          %v3348 = vsub.f32 %v3069, %v3220
          %v3349 = vsub.f32 %v3074, %v3221
          %v3350 = vsub.f32 %v3079, %v3222
          %v3351 = vsub.f32 %v3084, %v3223
          %v3352 = vsub.f32 %v3089, %v3224
          %v3353 = vsub.f32 %v3094, %v3225
          %v3354 = vmul.f32 %v3322, 1.442695
          %v3355 = vpow.pop %v3354
          %v3356 = vmul.f32 %v3323, 1.442695
          %v3357 = vpow.pop %v3356
          %v3358 = vmul.f32 %v3324, 1.442695
          %v3359 = vpow.pop %v3358
          %v3360 = vmul.f32 %v3325, 1.442695
          %v3361 = vpow.pop %v3360
          %v3362 = vmul.f32 %v3326, 1.442695
          %v3363 = vpow.pop %v3362
          %v3364 = vmul.f32 %v3327, 1.442695
          %v3365 = vpow.pop %v3364
          %v3366 = vmul.f32 %v3328, 1.442695
          %v3367 = vpow.pop %v3366
          %v3368 = vmul.f32 %v3329, 1.442695
          %v3369 = vpow.pop %v3368
          %v3370 = vmul.f32 %v3330, 1.442695
          %v3371 = vpow.pop %v3370
          %v3372 = vmul.f32 %v3331, 1.442695
          %v3373 = vpow.pop %v3372
          %v3374 = vmul.f32 %v3332, 1.442695
          %v3375 = vpow.pop %v3374
          %v3376 = vmul.f32 %v3333, 1.442695
          %v3377 = vpow.pop %v3376
          %v3378 = vmul.f32 %v3334, 1.442695
          %v3379 = vpow.pop %v3378
          %v3380 = vmul.f32 %v3335, 1.442695
          %v3381 = vpow.pop %v3380
          %v3382 = vmul.f32 %v3336, 1.442695
          %v3383 = vpow.pop %v3382
          %v3384 = vmul.f32 %v3337, 1.442695
          %v3385 = vpow.pop %v3384
          %v3386 = vmul.f32 %v3338, 1.442695
          %v3387 = vpow.pop %v3386
          %v3388 = vmul.f32 %v3339, 1.442695
          %v3389 = vpow.pop %v3388
          %v3390 = vmul.f32 %v3340, 1.442695
          %v3391 = vpow.pop %v3390
          %v3392 = vmul.f32 %v3341, 1.442695
          %v3393 = vpow.pop %v3392
          %v3394 = vmul.f32 %v3342, 1.442695
          %v3395 = vpow.pop %v3394
          %v3396 = vmul.f32 %v3343, 1.442695
          %v3397 = vpow.pop %v3396
          %v3398 = vmul.f32 %v3344, 1.442695
          %v3399 = vpow.pop %v3398
          %v3400 = vmul.f32 %v3345, 1.442695
          %v3401 = vpow.pop %v3400
          %v3402 = vmul.f32 %v3346, 1.442695
          %v3403 = vpow.pop %v3402
          %v3404 = vmul.f32 %v3347, 1.442695
          %v3405 = vpow.pop %v3404
          %v3406 = vmul.f32 %v3348, 1.442695
          %v3407 = vpow.pop %v3406
          %v3408 = vmul.f32 %v3349, 1.442695
          %v3409 = vpow.pop %v3408
          %v3410 = vmul.f32 %v3350, 1.442695
          %v3411 = vpow.pop %v3410
          %v3412 = vmul.f32 %v3351, 1.442695
          %v3413 = vpow.pop %v3412
          %v3414 = vmul.f32 %v3352, 1.442695
          %v3415 = vpow.pop %v3414
          %v3416 = vmul.f32 %v3353, 1.442695
          %v3417 = vpow.pop %v3416
          %v3418 = vmul.f32 %v3259, %v2333
          %v3419 = vmul.f32 %v3261, %v2334
          %v3420 = vmul.f32 %v3263, %v2335
          %v3421 = vmul.f32 %v3265, %v2336
          %v3422 = vmul.f32 %v3267, %v2337
          %v3423 = vmul.f32 %v3269, %v2338
          %v3424 = vmul.f32 %v3271, %v2339
          %v3425 = vmul.f32 %v3273, %v2340
          %v3426 = vmul.f32 %v3275, %v2341
          %v3427 = vmul.f32 %v3277, %v2342
          %v3428 = vmul.f32 %v3279, %v2343
          %v3429 = vmul.f32 %v3281, %v2344
          %v3430 = vmul.f32 %v3283, %v2345
          %v3431 = vmul.f32 %v3285, %v2346
          %v3432 = vmul.f32 %v3287, %v2347
          %v3433 = vmul.f32 %v3289, %v2348
          %v3434 = vmul.f32 %v3291, %v2349
          %v3435 = vmul.f32 %v3293, %v2350
          %v3436 = vmul.f32 %v3295, %v2351
          %v3437 = vmul.f32 %v3297, %v2352
          %v3438 = vmul.f32 %v3299, %v2353
          %v3439 = vmul.f32 %v3301, %v2354
          %v3440 = vmul.f32 %v3303, %v2355
          %v3441 = vmul.f32 %v3305, %v2356
          %v3442 = vmul.f32 %v3307, %v2357
          %v3443 = vmul.f32 %v3309, %v2358
          %v3444 = vmul.f32 %v3311, %v2359
          %v3445 = vmul.f32 %v3313, %v2360
          %v3446 = vmul.f32 %v3315, %v2361
          %v3447 = vmul.f32 %v3317, %v2362
          %v3448 = vmul.f32 %v3319, %v2363
          %v3449 = vmul.f32 %v3321, %v2364
          %v3450 = vsel %vm3097, %v3355, 0.0
          %3451 = vadd.xlane.f32.xlu0 %v3450
          %v3452 = vpop.xlane.xlu0 %3451
          %v3453 = vsel %vm3097, %v3357, 0.0
          %3454 = vadd.xlane.f32.xlu0 %v3453
          %v3455 = vpop.xlane.xlu0 %3454
          %v3456 = vsel %vm3097, %v3359, 0.0
          %3457 = vadd.xlane.f32.xlu0 %v3456
          %v3458 = vpop.xlane.xlu0 %3457
          %v3459 = vsel %vm3097, %v3361, 0.0
          %3460 = vadd.xlane.f32.xlu0 %v3459
          %v3461 = vpop.xlane.xlu0 %3460
          %v3462 = vsel %vm3097, %v3363, 0.0
          %3463 = vadd.xlane.f32.xlu0 %v3462
          %v3464 = vpop.xlane.xlu0 %3463
          %v3465 = vsel %vm3097, %v3365, 0.0
          %3466 = vadd.xlane.f32.xlu0 %v3465
          %v3467 = vpop.xlane.xlu0 %3466
          %v3468 = vsel %vm3097, %v3367, 0.0
          %3469 = vadd.xlane.f32.xlu0 %v3468
          %v3470 = vpop.xlane.xlu0 %3469
          %v3471 = vsel %vm3097, %v3369, 0.0
          %3472 = vadd.xlane.f32.xlu0 %v3471
          %v3473 = vpop.xlane.xlu0 %3472
          %v3474 = vsel %vm3097, %v3371, 0.0
          %3475 = vadd.xlane.f32.xlu0 %v3474
          %v3476 = vpop.xlane.xlu0 %3475
          %v3477 = vsel %vm3097, %v3373, 0.0
          %3478 = vadd.xlane.f32.xlu0 %v3477
          %v3479 = vpop.xlane.xlu0 %3478
          %v3480 = vsel %vm3097, %v3375, 0.0
          %3481 = vadd.xlane.f32.xlu0 %v3480
          %v3482 = vpop.xlane.xlu0 %3481
          %v3483 = vsel %vm3097, %v3377, 0.0
          %3484 = vadd.xlane.f32.xlu0 %v3483
          %v3485 = vpop.xlane.xlu0 %3484
          %v3486 = vsel %vm3097, %v3379, 0.0
          %3487 = vadd.xlane.f32.xlu0 %v3486
          %v3488 = vpop.xlane.xlu0 %3487
          %v3489 = vsel %vm3097, %v3381, 0.0
          %3490 = vadd.xlane.f32.xlu0 %v3489
          %v3491 = vpop.xlane.xlu0 %3490
          %v3492 = vsel %vm3097, %v3383, 0.0
          %3493 = vadd.xlane.f32.xlu0 %v3492
          %v3494 = vpop.xlane.xlu0 %3493
          %v3495 = vsel %vm3097, %v3385, 0.0
          %3496 = vadd.xlane.f32.xlu0 %v3495
          %v3497 = vpop.xlane.xlu0 %3496
          %v3498 = vsel %vm3097, %v3387, 0.0
          %3499 = vadd.xlane.f32.xlu0 %v3498
          %v3500 = vpop.xlane.xlu0 %3499
          %v3501 = vsel %vm3097, %v3389, 0.0
          %3502 = vadd.xlane.f32.xlu0 %v3501
          %v3503 = vpop.xlane.xlu0 %3502
          %v3504 = vsel %vm3097, %v3391, 0.0
          %3505 = vadd.xlane.f32.xlu0 %v3504
          %v3506 = vpop.xlane.xlu0 %3505
          %v3507 = vsel %vm3097, %v3393, 0.0
          %3508 = vadd.xlane.f32.xlu0 %v3507
          %v3509 = vpop.xlane.xlu0 %3508
          %v3510 = vsel %vm3097, %v3395, 0.0
          %3511 = vadd.xlane.f32.xlu0 %v3510
          %v3512 = vpop.xlane.xlu0 %3511
          %v3513 = vsel %vm3097, %v3397, 0.0
          %3514 = vadd.xlane.f32.xlu0 %v3513
          %v3515 = vpop.xlane.xlu0 %3514
          %v3516 = vsel %vm3097, %v3399, 0.0
          %3517 = vadd.xlane.f32.xlu0 %v3516
          %v3518 = vpop.xlane.xlu0 %3517
          %v3519 = vsel %vm3097, %v3401, 0.0
          %3520 = vadd.xlane.f32.xlu0 %v3519
          %v3521 = vpop.xlane.xlu0 %3520
          %v3522 = vsel %vm3097, %v3403, 0.0
          %3523 = vadd.xlane.f32.xlu0 %v3522
          %v3524 = vpop.xlane.xlu0 %3523
          %v3525 = vsel %vm3097, %v3405, 0.0
          %3526 = vadd.xlane.f32.xlu0 %v3525
          %v3527 = vpop.xlane.xlu0 %3526
          %v3528 = vsel %vm3097, %v3407, 0.0
          %3529 = vadd.xlane.f32.xlu0 %v3528
          %v3530 = vpop.xlane.xlu0 %3529
          %v3531 = vsel %vm3097, %v3409, 0.0
          %3532 = vadd.xlane.f32.xlu0 %v3531
          %v3533 = vpop.xlane.xlu0 %3532
          %v3534 = vsel %vm3097, %v3411, 0.0
          %3535 = vadd.xlane.f32.xlu0 %v3534
          %v3536 = vpop.xlane.xlu0 %3535
          %v3537 = vsel %vm3097, %v3413, 0.0
          %3538 = vadd.xlane.f32.xlu0 %v3537
          %v3539 = vpop.xlane.xlu0 %3538
          %v3540 = vsel %vm3097, %v3415, 0.0
          %3541 = vadd.xlane.f32.xlu0 %v3540
          %v3542 = vpop.xlane.xlu0 %3541
          %v3543 = vsel %vm3097, %v3417, 0.0
          %3544 = vadd.xlane.f32.xlu0 %v3543
          %v3545 = vpop.xlane.xlu0 %3544
          %v3546 = vadd.f32 %v3418, %v3452
          %v3547 = vadd.f32 %v3419, %v3455
          %v3548 = vadd.f32 %v3420, %v3458
          %v3549 = vadd.f32 %v3421, %v3461
          %v3550 = vadd.f32 %v3422, %v3464
          %v3551 = vadd.f32 %v3423, %v3467
          %v3552 = vadd.f32 %v3424, %v3470
          %v3553 = vadd.f32 %v3425, %v3473
          %v3554 = vadd.f32 %v3426, %v3476
          %v3555 = vadd.f32 %v3427, %v3479
          %v3556 = vadd.f32 %v3428, %v3482
          %v3557 = vadd.f32 %v3429, %v3485
          %v3558 = vadd.f32 %v3430, %v3488
          %v3559 = vadd.f32 %v3431, %v3491
          %v3560 = vadd.f32 %v3432, %v3494
          %v3561 = vadd.f32 %v3433, %v3497
          %v3562 = vadd.f32 %v3434, %v3500
          %v3563 = vadd.f32 %v3435, %v3503
          %v3564 = vadd.f32 %v3436, %v3506
          %v3565 = vadd.f32 %v3437, %v3509
          %v3566 = vadd.f32 %v3438, %v3512
          %v3567 = vadd.f32 %v3439, %v3515
          %v3568 = vadd.f32 %v3440, %v3518
          %v3569 = vadd.f32 %v3441, %v3521
          %v3570 = vadd.f32 %v3442, %v3524
          %v3571 = vadd.f32 %v3443, %v3527
          %v3572 = vadd.f32 %v3444, %v3530
          %v3573 = vadd.f32 %v3445, %v3533
          %v3574 = vadd.f32 %v3446, %v3536
          %v3575 = vadd.f32 %v3447, %v3539
          %v3576 = vadd.f32 %v3448, %v3542
          %v3577 = vadd.f32 %v3449, %v3545
          %v3578 = vmul.f32 %v3259, %v2365
          %v3579 = vmul.f32 %v3261, %v2366
          %v3580 = vmul.f32 %v3263, %v2367
          %v3581 = vmul.f32 %v3265, %v2368
          %v3582 = vmul.f32 %v3267, %v2369
          %v3583 = vmul.f32 %v3269, %v2370
          %v3584 = vmul.f32 %v3271, %v2371
          %v3585 = vmul.f32 %v3273, %v2372
          %v3586 = vmul.f32 %v3275, %v2373
          %v3587 = vmul.f32 %v3277, %v2374
          %v3588 = vmul.f32 %v3279, %v2375
          %v3589 = vmul.f32 %v3281, %v2376
          %v3590 = vmul.f32 %v3283, %v2377
          %v3591 = vmul.f32 %v3285, %v2378
          %v3592 = vmul.f32 %v3287, %v2379
          %v3593 = vmul.f32 %v3289, %v2380
          %v3594 = vmul.f32 %v3291, %v2381
          %v3595 = vmul.f32 %v3293, %v2382
          %v3596 = vmul.f32 %v3295, %v2383
          %v3597 = vmul.f32 %v3297, %v2384
          %v3598 = vmul.f32 %v3299, %v2385
          %v3599 = vmul.f32 %v3301, %v2386
          %v3600 = vmul.f32 %v3303, %v2387
          %v3601 = vmul.f32 %v3305, %v2388
          %v3602 = vmul.f32 %v3307, %v2389
          %v3603 = vmul.f32 %v3309, %v2390
          %v3604 = vmul.f32 %v3311, %v2391
          %v3605 = vmul.f32 %v3313, %v2392
          %v3606 = vmul.f32 %v3315, %v2393
          %v3607 = vmul.f32 %v3317, %v2394
          %v3608 = vmul.f32 %v3319, %v2395
          %v3609 = vmul.f32 %v3321, %v2396
          %v3611 = vsel %vm3097, %v3355, 0
          %v3614 = vsel %vm3097, %v3357, 0
          %v3617 = vsel %vm3097, %v3359, 0
          %v3620 = vsel %vm3097, %v3361, 0
          %v3623 = vsel %vm3097, %v3363, 0
          %v3626 = vsel %vm3097, %v3365, 0
          %v3629 = vsel %vm3097, %v3367, 0
          %v3632 = vsel %vm3097, %v3369, 0
          %3634 = vmatprep.subr.mxu0 0.0
          %3635 = vmatpush1.msra.mxu0 %v2432
          %3636 = vmatprep.subr.mxu0 0.0
          %3637 = vmatpush1.msra.mxu0 %v2433
          %3638 = vmatprep.subr.mxu0 0.0
          %3639 = vmatpush1.msra.mxu0 %v2434
          %3640 = vmatprep.subr.mxu0 0.0
          %3641 = vmatpush1.msra.mxu0 %v2435
          %3642 = vmatprep.subr.mxu0 0.0
          %3643 = vmatpush1.msra.mxu0 %v2436
          %3644 = vmatprep.subr.mxu0 0.0
          %3645 = vmatpush1.msra.mxu0 %v2437
          %3646 = vmatprep.subr.mxu0 0.0
          %3647 = vmatpush1.msra.mxu0 %v2438
          %3648 = vmatprep.subr.mxu0 0.0
          %3649 = vmatpush1.msra.mxu0 %v2439
          %3650 = vmatprep.subr.mxu0 0.0
          %3651 = vmatpush1.msra.mxu0 0.0
          %3652 = vmatprep.subr.mxu0 0.0
          %3653 = vmatpush1.msra.mxu0 0.0
          %3654 = vmatprep.subr.mxu0 0.0
          %3655 = vmatpush1.msra.mxu0 0.0
          %3656 = vmatprep.subr.mxu0 0.0
          %3657 = vmatpush1.msra.mxu0 0.0
          %3658 = vmatprep.subr.mxu0 0.0
          %3659 = vmatpush1.msra.mxu0 0.0
          %3660 = vmatprep.subr.mxu0 0.0
          %3661 = vmatpush1.msra.mxu0 0.0
          %3662 = vmatprep.subr.mxu0 0.0
          %3663 = vmatpush1.msra.mxu0 0.0
          %3664 = vmatprep.subr.mxu0 0.0
          %3665 = vmatpush1.msra.mxu0 0.0
          %3666 = vmatprep.subr.mxu0 0.0
          %3667 = vmatpush1.msra.mxu0 0.0
          %3668 = vmatprep.subr.mxu0 0.0
          %3669 = vmatpush1.msra.mxu0 0.0
          %3670 = vmatprep.subr.mxu0 0.0
          %3671 = vmatpush1.msra.mxu0 0.0
          %3672 = vmatprep.subr.mxu0 0.0
          %3673 = vmatpush1.msra.mxu0 0.0
          %3674 = vmatprep.subr.mxu0 0.0
          %3675 = vmatpush1.msra.mxu0 0.0
          %3676 = vmatprep.subr.mxu0 0.0
          %3677 = vmatpush1.msra.mxu0 0.0
          %3678 = vmatprep.subr.mxu0 0.0
          %3679 = vmatpush1.msra.mxu0 0.0
          %3680 = vmatprep.subr.mxu0 0.0
          %3681 = vmatpush1.msra.mxu0 0.0
          %3682 = vmatprep.subr.mxu0 0.0
          %3683 = vmatpush1.msra.mxu0 0.0
          %3684 = vmatprep.subr.mxu0 0.0
          %3685 = vmatpush1.msra.mxu0 0.0
          %3686 = vmatprep.subr.mxu0 0.0
          %3687 = vmatpush1.msra.mxu0 0.0
          %3688 = vmatprep.subr.mxu0 0.0
          %3689 = vmatpush1.msra.mxu0 0.0
          %3690 = vmatprep.subr.mxu0 0.0
          %3691 = vmatpush1.msra.mxu0 0.0
          %3692 = vmatprep.subr.mxu0 0.0
          %3693 = vmatpush1.msra.mxu0 0.0
          %3694 = vmatprep.subr.mxu0 0.0
          %3695 = vmatpush1.msra.mxu0 0.0
          %3696 = vmatprep.subr.mxu0 0.0
          %3697 = vmatpush1.msra.mxu0 0.0
          %3698 = vmatprep.mubr.f32.mxu0 0.0
          %3699 = vmatmul.mubr.f32.gmra.mrb[0].mxu0 %v3611
          %v3700 = vpop.f32.mrb[0].mxu0
          %v3701 = vadd.f32 0.0, %v3700
          %v3702 = vpop.f32.mrb[0].mxu0
          %3703 = vmatprep.mubr.f32.mxu0 0.0
          %3704 = vmatmul.mubr.f32.gmra.mrb[0].mxu0 %v3614
          %v3705 = vpop.f32.mrb[0].mxu0
          %v3706 = vadd.f32 0.0, %v3705
          %v3707 = vpop.f32.mrb[0].mxu0
          %3708 = vmatprep.mubr.f32.mxu0 0.0
          %3709 = vmatmul.mubr.f32.gmra.mrb[0].mxu0 %v3617
          %v3710 = vpop.f32.mrb[0].mxu0
          %v3711 = vadd.f32 0.0, %v3710
          %v3712 = vpop.f32.mrb[0].mxu0
          %3713 = vmatprep.mubr.f32.mxu0 0.0
          %3714 = vmatmul.mubr.f32.gmra.mrb[0].mxu0 %v3620
          %v3715 = vpop.f32.mrb[0].mxu0
          %v3716 = vadd.f32 0.0, %v3715
          %v3717 = vpop.f32.mrb[0].mxu0
          %3718 = vmatprep.mubr.f32.mxu0 0.0
          %3719 = vmatmul.mubr.f32.gmra.mrb[0].mxu0 %v3623
          %v3720 = vpop.f32.mrb[0].mxu0
          %v3721 = vadd.f32 0.0, %v3720
          %v3722 = vpop.f32.mrb[0].mxu0
          %3723 = vmatprep.mubr.f32.mxu0 0.0
          %3724 = vmatmul.mubr.f32.gmra.mrb[0].mxu0 %v3626
          %v3725 = vpop.f32.mrb[0].mxu0
          %v3726 = vadd.f32 0.0, %v3725
          %v3727 = vpop.f32.mrb[0].mxu0
          %3728 = vmatprep.mubr.f32.mxu0 0.0
          %3729 = vmatmul.mubr.f32.gmra.mrb[0].mxu0 %v3629
          %v3730 = vpop.f32.mrb[0].mxu0
          %v3731 = vadd.f32 0.0, %v3730
          %v3732 = vpop.f32.mrb[0].mxu0
          %3733 = vmatprep.mubr.f32.mxu0 0.0
          %3734 = vmatmul.mubr.f32.gmra.mrb[0].mxu0 %v3632
          %v3735 = vpop.f32.mrb[0].mxu0
          %v3736 = vadd.f32 0.0, %v3735
          %v3737 = vpop.f32.mrb[0].mxu0
          %3738 = vdwg.mxu0
          %v3740 = vsel %vm3097, %v3371, 0
          %v3743 = vsel %vm3097, %v3373, 0
          %v3746 = vsel %vm3097, %v3375, 0
          %v3749 = vsel %vm3097, %v3377, 0
          %v3752 = vsel %vm3097, %v3379, 0
          %v3755 = vsel %vm3097, %v3381, 0
          %v3758 = vsel %vm3097, %v3383, 0
          %v3761 = vsel %vm3097, %v3385, 0
          %3763 = vmatprep.subr.mxu0 0.0
          %3764 = vmatpush1.msra.mxu0 %v2440
          %3765 = vmatprep.subr.mxu0 0.0
          %3766 = vmatpush1.msra.mxu0 %v2441
          %3767 = vmatprep.subr.mxu0 0.0
          %3768 = vmatpush1.msra.mxu0 %v2442
          %3769 = vmatprep.subr.mxu0 0.0
          %3770 = vmatpush1.msra.mxu0 %v2443
          %3771 = vmatprep.subr.mxu0 0.0
          %3772 = vmatpush1.msra.mxu0 %v2444
          %3773 = vmatprep.subr.mxu0 0.0
          %3774 = vmatpush1.msra.mxu0 %v2445
          %3775 = vmatprep.subr.mxu0 0.0
          %3776 = vmatpush1.msra.mxu0 %v2446
          %3777 = vmatprep.subr.mxu0 0.0
          %3778 = vmatpush1.msra.mxu0 %v2447
          %3779 = vmatprep.subr.mxu0 0.0
          %3780 = vmatpush1.msra.mxu0 0.0
          %3781 = vmatprep.subr.mxu0 0.0
          %3782 = vmatpush1.msra.mxu0 0.0
          %3783 = vmatprep.subr.mxu0 0.0
          %3784 = vmatpush1.msra.mxu0 0.0
          %3785 = vmatprep.subr.mxu0 0.0
          %3786 = vmatpush1.msra.mxu0 0.0
          %3787 = vmatprep.subr.mxu0 0.0
          %3788 = vmatpush1.msra.mxu0 0.0
          %3789 = vmatprep.subr.mxu0 0.0
          %3790 = vmatpush1.msra.mxu0 0.0
          %3791 = vmatprep.subr.mxu0 0.0
          %3792 = vmatpush1.msra.mxu0 0.0
          %3793 = vmatprep.subr.mxu0 0.0
          %3794 = vmatpush1.msra.mxu0 0.0
          %3795 = vmatprep.subr.mxu0 0.0
          %3796 = vmatpush1.msra.mxu0 0.0
          %3797 = vmatprep.subr.mxu0 0.0
          %3798 = vmatpush1.msra.mxu0 0.0
          %3799 = vmatprep.subr.mxu0 0.0
          %3800 = vmatpush1.msra.mxu0 0.0
          %3801 = vmatprep.subr.mxu0 0.0
          %3802 = vmatpush1.msra.mxu0 0.0
          %3803 = vmatprep.subr.mxu0 0.0
          %3804 = vmatpush1.msra.mxu0 0.0
          %3805 = vmatprep.subr.mxu0 0.0
          %3806 = vmatpush1.msra.mxu0 0.0
          %3807 = vmatprep.subr.mxu0 0.0
          %3808 = vmatpush1.msra.mxu0 0.0
          %3809 = vmatprep.subr.mxu0 0.0
          %3810 = vmatpush1.msra.mxu0 0.0
          %3811 = vmatprep.subr.mxu0 0.0
          %3812 = vmatpush1.msra.mxu0 0.0
          %3813 = vmatprep.subr.mxu0 0.0
          %3814 = vmatpush1.msra.mxu0 0.0
          %3815 = vmatprep.subr.mxu0 0.0
          %3816 = vmatpush1.msra.mxu0 0.0
          %3817 = vmatprep.subr.mxu0 0.0
          %3818 = vmatpush1.msra.mxu0 0.0
          %3819 = vmatprep.subr.mxu0 0.0
          %3820 = vmatpush1.msra.mxu0 0.0
          %3821 = vmatprep.subr.mxu0 0.0
          %3822 = vmatpush1.msra.mxu0 0.0
          %3823 = vmatprep.subr.mxu0 0.0
          %3824 = vmatpush1.msra.mxu0 0.0
          %3825 = vmatprep.subr.mxu0 0.0
          %3826 = vmatpush1.msra.mxu0 0.0
          %3827 = vmatprep.mubr.f32.mxu0 0.0
          %3828 = vmatmul.mubr.f32.gmra.mrb[0].mxu0 %v3740
          %v3829 = vpop.f32.mrb[0].mxu0
          %v3830 = vadd.f32 0.0, %v3829
          %v3831 = vpop.f32.mrb[0].mxu0
          %3832 = vmatprep.mubr.f32.mxu0 0.0
          %3833 = vmatmul.mubr.f32.gmra.mrb[0].mxu0 %v3743
          %v3834 = vpop.f32.mrb[0].mxu0
          %v3835 = vadd.f32 0.0, %v3834
          %v3836 = vpop.f32.mrb[0].mxu0
          %3837 = vmatprep.mubr.f32.mxu0 0.0
          %3838 = vmatmul.mubr.f32.gmra.mrb[0].mxu0 %v3746
          %v3839 = vpop.f32.mrb[0].mxu0
          %v3840 = vadd.f32 0.0, %v3839
          %v3841 = vpop.f32.mrb[0].mxu0
          %3842 = vmatprep.mubr.f32.mxu0 0.0
          %3843 = vmatmul.mubr.f32.gmra.mrb[0].mxu0 %v3749
          %v3844 = vpop.f32.mrb[0].mxu0
          %v3845 = vadd.f32 0.0, %v3844
          %v3846 = vpop.f32.mrb[0].mxu0
          %3847 = vmatprep.mubr.f32.mxu0 0.0
          %3848 = vmatmul.mubr.f32.gmra.mrb[0].mxu0 %v3752
          %v3849 = vpop.f32.mrb[0].mxu0
          %v3850 = vadd.f32 0.0, %v3849
          %v3851 = vpop.f32.mrb[0].mxu0
          %3852 = vmatprep.mubr.f32.mxu0 0.0
          %3853 = vmatmul.mubr.f32.gmra.mrb[0].mxu0 %v3755
          %v3854 = vpop.f32.mrb[0].mxu0
          %v3855 = vadd.f32 0.0, %v3854
          %v3856 = vpop.f32.mrb[0].mxu0
          %3857 = vmatprep.mubr.f32.mxu0 0.0
          %3858 = vmatmul.mubr.f32.gmra.mrb[0].mxu0 %v3758
          %v3859 = vpop.f32.mrb[0].mxu0
          %v3860 = vadd.f32 0.0, %v3859
          %v3861 = vpop.f32.mrb[0].mxu0
          %3862 = vmatprep.mubr.f32.mxu0 0.0
          %3863 = vmatmul.mubr.f32.gmra.mrb[0].mxu0 %v3761
          %v3864 = vpop.f32.mrb[0].mxu0
          %v3865 = vadd.f32 0.0, %v3864
          %v3866 = vpop.f32.mrb[0].mxu0
          %3867 = vdwg.mxu0
          %v3869 = vsel %vm3097, %v3387, 0
          %v3872 = vsel %vm3097, %v3389, 0
          %v3875 = vsel %vm3097, %v3391, 0
          %v3878 = vsel %vm3097, %v3393, 0
          %v3881 = vsel %vm3097, %v3395, 0
          %v3884 = vsel %vm3097, %v3397, 0
          %v3887 = vsel %vm3097, %v3399, 0
          %v3890 = vsel %vm3097, %v3401, 0
          %3892 = vmatprep.subr.mxu0 0.0
          %3893 = vmatpush1.msra.mxu0 %v2448
          %3894 = vmatprep.subr.mxu0 0.0
          %3895 = vmatpush1.msra.mxu0 %v2449
          %3896 = vmatprep.subr.mxu0 0.0
          %3897 = vmatpush1.msra.mxu0 %v2450
          %3898 = vmatprep.subr.mxu0 0.0
          %3899 = vmatpush1.msra.mxu0 %v2451
          %3900 = vmatprep.subr.mxu0 0.0
          %3901 = vmatpush1.msra.mxu0 %v2452
          %3902 = vmatprep.subr.mxu0 0.0
          %3903 = vmatpush1.msra.mxu0 %v2453
          %3904 = vmatprep.subr.mxu0 0.0
          %3905 = vmatpush1.msra.mxu0 %v2454
          %3906 = vmatprep.subr.mxu0 0.0
          %3907 = vmatpush1.msra.mxu0 %v2455
          %3908 = vmatprep.subr.mxu0 0.0
          %3909 = vmatpush1.msra.mxu0 0.0
          %3910 = vmatprep.subr.mxu0 0.0
          %3911 = vmatpush1.msra.mxu0 0.0
          %3912 = vmatprep.subr.mxu0 0.0
          %3913 = vmatpush1.msra.mxu0 0.0
          %3914 = vmatprep.subr.mxu0 0.0
          %3915 = vmatpush1.msra.mxu0 0.0
          %3916 = vmatprep.subr.mxu0 0.0
          %3917 = vmatpush1.msra.mxu0 0.0
          %3918 = vmatprep.subr.mxu0 0.0
          %3919 = vmatpush1.msra.mxu0 0.0
          %3920 = vmatprep.subr.mxu0 0.0
          %3921 = vmatpush1.msra.mxu0 0.0
          %3922 = vmatprep.subr.mxu0 0.0
          %3923 = vmatpush1.msra.mxu0 0.0
          %3924 = vmatprep.subr.mxu0 0.0
          %3925 = vmatpush1.msra.mxu0 0.0
          %3926 = vmatprep.subr.mxu0 0.0
          %3927 = vmatpush1.msra.mxu0 0.0
          %3928 = vmatprep.subr.mxu0 0.0
          %3929 = vmatpush1.msra.mxu0 0.0
          %3930 = vmatprep.subr.mxu0 0.0
          %3931 = vmatpush1.msra.mxu0 0.0
          %3932 = vmatprep.subr.mxu0 0.0
          %3933 = vmatpush1.msra.mxu0 0.0
          %3934 = vmatprep.subr.mxu0 0.0
          %3935 = vmatpush1.msra.mxu0 0.0
          %3936 = vmatprep.subr.mxu0 0.0
          %3937 = vmatpush1.msra.mxu0 0.0
          %3938 = vmatprep.subr.mxu0 0.0
          %3939 = vmatpush1.msra.mxu0 0.0
          %3940 = vmatprep.subr.mxu0 0.0
          %3941 = vmatpush1.msra.mxu0 0.0
          %3942 = vmatprep.subr.mxu0 0.0
          %3943 = vmatpush1.msra.mxu0 0.0
          %3944 = vmatprep.subr.mxu0 0.0
          %3945 = vmatpush1.msra.mxu0 0.0
          %3946 = vmatprep.subr.mxu0 0.0
          %3947 = vmatpush1.msra.mxu0 0.0
          %3948 = vmatprep.subr.mxu0 0.0
          %3949 = vmatpush1.msra.mxu0 0.0
          %3950 = vmatprep.subr.mxu0 0.0
          %3951 = vmatpush1.msra.mxu0 0.0
          %3952 = vmatprep.subr.mxu0 0.0
          %3953 = vmatpush1.msra.mxu0 0.0
          %3954 = vmatprep.subr.mxu0 0.0
          %3955 = vmatpush1.msra.mxu0 0.0
          %3956 = vmatprep.mubr.f32.mxu0 0.0
          %3957 = vmatmul.mubr.f32.gmra.mrb[0].mxu0 %v3869
          %v3958 = vpop.f32.mrb[0].mxu0
          %v3959 = vadd.f32 0.0, %v3958
          %v3960 = vpop.f32.mrb[0].mxu0
          %3961 = vmatprep.mubr.f32.mxu0 0.0
          %3962 = vmatmul.mubr.f32.gmra.mrb[0].mxu0 %v3872
          %v3963 = vpop.f32.mrb[0].mxu0
          %v3964 = vadd.f32 0.0, %v3963
          %v3965 = vpop.f32.mrb[0].mxu0
          %3966 = vmatprep.mubr.f32.mxu0 0.0
          %3967 = vmatmul.mubr.f32.gmra.mrb[0].mxu0 %v3875
          %v3968 = vpop.f32.mrb[0].mxu0
          %v3969 = vadd.f32 0.0, %v3968
          %v3970 = vpop.f32.mrb[0].mxu0
          %3971 = vmatprep.mubr.f32.mxu0 0.0
          %3972 = vmatmul.mubr.f32.gmra.mrb[0].mxu0 %v3878
          %v3973 = vpop.f32.mrb[0].mxu0
          %v3974 = vadd.f32 0.0, %v3973
          %v3975 = vpop.f32.mrb[0].mxu0
          %3976 = vmatprep.mubr.f32.mxu0 0.0
          %3977 = vmatmul.mubr.f32.gmra.mrb[0].mxu0 %v3881
          %v3978 = vpop.f32.mrb[0].mxu0
          %v3979 = vadd.f32 0.0, %v3978
          %v3980 = vpop.f32.mrb[0].mxu0
          %3981 = vmatprep.mubr.f32.mxu0 0.0
          %3982 = vmatmul.mubr.f32.gmra.mrb[0].mxu0 %v3884
          %v3983 = vpop.f32.mrb[0].mxu0
          %v3984 = vadd.f32 0.0, %v3983
          %v3985 = vpop.f32.mrb[0].mxu0
          %3986 = vmatprep.mubr.f32.mxu0 0.0
          %3987 = vmatmul.mubr.f32.gmra.mrb[0].mxu0 %v3887
          %v3988 = vpop.f32.mrb[0].mxu0
          %v3989 = vadd.f32 0.0, %v3988
          %v3990 = vpop.f32.mrb[0].mxu0
          %3991 = vmatprep.mubr.f32.mxu0 0.0
          %3992 = vmatmul.mubr.f32.gmra.mrb[0].mxu0 %v3890
          %v3993 = vpop.f32.mrb[0].mxu0
          %v3994 = vadd.f32 0.0, %v3993
          %v3995 = vpop.f32.mrb[0].mxu0
          %3996 = vdwg.mxu0
          %v3998 = vsel %vm3097, %v3403, 0
          %v4001 = vsel %vm3097, %v3405, 0
          %v4004 = vsel %vm3097, %v3407, 0
          %v4007 = vsel %vm3097, %v3409, 0
          %v4010 = vsel %vm3097, %v3411, 0
          %v4013 = vsel %vm3097, %v3413, 0
          %v4016 = vsel %vm3097, %v3415, 0
          %v4019 = vsel %vm3097, %v3417, 0
          %4021 = vmatprep.subr.mxu0 0.0
          %4022 = vmatpush1.msra.mxu0 %v2456
          %4023 = vmatprep.subr.mxu0 0.0
          %4024 = vmatpush1.msra.mxu0 %v2457
          %4025 = vmatprep.subr.mxu0 0.0
          %4026 = vmatpush1.msra.mxu0 %v2458
          %4027 = vmatprep.subr.mxu0 0.0
          %4028 = vmatpush1.msra.mxu0 %v2459
          %4029 = vmatprep.subr.mxu0 0.0
          %4030 = vmatpush1.msra.mxu0 %v2460
          %4031 = vmatprep.subr.mxu0 0.0
          %4032 = vmatpush1.msra.mxu0 %v2461
          %4033 = vmatprep.subr.mxu0 0.0
          %4034 = vmatpush1.msra.mxu0 %v2462
          %4035 = vmatprep.subr.mxu0 0.0
          %4036 = vmatpush1.msra.mxu0 %v2463
          %4037 = vmatprep.subr.mxu0 0.0
          %4038 = vmatpush1.msra.mxu0 0.0
          %4039 = vmatprep.subr.mxu0 0.0
          %4040 = vmatpush1.msra.mxu0 0.0
          %4041 = vmatprep.subr.mxu0 0.0
          %4042 = vmatpush1.msra.mxu0 0.0
          %4043 = vmatprep.subr.mxu0 0.0
          %4044 = vmatpush1.msra.mxu0 0.0
          %4045 = vmatprep.subr.mxu0 0.0
          %4046 = vmatpush1.msra.mxu0 0.0
          %4047 = vmatprep.subr.mxu0 0.0
          %4048 = vmatpush1.msra.mxu0 0.0
          %4049 = vmatprep.subr.mxu0 0.0
          %4050 = vmatpush1.msra.mxu0 0.0
          %4051 = vmatprep.subr.mxu0 0.0
          %4052 = vmatpush1.msra.mxu0 0.0
          %4053 = vmatprep.subr.mxu0 0.0
          %4054 = vmatpush1.msra.mxu0 0.0
          %4055 = vmatprep.subr.mxu0 0.0
          %4056 = vmatpush1.msra.mxu0 0.0
          %4057 = vmatprep.subr.mxu0 0.0
          %4058 = vmatpush1.msra.mxu0 0.0
          %4059 = vmatprep.subr.mxu0 0.0
          %4060 = vmatpush1.msra.mxu0 0.0
          %4061 = vmatprep.subr.mxu0 0.0
          %4062 = vmatpush1.msra.mxu0 0.0
          %4063 = vmatprep.subr.mxu0 0.0
          %4064 = vmatpush1.msra.mxu0 0.0
          %4065 = vmatprep.subr.mxu0 0.0
          %4066 = vmatpush1.msra.mxu0 0.0
          %4067 = vmatprep.subr.mxu0 0.0
          %4068 = vmatpush1.msra.mxu0 0.0
          %4069 = vmatprep.subr.mxu0 0.0
          %4070 = vmatpush1.msra.mxu0 0.0
          %4071 = vmatprep.subr.mxu0 0.0
          %4072 = vmatpush1.msra.mxu0 0.0
          %4073 = vmatprep.subr.mxu0 0.0
          %4074 = vmatpush1.msra.mxu0 0.0
          %4075 = vmatprep.subr.mxu0 0.0
          %4076 = vmatpush1.msra.mxu0 0.0
          %4077 = vmatprep.subr.mxu0 0.0
          %4078 = vmatpush1.msra.mxu0 0.0
          %4079 = vmatprep.subr.mxu0 0.0
          %4080 = vmatpush1.msra.mxu0 0.0
          %4081 = vmatprep.subr.mxu0 0.0
          %4082 = vmatpush1.msra.mxu0 0.0
          %4083 = vmatprep.subr.mxu0 0.0
          %4084 = vmatpush1.msra.mxu0 0.0
          %4085 = vmatprep.mubr.f32.mxu0 0.0
          %4086 = vmatmul.mubr.f32.gmra.mrb[0].mxu0 %v3998
          %v4087 = vpop.f32.mrb[0].mxu0
          %v4088 = vadd.f32 0.0, %v4087
          %v4089 = vpop.f32.mrb[0].mxu0
          %4090 = vmatprep.mubr.f32.mxu0 0.0
          %4091 = vmatmul.mubr.f32.gmra.mrb[0].mxu0 %v4001
          %v4092 = vpop.f32.mrb[0].mxu0
          %v4093 = vadd.f32 0.0, %v4092
          %v4094 = vpop.f32.mrb[0].mxu0
          %4095 = vmatprep.mubr.f32.mxu0 0.0
          %4096 = vmatmul.mubr.f32.gmra.mrb[0].mxu0 %v4004
          %v4097 = vpop.f32.mrb[0].mxu0
          %v4098 = vadd.f32 0.0, %v4097
          %v4099 = vpop.f32.mrb[0].mxu0
          %4100 = vmatprep.mubr.f32.mxu0 0.0
          %4101 = vmatmul.mubr.f32.gmra.mrb[0].mxu0 %v4007
          %v4102 = vpop.f32.mrb[0].mxu0
          %v4103 = vadd.f32 0.0, %v4102
          %v4104 = vpop.f32.mrb[0].mxu0
          %4105 = vmatprep.mubr.f32.mxu0 0.0
          %4106 = vmatmul.mubr.f32.gmra.mrb[0].mxu0 %v4010
          %v4107 = vpop.f32.mrb[0].mxu0
          %v4108 = vadd.f32 0.0, %v4107
          %v4109 = vpop.f32.mrb[0].mxu0
          %4110 = vmatprep.mubr.f32.mxu0 0.0
          %4111 = vmatmul.mubr.f32.gmra.mrb[0].mxu0 %v4013
          %v4112 = vpop.f32.mrb[0].mxu0
          %v4113 = vadd.f32 0.0, %v4112
          %v4114 = vpop.f32.mrb[0].mxu0
          %4115 = vmatprep.mubr.f32.mxu0 0.0
          %4116 = vmatmul.mubr.f32.gmra.mrb[0].mxu0 %v4016
          %v4117 = vpop.f32.mrb[0].mxu0
          %v4118 = vadd.f32 0.0, %v4117
          %v4119 = vpop.f32.mrb[0].mxu0
          %4120 = vmatprep.mubr.f32.mxu0 0.0
          %4121 = vmatmul.mubr.f32.gmra.mrb[0].mxu0 %v4019
          %v4122 = vpop.f32.mrb[0].mxu0
          %v4123 = vadd.f32 0.0, %v4122
          %v4124 = vpop.f32.mrb[0].mxu0
          %4125 = vdwg.mxu0
          %v4126 = vadd.f32 %v3578, %v3701
          %v4127 = vadd.f32 %v3579, %v3706
          %v4128 = vadd.f32 %v3580, %v3711
          %v4129 = vadd.f32 %v3581, %v3716
          %v4130 = vadd.f32 %v3582, %v3721
          %v4131 = vadd.f32 %v3583, %v3726
          %v4132 = vadd.f32 %v3584, %v3731
          %v4133 = vadd.f32 %v3585, %v3736
          %v4134 = vadd.f32 %v3586, %v3830
          %v4135 = vadd.f32 %v3587, %v3835
          %v4136 = vadd.f32 %v3588, %v3840
          %v4137 = vadd.f32 %v3589, %v3845
          %v4138 = vadd.f32 %v3590, %v3850
          %v4139 = vadd.f32 %v3591, %v3855
          %v4140 = vadd.f32 %v3592, %v3860
          %v4141 = vadd.f32 %v3593, %v3865
          %v4142 = vadd.f32 %v3594, %v3959
          %v4143 = vadd.f32 %v3595, %v3964
          %v4144 = vadd.f32 %v3596, %v3969
          %v4145 = vadd.f32 %v3597, %v3974
          %v4146 = vadd.f32 %v3598, %v3979
          %v4147 = vadd.f32 %v3599, %v3984
          %v4148 = vadd.f32 %v3600, %v3989
          %v4149 = vadd.f32 %v3601, %v3994
          %v4150 = vadd.f32 %v3602, %v4088
          %v4151 = vadd.f32 %v3603, %v4093
          %v4152 = vadd.f32 %v3604, %v4098
          %v4153 = vadd.f32 %v3605, %v4103
          %v4154 = vadd.f32 %v3606, %v4108
          %v4155 = vadd.f32 %v3607, %v4113
          %v4156 = vadd.f32 %v3608, %v4118
          %v4157 = vadd.f32 %v3609, %v4123
        $region141: #{tpu_custom_call.1} parent=75 // loop_footer
          %s2298 = sadd.s32 %s2296, 1
        $region142: #{tpu_custom_call.1} parent=75 // loop_footer_branch
          %2295 = sbr.rel target = $region138
        $region143: #{tpu_custom_call.1} parent=75 // loop_exit
          _
        %v4158 = vrcp.pop %v2333
        %v4159 = vrcp.pop %v2334
        %v4160 = vrcp.pop %v2335
        %v4161 = vrcp.pop %v2336
        %v4162 = vrcp.pop %v2337
        %v4163 = vrcp.pop %v2338
        %v4164 = vrcp.pop %v2339
        %v4165 = vrcp.pop %v2340
        %v4166 = vrcp.pop %v2341
        %v4167 = vrcp.pop %v2342
        %v4168 = vrcp.pop %v2343
        %v4169 = vrcp.pop %v2344
        %v4170 = vrcp.pop %v2345
        %v4171 = vrcp.pop %v2346
        %v4172 = vrcp.pop %v2347
        %v4173 = vrcp.pop %v2348
        %v4174 = vrcp.pop %v2349
        %v4175 = vrcp.pop %v2350
        %v4176 = vrcp.pop %v2351
        %v4177 = vrcp.pop %v2352
        %v4178 = vrcp.pop %v2353
        %v4179 = vrcp.pop %v2354
        %v4180 = vrcp.pop %v2355
        %v4181 = vrcp.pop %v2356
        %v4182 = vrcp.pop %v2357
        %v4183 = vrcp.pop %v2358
        %v4184 = vrcp.pop %v2359
        %v4185 = vrcp.pop %v2360
        %v4186 = vrcp.pop %v2361
        %v4187 = vrcp.pop %v2362
        %v4188 = vrcp.pop %v2363
        %v4189 = vrcp.pop %v2364
        %v4190 = vmul.f32 %v2365, %v4158
        %v4191 = vmul.f32 %v2366, %v4159
        %v4192 = vmul.f32 %v2367, %v4160
        %v4193 = vmul.f32 %v2368, %v4161
        %v4194 = vmul.f32 %v2369, %v4162
        %v4195 = vmul.f32 %v2370, %v4163
        %v4196 = vmul.f32 %v2371, %v4164
        %v4197 = vmul.f32 %v2372, %v4165
        %v4198 = vmul.f32 %v2373, %v4166
        %v4199 = vmul.f32 %v2374, %v4167
        %v4200 = vmul.f32 %v2375, %v4168
        %v4201 = vmul.f32 %v2376, %v4169
        %v4202 = vmul.f32 %v2377, %v4170
        %v4203 = vmul.f32 %v2378, %v4171
        %v4204 = vmul.f32 %v2379, %v4172
        %v4205 = vmul.f32 %v2380, %v4173
        %v4206 = vmul.f32 %v2381, %v4174
        %v4207 = vmul.f32 %v2382, %v4175
        %v4208 = vmul.f32 %v2383, %v4176
        %v4209 = vmul.f32 %v2384, %v4177
        %v4210 = vmul.f32 %v2385, %v4178
        %v4211 = vmul.f32 %v2386, %v4179
        %v4212 = vmul.f32 %v2387, %v4180
        %v4213 = vmul.f32 %v2388, %v4181
        %v4214 = vmul.f32 %v2389, %v4182
        %v4215 = vmul.f32 %v2390, %v4183
        %v4216 = vmul.f32 %v2391, %v4184
        %v4217 = vmul.f32 %v2392, %v4185
        %v4218 = vmul.f32 %v2393, %v4186
        %v4219 = vmul.f32 %v2394, %v4187
        %v4220 = vmul.f32 %v2395, %v4188
        %v4221 = vmul.f32 %v2396, %v4189
        %4222 = vst.msk [vmem:[#allocation5] sm:$0xff] %vm2128, %v4190
        %4223 = vst.msk [vmem:[#allocation5 + $0x8] sm:$0xff] %vm2128, %v4191
        %4224 = vst.msk [vmem:[#allocation5 + $0x10] sm:$0xff] %vm2128, %v4192
        %4225 = vst.msk [vmem:[#allocation5 + $0x18] sm:$0xff] %vm2128, %v4193
        %4226 = vst.msk [vmem:[#allocation5 + $0x20] sm:$0xff] %vm2128, %v4194
        %4227 = vst.msk [vmem:[#allocation5 + $0x28] sm:$0xff] %vm2128, %v4195
        %4228 = vst.msk [vmem:[#allocation5 + $0x30] sm:$0xff] %vm2128, %v4196
        %4229 = vst.msk [vmem:[#allocation5 + $0x38] sm:$0xff] %vm2128, %v4197
        %4238 = vrot.lane.b32.xlu0 %v4198, 32
        %v4239 = vpop.permute.xlu0 %4238
        %4240 = vrot.lane.b32.xlu0 %v4199, 32
        %v4241 = vpop.permute.xlu0 %4240
        %4242 = vrot.lane.b32.xlu0 %v4200, 32
        %v4243 = vpop.permute.xlu0 %4242
        %4244 = vrot.lane.b32.xlu0 %v4201, 32
        %v4245 = vpop.permute.xlu0 %4244
        %4246 = vrot.lane.b32.xlu0 %v4202, 32
        %v4247 = vpop.permute.xlu0 %4246
        %4248 = vrot.lane.b32.xlu0 %v4203, 32
        %v4249 = vpop.permute.xlu0 %4248
        %4250 = vrot.lane.b32.xlu0 %v4204, 32
        %v4251 = vpop.permute.xlu0 %4250
        %4252 = vrot.lane.b32.xlu0 %v4205, 32
        %v4253 = vpop.permute.xlu0 %4252
        %vm4262 = vcmask 523520
        %4263 = vst.msk [vmem:[#allocation5] sm:$0xff] %vm4262, %v4239
        %4264 = vst.msk [vmem:[#allocation5 + $0x8] sm:$0xff] %vm4262, %v4241
        %4265 = vst.msk [vmem:[#allocation5 + $0x10] sm:$0xff] %vm4262, %v4243
        %4266 = vst.msk [vmem:[#allocation5 + $0x18] sm:$0xff] %vm4262, %v4245
        %4267 = vst.msk [vmem:[#allocation5 + $0x20] sm:$0xff] %vm4262, %v4247
        %4268 = vst.msk [vmem:[#allocation5 + $0x28] sm:$0xff] %vm4262, %v4249
        %4269 = vst.msk [vmem:[#allocation5 + $0x30] sm:$0xff] %vm4262, %v4251
        %4270 = vst.msk [vmem:[#allocation5 + $0x38] sm:$0xff] %vm4262, %v4253
        %4279 = vrot.lane.b32.xlu0 %v4206, 64
        %v4280 = vpop.permute.xlu0 %4279
        %4281 = vrot.lane.b32.xlu0 %v4207, 64
        %v4282 = vpop.permute.xlu0 %4281
        %4283 = vrot.lane.b32.xlu0 %v4208, 64
        %v4284 = vpop.permute.xlu0 %4283
        %4285 = vrot.lane.b32.xlu0 %v4209, 64
        %v4286 = vpop.permute.xlu0 %4285
        %4287 = vrot.lane.b32.xlu0 %v4210, 64
        %v4288 = vpop.permute.xlu0 %4287
        %4289 = vrot.lane.b32.xlu0 %v4211, 64
        %v4290 = vpop.permute.xlu0 %4289
        %4291 = vrot.lane.b32.xlu0 %v4212, 64
        %v4292 = vpop.permute.xlu0 %4291
        %4293 = vrot.lane.b32.xlu0 %v4213, 64
        %v4294 = vpop.permute.xlu0 %4293
        %vm4303 = vcmask 785920
        %4304 = vst.msk [vmem:[#allocation5] sm:$0xff] %vm4303, %v4280
        %4305 = vst.msk [vmem:[#allocation5 + $0x8] sm:$0xff] %vm4303, %v4282
        %4306 = vst.msk [vmem:[#allocation5 + $0x10] sm:$0xff] %vm4303, %v4284
        %4307 = vst.msk [vmem:[#allocation5 + $0x18] sm:$0xff] %vm4303, %v4286
        %4308 = vst.msk [vmem:[#allocation5 + $0x20] sm:$0xff] %vm4303, %v4288
        %4309 = vst.msk [vmem:[#allocation5 + $0x28] sm:$0xff] %vm4303, %v4290
        %4310 = vst.msk [vmem:[#allocation5 + $0x30] sm:$0xff] %vm4303, %v4292
        %4311 = vst.msk [vmem:[#allocation5 + $0x38] sm:$0xff] %vm4303, %v4294
        %4320 = vrot.lane.b32.xlu0 %v4214, 96
        %v4321 = vpop.permute.xlu0 %4320
        %4322 = vrot.lane.b32.xlu0 %v4215, 96
        %v4323 = vpop.permute.xlu0 %4322
        %4324 = vrot.lane.b32.xlu0 %v4216, 96
        %v4325 = vpop.permute.xlu0 %4324
        %4326 = vrot.lane.b32.xlu0 %v4217, 96
        %v4327 = vpop.permute.xlu0 %4326
        %4328 = vrot.lane.b32.xlu0 %v4218, 96
        %v4329 = vpop.permute.xlu0 %4328
        %4330 = vrot.lane.b32.xlu0 %v4219, 96
        %v4331 = vpop.permute.xlu0 %4330
        %4332 = vrot.lane.b32.xlu0 %v4220, 96
        %v4333 = vpop.permute.xlu0 %4332
        %4334 = vrot.lane.b32.xlu0 %v4221, 96
        %v4335 = vpop.permute.xlu0 %4334
        %vm4344 = vcmask 1048320
        %4345 = vst.msk [vmem:[#allocation5] sm:$0xff] %vm4344, %v4321
        %4346 = vst.msk [vmem:[#allocation5 + $0x8] sm:$0xff] %vm4344, %v4323
        %4347 = vst.msk [vmem:[#allocation5 + $0x10] sm:$0xff] %vm4344, %v4325
        %4348 = vst.msk [vmem:[#allocation5 + $0x18] sm:$0xff] %vm4344, %v4327
        %4349 = vst.msk [vmem:[#allocation5 + $0x20] sm:$0xff] %vm4344, %v4329
        %4350 = vst.msk [vmem:[#allocation5 + $0x28] sm:$0xff] %vm4344, %v4331
        %4351 = vst.msk [vmem:[#allocation5 + $0x30] sm:$0xff] %vm4344, %v4333
        %4352 = vst.msk [vmem:[#allocation5 + $0x38] sm:$0xff] %vm4344, %v4335
        %v4353 = vld [vmem:[#allocation5] sm:$0xff]
        %v4354 = vld [vmem:[#allocation5 + $0x8] sm:$0xff]
        %v4355 = vld [vmem:[#allocation5 + $0x10] sm:$0xff]
        %v4356 = vld [vmem:[#allocation5 + $0x18] sm:$0xff]
        %v4357 = vld [vmem:[#allocation5 + $0x20] sm:$0xff]
        %v4358 = vld [vmem:[#allocation5 + $0x28] sm:$0xff]
        %v4359 = vld [vmem:[#allocation5 + $0x30] sm:$0xff]
        %v4360 = vld [vmem:[#allocation5 + $0x38] sm:$0xff]
        %v4361 = vld [vmem:[#allocation14] sm:$0xff]
        %v4362 = vld [vmem:[#allocation14 + $0x8] sm:$0xff]
        %v4363 = vld [vmem:[#allocation14 + $0x10] sm:$0xff]
        %v4364 = vld [vmem:[#allocation14 + $0x18] sm:$0xff]
        %v4365 = vld [vmem:[#allocation14 + $0x20] sm:$0xff]
        %v4366 = vld [vmem:[#allocation14 + $0x28] sm:$0xff]
        %v4367 = vld [vmem:[#allocation14 + $0x30] sm:$0xff]
        %v4368 = vld [vmem:[#allocation14 + $0x38] sm:$0xff]
        %v4369 = vld [vmem:[#allocation14 + $0x40] sm:$0xff]
        %v4370 = vld [vmem:[#allocation14 + $0x48] sm:$0xff]
        %v4371 = vld [vmem:[#allocation14 + $0x50] sm:$0xff]
        %v4372 = vld [vmem:[#allocation14 + $0x58] sm:$0xff]
        %v4373 = vld [vmem:[#allocation14 + $0x60] sm:$0xff]
        %v4374 = vld [vmem:[#allocation14 + $0x68] sm:$0xff]
        %v4375 = vld [vmem:[#allocation14 + $0x70] sm:$0xff]
        %v4376 = vld [vmem:[#allocation14 + $0x78] sm:$0xff]
        %v4377 = vld [vmem:[#allocation15] sm:$0x1]
        %v4379 = vlaneseq
        %v4380 = vshrl.u32 %v4379, 7
        %v4381 = vsub.s32 0, %v4380
        %v4382 = vrot.slane %v4377, %v4381
        %4384 = vmatprep.subr.mxu0 0.0
        %4385 = vmatpush1.msra.mxu0 %v4361
        %4386 = vmatprep.subr.mxu0 0.0
        %4387 = vmatpush1.msra.mxu0 %v4362
        %4388 = vmatprep.subr.mxu0 0.0
        %4389 = vmatpush1.msra.mxu0 %v4363
        %4390 = vmatprep.subr.mxu0 0.0
        %4391 = vmatpush1.msra.mxu0 %v4364
        %4392 = vmatprep.subr.mxu0 0.0
        %4393 = vmatpush1.msra.mxu0 %v4365
        %4394 = vmatprep.subr.mxu0 0.0
        %4395 = vmatpush1.msra.mxu0 %v4366
        %4396 = vmatprep.subr.mxu0 0.0
        %4397 = vmatpush1.msra.mxu0 %v4367
        %4398 = vmatprep.subr.mxu0 0.0
        %4399 = vmatpush1.msra.mxu0 %v4368
        %4400 = vmatprep.subr.mxu0 0.0
        %4401 = vmatpush1.msra.mxu0 %v4369
        %4402 = vmatprep.subr.mxu0 0.0
        %4403 = vmatpush1.msra.mxu0 %v4370
        %4404 = vmatprep.subr.mxu0 0.0
        %4405 = vmatpush1.msra.mxu0 %v4371
        %4406 = vmatprep.subr.mxu0 0.0
        %4407 = vmatpush1.msra.mxu0 %v4372
        %4408 = vmatprep.subr.mxu0 0.0
        %4409 = vmatpush1.msra.mxu0 %v4373
        %4410 = vmatprep.subr.mxu0 0.0
        %4411 = vmatpush1.msra.mxu0 %v4374
        %4412 = vmatprep.subr.mxu0 0.0
        %4413 = vmatpush1.msra.mxu0 %v4375
        %4414 = vmatprep.subr.mxu0 0.0
        %4415 = vmatpush1.msra.mxu0 %v4376
        %4416 = vmatprep.subr.mxu0 0.0
        %4417 = vmatpush1.msra.mxu0 0.0
        %4418 = vmatprep.subr.mxu0 0.0
        %4419 = vmatpush1.msra.mxu0 0.0
        %4420 = vmatprep.subr.mxu0 0.0
        %4421 = vmatpush1.msra.mxu0 0.0
        %4422 = vmatprep.subr.mxu0 0.0
        %4423 = vmatpush1.msra.mxu0 0.0
        %4424 = vmatprep.subr.mxu0 0.0
        %4425 = vmatpush1.msra.mxu0 0.0
        %4426 = vmatprep.subr.mxu0 0.0
        %4427 = vmatpush1.msra.mxu0 0.0
        %4428 = vmatprep.subr.mxu0 0.0
        %4429 = vmatpush1.msra.mxu0 0.0
        %4430 = vmatprep.subr.mxu0 0.0
        %4431 = vmatpush1.msra.mxu0 0.0
        %4432 = vmatprep.subr.mxu0 0.0
        %4433 = vmatpush1.msra.mxu0 0.0
        %4434 = vmatprep.subr.mxu0 0.0
        %4435 = vmatpush1.msra.mxu0 0.0
        %4436 = vmatprep.subr.mxu0 0.0
        %4437 = vmatpush1.msra.mxu0 0.0
        %4438 = vmatprep.subr.mxu0 0.0
        %4439 = vmatpush1.msra.mxu0 0.0
        %4440 = vmatprep.subr.mxu0 0.0
        %4441 = vmatpush1.msra.mxu0 0.0
        %4442 = vmatprep.subr.mxu0 0.0
        %4443 = vmatpush1.msra.mxu0 0.0
        %4444 = vmatprep.subr.mxu0 0.0
        %4445 = vmatpush1.msra.mxu0 0.0
        %4446 = vmatprep.subr.mxu0 0.0
        %4447 = vmatpush1.msra.mxu0 0.0
        %4448 = vmatprep.mubr.f32.mxu0 0.0
        %4449 = vmatmul.mubr.f32.gmra.mrb[0].mxu0 %v4353
        %v4450 = vpop.f32.mrb[0].mxu0
        %v4451 = vadd.f32 %v4382, %v4450
        %v4452 = vpop.f32.mrb[0].mxu0
        %4453 = vmatprep.mubr.f32.mxu0 0.0
        %4454 = vmatmul.mubr.f32.gmra.mrb[0].mxu0 %v4354
        %v4455 = vpop.f32.mrb[0].mxu0
        %v4456 = vadd.f32 %v4382, %v4455
        %v4457 = vpop.f32.mrb[0].mxu0
        %4458 = vmatprep.mubr.f32.mxu0 0.0
        %4459 = vmatmul.mubr.f32.gmra.mrb[0].mxu0 %v4355
        %v4460 = vpop.f32.mrb[0].mxu0
        %v4461 = vadd.f32 %v4382, %v4460
        %v4462 = vpop.f32.mrb[0].mxu0
        %4463 = vmatprep.mubr.f32.mxu0 0.0
        %4464 = vmatmul.mubr.f32.gmra.mrb[0].mxu0 %v4356
        %v4465 = vpop.f32.mrb[0].mxu0
        %v4466 = vadd.f32 %v4382, %v4465
        %v4467 = vpop.f32.mrb[0].mxu0
        %4468 = vmatprep.mubr.f32.mxu0 0.0
        %4469 = vmatmul.mubr.f32.gmra.mrb[0].mxu0 %v4357
        %v4470 = vpop.f32.mrb[0].mxu0
        %v4471 = vadd.f32 %v4382, %v4470
        %v4472 = vpop.f32.mrb[0].mxu0
        %4473 = vmatprep.mubr.f32.mxu0 0.0
        %4474 = vmatmul.mubr.f32.gmra.mrb[0].mxu0 %v4358
        %v4475 = vpop.f32.mrb[0].mxu0
        %v4476 = vadd.f32 %v4382, %v4475
        %v4477 = vpop.f32.mrb[0].mxu0
        %4478 = vmatprep.mubr.f32.mxu0 0.0
        %4479 = vmatmul.mubr.f32.gmra.mrb[0].mxu0 %v4359
        %v4480 = vpop.f32.mrb[0].mxu0
        %v4481 = vadd.f32 %v4382, %v4480
        %v4482 = vpop.f32.mrb[0].mxu0
        %4483 = vmatprep.mubr.f32.mxu0 0.0
        %4484 = vmatmul.mubr.f32.gmra.mrb[0].mxu0 %v4360
        %v4485 = vpop.f32.mrb[0].mxu0
        %v4486 = vadd.f32 %v4382, %v4485
        %v4487 = vpop.f32.mrb[0].mxu0
        %4488 = vdwg.mxu0
        %v4489 = vadd.f32 %v1818, %v4451
        %v4490 = vadd.f32 %v1819, %v4456
        %v4491 = vadd.f32 %v1820, %v4461
        %v4492 = vadd.f32 %v1821, %v4466
        %v4493 = vadd.f32 %v1822, %v4471
        %v4494 = vadd.f32 %v1823, %v4476
        %v4495 = vadd.f32 %v1824, %v4481
        %v4496 = vadd.f32 %v1825, %v4486
        %v4497 = vld [vmem:[#allocation26] sm:$0x1]
        %v4498 = vld [vmem:[#allocation27] sm:$0x1]
        %4499 = vadd.xlane.f32.xlu0 %v4489
        %v4500 = vpop.xlane.xlu0 %4499
        %4501 = vadd.xlane.f32.xlu0 %v4490
        %v4502 = vpop.xlane.xlu0 %4501
        %4503 = vadd.xlane.f32.xlu0 %v4491
        %v4504 = vpop.xlane.xlu0 %4503
        %4505 = vadd.xlane.f32.xlu0 %v4492
        %v4506 = vpop.xlane.xlu0 %4505
        %4507 = vadd.xlane.f32.xlu0 %v4493
        %v4508 = vpop.xlane.xlu0 %4507
        %4509 = vadd.xlane.f32.xlu0 %v4494
        %v4510 = vpop.xlane.xlu0 %4509
        %4511 = vadd.xlane.f32.xlu0 %v4495
        %v4512 = vpop.xlane.xlu0 %4511
        %4513 = vadd.xlane.f32.xlu0 %v4496
        %v4514 = vpop.xlane.xlu0 %4513
        %v4515 = vmul.f32 %v4500, %v1842
        %v4516 = vmul.f32 %v4502, %v1842
        %v4517 = vmul.f32 %v4504, %v1842
        %v4518 = vmul.f32 %v4506, %v1842
        %v4519 = vmul.f32 %v4508, %v1842
        %v4520 = vmul.f32 %v4510, %v1842
        %v4521 = vmul.f32 %v4512, %v1842
        %v4522 = vmul.f32 %v4514, %v1842
        %v4523 = vsub.f32 %v4489, %v4515
        %v4524 = vsub.f32 %v4490, %v4516
        %v4525 = vsub.f32 %v4491, %v4517
        %v4526 = vsub.f32 %v4492, %v4518
        %v4527 = vsub.f32 %v4493, %v4519
        %v4528 = vsub.f32 %v4494, %v4520
        %v4529 = vsub.f32 %v4495, %v4521
        %v4530 = vsub.f32 %v4496, %v4522
        %v4531 = vmul.f32 %v4523, %v4523
        %v4532 = vmul.f32 %v4524, %v4524
        %v4533 = vmul.f32 %v4525, %v4525
        %v4534 = vmul.f32 %v4526, %v4526
        %v4535 = vmul.f32 %v4527, %v4527
        %v4536 = vmul.f32 %v4528, %v4528
        %v4537 = vmul.f32 %v4529, %v4529
        %v4538 = vmul.f32 %v4530, %v4530
        %4539 = vadd.xlane.f32.xlu0 %v4531
        %v4540 = vpop.xlane.xlu0 %4539
        %4541 = vadd.xlane.f32.xlu0 %v4532
        %v4542 = vpop.xlane.xlu0 %4541
        %4543 = vadd.xlane.f32.xlu0 %v4533
        %v4544 = vpop.xlane.xlu0 %4543
        %4545 = vadd.xlane.f32.xlu0 %v4534
        %v4546 = vpop.xlane.xlu0 %4545
        %4547 = vadd.xlane.f32.xlu0 %v4535
        %v4548 = vpop.xlane.xlu0 %4547
        %4549 = vadd.xlane.f32.xlu0 %v4536
        %v4550 = vpop.xlane.xlu0 %4549
        %4551 = vadd.xlane.f32.xlu0 %v4537
        %v4552 = vpop.xlane.xlu0 %4551
        %4553 = vadd.xlane.f32.xlu0 %v4538
        %v4554 = vpop.xlane.xlu0 %4553
        %v4555 = vmul.f32 %v4540, %v1842
        %v4556 = vmul.f32 %v4542, %v1842
        %v4557 = vmul.f32 %v4544, %v1842
        %v4558 = vmul.f32 %v4546, %v1842
        %v4559 = vmul.f32 %v4548, %v1842
        %v4560 = vmul.f32 %v4550, %v1842
        %v4561 = vmul.f32 %v4552, %v1842
        %v4562 = vmul.f32 %v4554, %v1842
        %v4563 = vadd.f32 %v4555, 1e-05
        %v4564 = vadd.f32 %v4556, 1e-05
        %v4565 = vadd.f32 %v4557, 1e-05
        %v4566 = vadd.f32 %v4558, 1e-05
        %v4567 = vadd.f32 %v4559, 1e-05
        %v4568 = vadd.f32 %v4560, 1e-05
        %v4569 = vadd.f32 %v4561, 1e-05
        %v4570 = vadd.f32 %v4562, 1e-05
        %v4571 = vrsqrt.pop %v4563
        %v4572 = vmul.f32 %v4563, %v4571
        %vm4573 = vcmp.eq.f32.partialorder %v4563, inf
        %v4574 = vsel %vm4573, %v4563, %v4572
        %vm4575 = vcmp.eq.f32.partialorder %v4563, 0.0
        %v4576 = vand.u32 %v4563, 2147483648
        %v4577 = vsel %vm4575, %v4576, %v4574
        %v4578 = vrsqrt.pop %v4564
        %v4579 = vmul.f32 %v4564, %v4578
        %vm4580 = vcmp.eq.f32.partialorder %v4564, inf
        %v4581 = vsel %vm4580, %v4564, %v4579
        %vm4582 = vcmp.eq.f32.partialorder %v4564, 0.0
        %v4583 = vand.u32 %v4564, 2147483648
        %v4584 = vsel %vm4582, %v4583, %v4581
        %v4585 = vrsqrt.pop %v4565
        %v4586 = vmul.f32 %v4565, %v4585
        %vm4587 = vcmp.eq.f32.partialorder %v4565, inf
        %v4588 = vsel %vm4587, %v4565, %v4586
        %vm4589 = vcmp.eq.f32.partialorder %v4565, 0.0
        %v4590 = vand.u32 %v4565, 2147483648
        %v4591 = vsel %vm4589, %v4590, %v4588
        %v4592 = vrsqrt.pop %v4566
        %v4593 = vmul.f32 %v4566, %v4592
        %vm4594 = vcmp.eq.f32.partialorder %v4566, inf
        %v4595 = vsel %vm4594, %v4566, %v4593
        %vm4596 = vcmp.eq.f32.partialorder %v4566, 0.0
        %v4597 = vand.u32 %v4566, 2147483648
        %v4598 = vsel %vm4596, %v4597, %v4595
        %v4599 = vrsqrt.pop %v4567
        %v4600 = vmul.f32 %v4567, %v4599
        %vm4601 = vcmp.eq.f32.partialorder %v4567, inf
        %v4602 = vsel %vm4601, %v4567, %v4600
        %vm4603 = vcmp.eq.f32.partialorder %v4567, 0.0
        %v4604 = vand.u32 %v4567, 2147483648
        %v4605 = vsel %vm4603, %v4604, %v4602
        %v4606 = vrsqrt.pop %v4568
        %v4607 = vmul.f32 %v4568, %v4606
        %vm4608 = vcmp.eq.f32.partialorder %v4568, inf
        %v4609 = vsel %vm4608, %v4568, %v4607
        %vm4610 = vcmp.eq.f32.partialorder %v4568, 0.0
        %v4611 = vand.u32 %v4568, 2147483648
        %v4612 = vsel %vm4610, %v4611, %v4609
        %v4613 = vrsqrt.pop %v4569
        %v4614 = vmul.f32 %v4569, %v4613
        %vm4615 = vcmp.eq.f32.partialorder %v4569, inf
        %v4616 = vsel %vm4615, %v4569, %v4614
        %vm4617 = vcmp.eq.f32.partialorder %v4569, 0.0
        %v4618 = vand.u32 %v4569, 2147483648
        %v4619 = vsel %vm4617, %v4618, %v4616
        %v4620 = vrsqrt.pop %v4570
        %v4621 = vmul.f32 %v4570, %v4620
        %vm4622 = vcmp.eq.f32.partialorder %v4570, inf
        %v4623 = vsel %vm4622, %v4570, %v4621
        %vm4624 = vcmp.eq.f32.partialorder %v4570, 0.0
        %v4625 = vand.u32 %v4570, 2147483648
        %v4626 = vsel %vm4624, %v4625, %v4623
        %v4627 = vrcp.pop %v4577
        %v4628 = vmul.f32 %v4523, %v4627
        %v4629 = vrcp.pop %v4584
        %v4630 = vmul.f32 %v4524, %v4629
        %v4631 = vrcp.pop %v4591
        %v4632 = vmul.f32 %v4525, %v4631
        %v4633 = vrcp.pop %v4598
        %v4634 = vmul.f32 %v4526, %v4633
        %v4635 = vrcp.pop %v4605
        %v4636 = vmul.f32 %v4527, %v4635
        %v4637 = vrcp.pop %v4612
        %v4638 = vmul.f32 %v4528, %v4637
        %v4639 = vrcp.pop %v4619
        %v4640 = vmul.f32 %v4529, %v4639
        %v4641 = vrcp.pop %v4626
        %v4642 = vmul.f32 %v4530, %v4641
        %v4644 = vlaneseq
        %v4645 = vshrl.u32 %v4644, 7
        %v4646 = vsub.s32 0, %v4645
        %v4647 = vrot.slane %v4497, %v4646
        %v4649 = vmul.f32 %v4647, %v4628
        %v4650 = vmul.f32 %v4647, %v4630
        %v4651 = vmul.f32 %v4647, %v4632
        %v4652 = vmul.f32 %v4647, %v4634
        %v4653 = vmul.f32 %v4647, %v4636
        %v4654 = vmul.f32 %v4647, %v4638
        %v4655 = vmul.f32 %v4647, %v4640
        %v4656 = vmul.f32 %v4647, %v4642
        %v4658 = vlaneseq
        %v4659 = vshrl.u32 %v4658, 7
        %v4660 = vsub.s32 0, %v4659
        %v4661 = vrot.slane %v4498, %v4660
        %v4663 = vadd.f32 %v4649, %v4661
        %v4664 = vadd.f32 %v4650, %v4661
        %v4665 = vadd.f32 %v4651, %v4661
        %v4666 = vadd.f32 %v4652, %v4661
        %v4667 = vadd.f32 %v4653, %v4661
        %v4668 = vadd.f32 %v4654, %v4661
        %v4669 = vadd.f32 %v4655, %v4661
        %v4670 = vadd.f32 %v4656, %v4661
        %v4671 = vld [vmem:[#allocation17] sm:$0xff]
        %v4672 = vld [vmem:[#allocation17 + $0x8] sm:$0xff]
        %v4673 = vld [vmem:[#allocation17 + $0x10] sm:$0xff]
        %v4674 = vld [vmem:[#allocation17 + $0x18] sm:$0xff]
        %v4675 = vld [vmem:[#allocation17 + $0x20] sm:$0xff]
        %v4676 = vld [vmem:[#allocation17 + $0x28] sm:$0xff]
        %v4677 = vld [vmem:[#allocation17 + $0x30] sm:$0xff]
        %v4678 = vld [vmem:[#allocation17 + $0x38] sm:$0xff]
        %v4679 = vld [vmem:[#allocation17 + $0x40] sm:$0xff]
        %v4680 = vld [vmem:[#allocation17 + $0x48] sm:$0xff]
        %v4681 = vld [vmem:[#allocation17 + $0x50] sm:$0xff]
        %v4682 = vld [vmem:[#allocation17 + $0x58] sm:$0xff]
        %v4683 = vld [vmem:[#allocation17 + $0x60] sm:$0xff]
        %v4684 = vld [vmem:[#allocation17 + $0x68] sm:$0xff]
        %v4685 = vld [vmem:[#allocation17 + $0x70] sm:$0xff]
        %v4686 = vld [vmem:[#allocation17 + $0x78] sm:$0xff]
        %v4687 = vld [vmem:[#allocation17 + $0x80] sm:$0xff]
        %v4688 = vld [vmem:[#allocation17 + $0x88] sm:$0xff]
        %v4689 = vld [vmem:[#allocation17 + $0x90] sm:$0xff]
        %v4690 = vld [vmem:[#allocation17 + $0x98] sm:$0xff]
        %v4691 = vld [vmem:[#allocation17 + $0xa0] sm:$0xff]
        %v4692 = vld [vmem:[#allocation17 + $0xa8] sm:$0xff]
        %v4693 = vld [vmem:[#allocation17 + $0xb0] sm:$0xff]
        %v4694 = vld [vmem:[#allocation17 + $0xb8] sm:$0xff]
        %v4695 = vld [vmem:[#allocation17 + $0xc0] sm:$0xff]
        %v4696 = vld [vmem:[#allocation17 + $0xc8] sm:$0xff]
        %v4697 = vld [vmem:[#allocation17 + $0xd0] sm:$0xff]
        %v4698 = vld [vmem:[#allocation17 + $0xd8] sm:$0xff]
        %v4699 = vld [vmem:[#allocation17 + $0xe0] sm:$0xff]
        %v4700 = vld [vmem:[#allocation17 + $0xe8] sm:$0xff]
        %v4701 = vld [vmem:[#allocation17 + $0xf0] sm:$0xff]
        %v4702 = vld [vmem:[#allocation17 + $0xf8] sm:$0xff]
        %v4703 = vld [vmem:[#allocation17 + $0x100] sm:$0xff]
        %v4704 = vld [vmem:[#allocation17 + $0x108] sm:$0xff]
        %v4705 = vld [vmem:[#allocation17 + $0x110] sm:$0xff]
        %v4706 = vld [vmem:[#allocation17 + $0x118] sm:$0xff]
        %v4707 = vld [vmem:[#allocation17 + $0x120] sm:$0xff]
        %v4708 = vld [vmem:[#allocation17 + $0x128] sm:$0xff]
        %v4709 = vld [vmem:[#allocation17 + $0x130] sm:$0xff]
        %v4710 = vld [vmem:[#allocation17 + $0x138] sm:$0xff]
        %v4711 = vld [vmem:[#allocation17 + $0x140] sm:$0xff]
        %v4712 = vld [vmem:[#allocation17 + $0x148] sm:$0xff]
        %v4713 = vld [vmem:[#allocation17 + $0x150] sm:$0xff]
        %v4714 = vld [vmem:[#allocation17 + $0x158] sm:$0xff]
        %v4715 = vld [vmem:[#allocation17 + $0x160] sm:$0xff]
        %v4716 = vld [vmem:[#allocation17 + $0x168] sm:$0xff]
        %v4717 = vld [vmem:[#allocation17 + $0x170] sm:$0xff]
        %v4718 = vld [vmem:[#allocation17 + $0x178] sm:$0xff]
        %v4719 = vld [vmem:[#allocation17 + $0x180] sm:$0xff]
        %v4720 = vld [vmem:[#allocation17 + $0x188] sm:$0xff]
        %v4721 = vld [vmem:[#allocation17 + $0x190] sm:$0xff]
        %v4722 = vld [vmem:[#allocation17 + $0x198] sm:$0xff]
        %v4723 = vld [vmem:[#allocation17 + $0x1a0] sm:$0xff]
        %v4724 = vld [vmem:[#allocation17 + $0x1a8] sm:$0xff]
        %v4725 = vld [vmem:[#allocation17 + $0x1b0] sm:$0xff]
        %v4726 = vld [vmem:[#allocation17 + $0x1b8] sm:$0xff]
        %v4727 = vld [vmem:[#allocation17 + $0x1c0] sm:$0xff]
        %v4728 = vld [vmem:[#allocation17 + $0x1c8] sm:$0xff]
        %v4729 = vld [vmem:[#allocation17 + $0x1d0] sm:$0xff]
        %v4730 = vld [vmem:[#allocation17 + $0x1d8] sm:$0xff]
        %v4731 = vld [vmem:[#allocation17 + $0x1e0] sm:$0xff]
        %v4732 = vld [vmem:[#allocation17 + $0x1e8] sm:$0xff]
        %v4733 = vld [vmem:[#allocation17 + $0x1f0] sm:$0xff]
        %v4734 = vld [vmem:[#allocation17 + $0x1f8] sm:$0xff]
        %v4735 = vld [vmem:[#allocation18] sm:$0xf]
        %v4737 = vlaneseq
        %v4738 = vshrl.u32 %v4737, 7
        %v4739 = vsub.s32 0, %v4738
        %v4740 = vrot.slane %v4735, %v4739
        %v4741 = vlaneseq
        %v4742 = vshrl.u32 %v4741, 7
        %v4743 = vsub.s32 1, %v4742
        %v4744 = vrot.slane %v4735, %v4743
        %v4745 = vlaneseq
        %v4746 = vshrl.u32 %v4745, 7
        %v4747 = vsub.s32 2, %v4746
        %v4748 = vrot.slane %v4735, %v4747
        %v4749 = vlaneseq
        %v4750 = vshrl.u32 %v4749, 7
        %v4751 = vsub.s32 3, %v4750
        %v4752 = vrot.slane %v4735, %v4751
        %4757 = vmatprep.subr.mxu0 %v4672
        %4758 = vmatpush1.msra.mxu0 %v4671
        %4759 = vmatprep.subr.mxu0 %v4676
        %4760 = vmatpush1.msra.mxu0 %v4675
        %4761 = vmatprep.subr.mxu0 %v4680
        %4762 = vmatpush1.msra.mxu0 %v4679
        %4763 = vmatprep.subr.mxu0 %v4684
        %4764 = vmatpush1.msra.mxu0 %v4683
        %4765 = vmatprep.subr.mxu0 %v4688
        %4766 = vmatpush1.msra.mxu0 %v4687
        %4767 = vmatprep.subr.mxu0 %v4692
        %4768 = vmatpush1.msra.mxu0 %v4691
        %4769 = vmatprep.subr.mxu0 %v4696
        %4770 = vmatpush1.msra.mxu0 %v4695
        %4771 = vmatprep.subr.mxu0 %v4700
        %4772 = vmatpush1.msra.mxu0 %v4699
        %4773 = vmatprep.subr.mxu0 %v4704
        %4774 = vmatpush1.msra.mxu0 %v4703
        %4775 = vmatprep.subr.mxu0 %v4708
        %4776 = vmatpush1.msra.mxu0 %v4707
        %4777 = vmatprep.subr.mxu0 %v4712
        %4778 = vmatpush1.msra.mxu0 %v4711
        %4779 = vmatprep.subr.mxu0 %v4716
        %4780 = vmatpush1.msra.mxu0 %v4715
        %4781 = vmatprep.subr.mxu0 %v4720
        %4782 = vmatpush1.msra.mxu0 %v4719
        %4783 = vmatprep.subr.mxu0 %v4724
        %4784 = vmatpush1.msra.mxu0 %v4723
        %4785 = vmatprep.subr.mxu0 %v4728
        %4786 = vmatpush1.msra.mxu0 %v4727
        %4787 = vmatprep.subr.mxu0 %v4732
        %4788 = vmatpush1.msra.mxu0 %v4731
        %4789 = vmatprep.subr.mxu0 0.0
        %4790 = vmatpush1.msra.mxu0 0.0
        %4791 = vmatprep.subr.mxu0 0.0
        %4792 = vmatpush1.msra.mxu0 0.0
        %4793 = vmatprep.subr.mxu0 0.0
        %4794 = vmatpush1.msra.mxu0 0.0
        %4795 = vmatprep.subr.mxu0 0.0
        %4796 = vmatpush1.msra.mxu0 0.0
        %4797 = vmatprep.subr.mxu0 0.0
        %4798 = vmatpush1.msra.mxu0 0.0
        %4799 = vmatprep.subr.mxu0 0.0
        %4800 = vmatpush1.msra.mxu0 0.0
        %4801 = vmatprep.subr.mxu0 0.0
        %4802 = vmatpush1.msra.mxu0 0.0
        %4803 = vmatprep.subr.mxu0 0.0
        %4804 = vmatpush1.msra.mxu0 0.0
        %4805 = vmatprep.subr.mxu0 0.0
        %4806 = vmatpush1.msra.mxu0 0.0
        %4807 = vmatprep.subr.mxu0 0.0
        %4808 = vmatpush1.msra.mxu0 0.0
        %4809 = vmatprep.subr.mxu0 0.0
        %4810 = vmatpush1.msra.mxu0 0.0
        %4811 = vmatprep.subr.mxu0 0.0
        %4812 = vmatpush1.msra.mxu0 0.0
        %4813 = vmatprep.subr.mxu0 0.0
        %4814 = vmatpush1.msra.mxu0 0.0
        %4815 = vmatprep.subr.mxu0 0.0
        %4816 = vmatpush1.msra.mxu0 0.0
        %4817 = vmatprep.subr.mxu0 0.0
        %4818 = vmatpush1.msra.mxu0 0.0
        %4819 = vmatprep.subr.mxu0 0.0
        %4820 = vmatpush1.msra.mxu0 0.0
        %4821 = vmatprep.mubr.f32.mxu0 0.0
        %4822 = vmatmul.mubr.f32.gmra.mrb[0].mxu0 %v4663
        %v4823 = vpop.f32.mrb[0].mxu0
        %v4824 = vadd.f32 %v4740, %v4823
        %v4825 = vpop.f32.mrb[0].mxu0
        %v4826 = vadd.f32 %v4744, %v4825
        %4827 = vmatprep.mubr.f32.mxu0 0.0
        %4828 = vmatmul.mubr.f32.gmra.mrb[0].mxu0 %v4664
        %v4829 = vpop.f32.mrb[0].mxu0
        %v4830 = vadd.f32 %v4740, %v4829
        %v4831 = vpop.f32.mrb[0].mxu0
        %v4832 = vadd.f32 %v4744, %v4831
        %4833 = vmatprep.mubr.f32.mxu0 0.0
        %4834 = vmatmul.mubr.f32.gmra.mrb[0].mxu0 %v4665
        %v4835 = vpop.f32.mrb[0].mxu0
        %v4836 = vadd.f32 %v4740, %v4835
        %v4837 = vpop.f32.mrb[0].mxu0
        %v4838 = vadd.f32 %v4744, %v4837
        %4839 = vmatprep.mubr.f32.mxu0 0.0
        %4840 = vmatmul.mubr.f32.gmra.mrb[0].mxu0 %v4666
        %v4841 = vpop.f32.mrb[0].mxu0
        %v4842 = vadd.f32 %v4740, %v4841
        %v4843 = vpop.f32.mrb[0].mxu0
        %v4844 = vadd.f32 %v4744, %v4843
        %4845 = vmatprep.mubr.f32.mxu0 0.0
        %4846 = vmatmul.mubr.f32.gmra.mrb[0].mxu0 %v4667
        %v4847 = vpop.f32.mrb[0].mxu0
        %v4848 = vadd.f32 %v4740, %v4847
        %v4849 = vpop.f32.mrb[0].mxu0
        %v4850 = vadd.f32 %v4744, %v4849
        %4851 = vmatprep.mubr.f32.mxu0 0.0
        %4852 = vmatmul.mubr.f32.gmra.mrb[0].mxu0 %v4668
        %v4853 = vpop.f32.mrb[0].mxu0
        %v4854 = vadd.f32 %v4740, %v4853
        %v4855 = vpop.f32.mrb[0].mxu0
        %v4856 = vadd.f32 %v4744, %v4855
        %4857 = vmatprep.mubr.f32.mxu0 0.0
        %4858 = vmatmul.mubr.f32.gmra.mrb[0].mxu0 %v4669
        %v4859 = vpop.f32.mrb[0].mxu0
        %v4860 = vadd.f32 %v4740, %v4859
        %v4861 = vpop.f32.mrb[0].mxu0
        %v4862 = vadd.f32 %v4744, %v4861
        %4863 = vmatprep.mubr.f32.mxu0 0.0
        %4864 = vmatmul.mubr.f32.gmra.mrb[0].mxu0 %v4670
        %v4865 = vpop.f32.mrb[0].mxu0
        %v4866 = vadd.f32 %v4740, %v4865
        %v4867 = vpop.f32.mrb[0].mxu0
        %v4868 = vadd.f32 %v4744, %v4867
        %4869 = vdwg.mxu0
        %4870 = vmatprep.subr.mxu0 %v4674
        %4871 = vmatpush1.msra.mxu0 %v4673
        %4872 = vmatprep.subr.mxu0 %v4678
        %4873 = vmatpush1.msra.mxu0 %v4677
        %4874 = vmatprep.subr.mxu0 %v4682
        %4875 = vmatpush1.msra.mxu0 %v4681
        %4876 = vmatprep.subr.mxu0 %v4686
        %4877 = vmatpush1.msra.mxu0 %v4685
        %4878 = vmatprep.subr.mxu0 %v4690
        %4879 = vmatpush1.msra.mxu0 %v4689
        %4880 = vmatprep.subr.mxu0 %v4694
        %4881 = vmatpush1.msra.mxu0 %v4693
        %4882 = vmatprep.subr.mxu0 %v4698
        %4883 = vmatpush1.msra.mxu0 %v4697
        %4884 = vmatprep.subr.mxu0 %v4702
        %4885 = vmatpush1.msra.mxu0 %v4701
        %4886 = vmatprep.subr.mxu0 %v4706
        %4887 = vmatpush1.msra.mxu0 %v4705
        %4888 = vmatprep.subr.mxu0 %v4710
        %4889 = vmatpush1.msra.mxu0 %v4709
        %4890 = vmatprep.subr.mxu0 %v4714
        %4891 = vmatpush1.msra.mxu0 %v4713
        %4892 = vmatprep.subr.mxu0 %v4718
        %4893 = vmatpush1.msra.mxu0 %v4717
        %4894 = vmatprep.subr.mxu0 %v4722
        %4895 = vmatpush1.msra.mxu0 %v4721
        %4896 = vmatprep.subr.mxu0 %v4726
        %4897 = vmatpush1.msra.mxu0 %v4725
        %4898 = vmatprep.subr.mxu0 %v4730
        %4899 = vmatpush1.msra.mxu0 %v4729
        %4900 = vmatprep.subr.mxu0 %v4734
        %4901 = vmatpush1.msra.mxu0 %v4733
        %4902 = vmatprep.subr.mxu0 0.0
        %4903 = vmatpush1.msra.mxu0 0.0
        %4904 = vmatprep.subr.mxu0 0.0
        %4905 = vmatpush1.msra.mxu0 0.0
        %4906 = vmatprep.subr.mxu0 0.0
        %4907 = vmatpush1.msra.mxu0 0.0
        %4908 = vmatprep.subr.mxu0 0.0
        %4909 = vmatpush1.msra.mxu0 0.0
        %4910 = vmatprep.subr.mxu0 0.0
        %4911 = vmatpush1.msra.mxu0 0.0
        %4912 = vmatprep.subr.mxu0 0.0
        %4913 = vmatpush1.msra.mxu0 0.0
        %4914 = vmatprep.subr.mxu0 0.0
        %4915 = vmatpush1.msra.mxu0 0.0
        %4916 = vmatprep.subr.mxu0 0.0
        %4917 = vmatpush1.msra.mxu0 0.0
        %4918 = vmatprep.subr.mxu0 0.0
        %4919 = vmatpush1.msra.mxu0 0.0
        %4920 = vmatprep.subr.mxu0 0.0
        %4921 = vmatpush1.msra.mxu0 0.0
        %4922 = vmatprep.subr.mxu0 0.0
        %4923 = vmatpush1.msra.mxu0 0.0
        %4924 = vmatprep.subr.mxu0 0.0
        %4925 = vmatpush1.msra.mxu0 0.0
        %4926 = vmatprep.subr.mxu0 0.0
        %4927 = vmatpush1.msra.mxu0 0.0
        %4928 = vmatprep.subr.mxu0 0.0
        %4929 = vmatpush1.msra.mxu0 0.0
        %4930 = vmatprep.subr.mxu0 0.0
        %4931 = vmatpush1.msra.mxu0 0.0
        %4932 = vmatprep.subr.mxu0 0.0
        %4933 = vmatpush1.msra.mxu0 0.0
        %4934 = vmatprep.mubr.f32.mxu0 0.0
        %4935 = vmatmul.mubr.f32.gmra.mrb[0].mxu0 %v4663
        %v4936 = vpop.f32.mrb[0].mxu0
        %v4937 = vadd.f32 %v4748, %v4936
        %v4938 = vpop.f32.mrb[0].mxu0
        %v4939 = vadd.f32 %v4752, %v4938
        %4940 = vmatprep.mubr.f32.mxu0 0.0
        %4941 = vmatmul.mubr.f32.gmra.mrb[0].mxu0 %v4664
        %v4942 = vpop.f32.mrb[0].mxu0
        %v4943 = vadd.f32 %v4748, %v4942
        %v4944 = vpop.f32.mrb[0].mxu0
        %v4945 = vadd.f32 %v4752, %v4944
        %4946 = vmatprep.mubr.f32.mxu0 0.0
        %4947 = vmatmul.mubr.f32.gmra.mrb[0].mxu0 %v4665
        %v4948 = vpop.f32.mrb[0].mxu0
        %v4949 = vadd.f32 %v4748, %v4948
        %v4950 = vpop.f32.mrb[0].mxu0
        %v4951 = vadd.f32 %v4752, %v4950
        %4952 = vmatprep.mubr.f32.mxu0 0.0
        %4953 = vmatmul.mubr.f32.gmra.mrb[0].mxu0 %v4666
        %v4954 = vpop.f32.mrb[0].mxu0
        %v4955 = vadd.f32 %v4748, %v4954
        %v4956 = vpop.f32.mrb[0].mxu0
        %v4957 = vadd.f32 %v4752, %v4956
        %4958 = vmatprep.mubr.f32.mxu0 0.0
        %4959 = vmatmul.mubr.f32.gmra.mrb[0].mxu0 %v4667
        %v4960 = vpop.f32.mrb[0].mxu0
        %v4961 = vadd.f32 %v4748, %v4960
        %v4962 = vpop.f32.mrb[0].mxu0
        %v4963 = vadd.f32 %v4752, %v4962
        %4964 = vmatprep.mubr.f32.mxu0 0.0
        %4965 = vmatmul.mubr.f32.gmra.mrb[0].mxu0 %v4668
        %v4966 = vpop.f32.mrb[0].mxu0
        %v4967 = vadd.f32 %v4748, %v4966
        %v4968 = vpop.f32.mrb[0].mxu0
        %v4969 = vadd.f32 %v4752, %v4968
        %4970 = vmatprep.mubr.f32.mxu0 0.0
        %4971 = vmatmul.mubr.f32.gmra.mrb[0].mxu0 %v4669
        %v4972 = vpop.f32.mrb[0].mxu0
        %v4973 = vadd.f32 %v4748, %v4972
        %v4974 = vpop.f32.mrb[0].mxu0
        %v4975 = vadd.f32 %v4752, %v4974
        %4976 = vmatprep.mubr.f32.mxu0 0.0
        %4977 = vmatmul.mubr.f32.gmra.mrb[0].mxu0 %v4670
        %v4978 = vpop.f32.mrb[0].mxu0
        %v4979 = vadd.f32 %v4748, %v4978
        %v4980 = vpop.f32.mrb[0].mxu0
        %v4981 = vadd.f32 %v4752, %v4980
        %4982 = vdwg.mxu0
        %v4983 = vmul.f32 %v4824, 0.5
        %v4984 = vmul.f32 %v4826, 0.5
        %v4985 = vmul.f32 %v4937, 0.5
        %v4986 = vmul.f32 %v4939, 0.5
        %v4987 = vmul.f32 %v4830, 0.5
        %v4988 = vmul.f32 %v4832, 0.5
        %v4989 = vmul.f32 %v4943, 0.5
        %v4990 = vmul.f32 %v4945, 0.5
        %v4991 = vmul.f32 %v4836, 0.5
        %v4992 = vmul.f32 %v4838, 0.5
        %v4993 = vmul.f32 %v4949, 0.5
        %v4994 = vmul.f32 %v4951, 0.5
        %v4995 = vmul.f32 %v4842, 0.5
        %v4996 = vmul.f32 %v4844, 0.5
        %v4997 = vmul.f32 %v4955, 0.5
        %v4998 = vmul.f32 %v4957, 0.5
        %v4999 = vmul.f32 %v4848, 0.5
        %v5000 = vmul.f32 %v4850, 0.5
        %v5001 = vmul.f32 %v4961, 0.5
        %v5002 = vmul.f32 %v4963, 0.5
        %v5003 = vmul.f32 %v4854, 0.5
        %v5004 = vmul.f32 %v4856, 0.5
        %v5005 = vmul.f32 %v4967, 0.5
        %v5006 = vmul.f32 %v4969, 0.5
        %v5007 = vmul.f32 %v4860, 0.5
        %v5008 = vmul.f32 %v4862, 0.5
        %v5009 = vmul.f32 %v4973, 0.5
        %v5010 = vmul.f32 %v4975, 0.5
        %v5011 = vmul.f32 %v4866, 0.5
        %v5012 = vmul.f32 %v4868, 0.5
        %v5013 = vmul.f32 %v4979, 0.5
        %v5014 = vmul.f32 %v4981, 0.5
        %v5015 = vmul.f32 %v4824, 0.044715
        %v5016 = vmul.f32 %v4826, 0.044715
        %v5017 = vmul.f32 %v4937, 0.044715
        %v5018 = vmul.f32 %v4939, 0.044715
        %v5019 = vmul.f32 %v4830, 0.044715
        %v5020 = vmul.f32 %v4832, 0.044715
        %v5021 = vmul.f32 %v4943, 0.044715
        %v5022 = vmul.f32 %v4945, 0.044715
        %v5023 = vmul.f32 %v4836, 0.044715
        %v5024 = vmul.f32 %v4838, 0.044715
        %v5025 = vmul.f32 %v4949, 0.044715
        %v5026 = vmul.f32 %v4951, 0.044715
        %v5027 = vmul.f32 %v4842, 0.044715
        %v5028 = vmul.f32 %v4844, 0.044715
        %v5029 = vmul.f32 %v4955, 0.044715
        %v5030 = vmul.f32 %v4957, 0.044715
        %v5031 = vmul.f32 %v4848, 0.044715
        %v5032 = vmul.f32 %v4850, 0.044715
        %v5033 = vmul.f32 %v4961, 0.044715
        %v5034 = vmul.f32 %v4963, 0.044715
        %v5035 = vmul.f32 %v4854, 0.044715
        %v5036 = vmul.f32 %v4856, 0.044715
        %v5037 = vmul.f32 %v4967, 0.044715
        %v5038 = vmul.f32 %v4969, 0.044715
        %v5039 = vmul.f32 %v4860, 0.044715
        %v5040 = vmul.f32 %v4862, 0.044715
        %v5041 = vmul.f32 %v4973, 0.044715
        %v5042 = vmul.f32 %v4975, 0.044715
        %v5043 = vmul.f32 %v4866, 0.044715
        %v5044 = vmul.f32 %v4868, 0.044715
        %v5045 = vmul.f32 %v4979, 0.044715
        %v5046 = vmul.f32 %v4981, 0.044715
        %v5047 = vmul.f32 %v5015, %v4824
        %v5048 = vmul.f32 %v5016, %v4826
        %v5049 = vmul.f32 %v5017, %v4937
        %v5050 = vmul.f32 %v5018, %v4939
        %v5051 = vmul.f32 %v5019, %v4830
        %v5052 = vmul.f32 %v5020, %v4832
        %v5053 = vmul.f32 %v5021, %v4943
        %v5054 = vmul.f32 %v5022, %v4945
        %v5055 = vmul.f32 %v5023, %v4836
        %v5056 = vmul.f32 %v5024, %v4838
        %v5057 = vmul.f32 %v5025, %v4949
        %v5058 = vmul.f32 %v5026, %v4951
        %v5059 = vmul.f32 %v5027, %v4842
        %v5060 = vmul.f32 %v5028, %v4844
        %v5061 = vmul.f32 %v5029, %v4955
        %v5062 = vmul.f32 %v5030, %v4957
        %v5063 = vmul.f32 %v5031, %v4848
        %v5064 = vmul.f32 %v5032, %v4850
        %v5065 = vmul.f32 %v5033, %v4961
        %v5066 = vmul.f32 %v5034, %v4963
        %v5067 = vmul.f32 %v5035, %v4854
        %v5068 = vmul.f32 %v5036, %v4856
        %v5069 = vmul.f32 %v5037, %v4967
        %v5070 = vmul.f32 %v5038, %v4969
        %v5071 = vmul.f32 %v5039, %v4860
        %v5072 = vmul.f32 %v5040, %v4862
        %v5073 = vmul.f32 %v5041, %v4973
        %v5074 = vmul.f32 %v5042, %v4975
        %v5075 = vmul.f32 %v5043, %v4866
        %v5076 = vmul.f32 %v5044, %v4868
        %v5077 = vmul.f32 %v5045, %v4979
        %v5078 = vmul.f32 %v5046, %v4981
        %v5079 = vmul.f32 %v5047, %v4824
        %v5080 = vmul.f32 %v5048, %v4826
        %v5081 = vmul.f32 %v5049, %v4937
        %v5082 = vmul.f32 %v5050, %v4939
        %v5083 = vmul.f32 %v5051, %v4830
        %v5084 = vmul.f32 %v5052, %v4832
        %v5085 = vmul.f32 %v5053, %v4943
        %v5086 = vmul.f32 %v5054, %v4945
        %v5087 = vmul.f32 %v5055, %v4836
        %v5088 = vmul.f32 %v5056, %v4838
        %v5089 = vmul.f32 %v5057, %v4949
        %v5090 = vmul.f32 %v5058, %v4951
        %v5091 = vmul.f32 %v5059, %v4842
        %v5092 = vmul.f32 %v5060, %v4844
        %v5093 = vmul.f32 %v5061, %v4955
        %v5094 = vmul.f32 %v5062, %v4957
        %v5095 = vmul.f32 %v5063, %v4848
        %v5096 = vmul.f32 %v5064, %v4850
        %v5097 = vmul.f32 %v5065, %v4961
        %v5098 = vmul.f32 %v5066, %v4963
        %v5099 = vmul.f32 %v5067, %v4854
        %v5100 = vmul.f32 %v5068, %v4856
        %v5101 = vmul.f32 %v5069, %v4967
        %v5102 = vmul.f32 %v5070, %v4969
        %v5103 = vmul.f32 %v5071, %v4860
        %v5104 = vmul.f32 %v5072, %v4862
        %v5105 = vmul.f32 %v5073, %v4973
        %v5106 = vmul.f32 %v5074, %v4975
        %v5107 = vmul.f32 %v5075, %v4866
        %v5108 = vmul.f32 %v5076, %v4868
        %v5109 = vmul.f32 %v5077, %v4979
        %v5110 = vmul.f32 %v5078, %v4981
        %v5111 = vadd.f32 %v4824, %v5079
        %v5112 = vadd.f32 %v4826, %v5080
        %v5113 = vadd.f32 %v4937, %v5081
        %v5114 = vadd.f32 %v4939, %v5082
        %v5115 = vadd.f32 %v4830, %v5083
        %v5116 = vadd.f32 %v4832, %v5084
        %v5117 = vadd.f32 %v4943, %v5085
        %v5118 = vadd.f32 %v4945, %v5086
        %v5119 = vadd.f32 %v4836, %v5087
        %v5120 = vadd.f32 %v4838, %v5088
        %v5121 = vadd.f32 %v4949, %v5089
        %v5122 = vadd.f32 %v4951, %v5090
        %v5123 = vadd.f32 %v4842, %v5091
        %v5124 = vadd.f32 %v4844, %v5092
        %v5125 = vadd.f32 %v4955, %v5093
        %v5126 = vadd.f32 %v4957, %v5094
        %v5127 = vadd.f32 %v4848, %v5095
        %v5128 = vadd.f32 %v4850, %v5096
        %v5129 = vadd.f32 %v4961, %v5097
        %v5130 = vadd.f32 %v4963, %v5098
        %v5131 = vadd.f32 %v4854, %v5099
        %v5132 = vadd.f32 %v4856, %v5100
        %v5133 = vadd.f32 %v4967, %v5101
        %v5134 = vadd.f32 %v4969, %v5102
        %v5135 = vadd.f32 %v4860, %v5103
        %v5136 = vadd.f32 %v4862, %v5104
        %v5137 = vadd.f32 %v4973, %v5105
        %v5138 = vadd.f32 %v4975, %v5106
        %v5139 = vadd.f32 %v4866, %v5107
        %v5140 = vadd.f32 %v4868, %v5108
        %v5141 = vadd.f32 %v4979, %v5109
        %v5142 = vadd.f32 %v4981, %v5110
        %v5143 = vmul.f32 %v5111, 0.7978846
        %v5144 = vmul.f32 %v5112, 0.7978846
        %v5145 = vmul.f32 %v5113, 0.7978846
        %v5146 = vmul.f32 %v5114, 0.7978846
        %v5147 = vmul.f32 %v5115, 0.7978846
        %v5148 = vmul.f32 %v5116, 0.7978846
        %v5149 = vmul.f32 %v5117, 0.7978846
        %v5150 = vmul.f32 %v5118, 0.7978846
        %v5151 = vmul.f32 %v5119, 0.7978846
        %v5152 = vmul.f32 %v5120, 0.7978846
        %v5153 = vmul.f32 %v5121, 0.7978846
        %v5154 = vmul.f32 %v5122, 0.7978846
        %v5155 = vmul.f32 %v5123, 0.7978846
        %v5156 = vmul.f32 %v5124, 0.7978846
        %v5157 = vmul.f32 %v5125, 0.7978846
        %v5158 = vmul.f32 %v5126, 0.7978846
        %v5159 = vmul.f32 %v5127, 0.7978846
        %v5160 = vmul.f32 %v5128, 0.7978846
        %v5161 = vmul.f32 %v5129, 0.7978846
        %v5162 = vmul.f32 %v5130, 0.7978846
        %v5163 = vmul.f32 %v5131, 0.7978846
        %v5164 = vmul.f32 %v5132, 0.7978846
        %v5165 = vmul.f32 %v5133, 0.7978846
        %v5166 = vmul.f32 %v5134, 0.7978846
        %v5167 = vmul.f32 %v5135, 0.7978846
        %v5168 = vmul.f32 %v5136, 0.7978846
        %v5169 = vmul.f32 %v5137, 0.7978846
        %v5170 = vmul.f32 %v5138, 0.7978846
        %v5171 = vmul.f32 %v5139, 0.7978846
        %v5172 = vmul.f32 %v5140, 0.7978846
        %v5173 = vmul.f32 %v5141, 0.7978846
        %v5174 = vmul.f32 %v5142, 0.7978846
        %v5175 = vtanh.pop %v5143
        %v5176 = vtanh.pop %v5144
        %v5177 = vtanh.pop %v5145
        %v5178 = vtanh.pop %v5146
        %v5179 = vtanh.pop %v5147
        %v5180 = vtanh.pop %v5148
        %v5181 = vtanh.pop %v5149
        %v5182 = vtanh.pop %v5150
        %v5183 = vtanh.pop %v5151
        %v5184 = vtanh.pop %v5152
        %v5185 = vtanh.pop %v5153
        %v5186 = vtanh.pop %v5154
        %v5187 = vtanh.pop %v5155
        %v5188 = vtanh.pop %v5156
        %v5189 = vtanh.pop %v5157
        %v5190 = vtanh.pop %v5158
        %v5191 = vtanh.pop %v5159
        %v5192 = vtanh.pop %v5160
        %v5193 = vtanh.pop %v5161
        %v5194 = vtanh.pop %v5162
        %v5195 = vtanh.pop %v5163
        %v5196 = vtanh.pop %v5164
        %v5197 = vtanh.pop %v5165
        %v5198 = vtanh.pop %v5166
        %v5199 = vtanh.pop %v5167
        %v5200 = vtanh.pop %v5168
        %v5201 = vtanh.pop %v5169
        %v5202 = vtanh.pop %v5170
        %v5203 = vtanh.pop %v5171
        %v5204 = vtanh.pop %v5172
        %v5205 = vtanh.pop %v5173
        %v5206 = vtanh.pop %v5174
        %v5207 = vadd.f32 %v5175, 1.0
        %v5208 = vadd.f32 %v5176, 1.0
        %v5209 = vadd.f32 %v5177, 1.0
        %v5210 = vadd.f32 %v5178, 1.0
        %v5211 = vadd.f32 %v5179, 1.0
        %v5212 = vadd.f32 %v5180, 1.0
        %v5213 = vadd.f32 %v5181, 1.0
        %v5214 = vadd.f32 %v5182, 1.0
        %v5215 = vadd.f32 %v5183, 1.0
        %v5216 = vadd.f32 %v5184, 1.0
        %v5217 = vadd.f32 %v5185, 1.0
        %v5218 = vadd.f32 %v5186, 1.0
        %v5219 = vadd.f32 %v5187, 1.0
        %v5220 = vadd.f32 %v5188, 1.0
        %v5221 = vadd.f32 %v5189, 1.0
        %v5222 = vadd.f32 %v5190, 1.0
        %v5223 = vadd.f32 %v5191, 1.0
        %v5224 = vadd.f32 %v5192, 1.0
        %v5225 = vadd.f32 %v5193, 1.0
        %v5226 = vadd.f32 %v5194, 1.0
        %v5227 = vadd.f32 %v5195, 1.0
        %v5228 = vadd.f32 %v5196, 1.0
        %v5229 = vadd.f32 %v5197, 1.0
        %v5230 = vadd.f32 %v5198, 1.0
        %v5231 = vadd.f32 %v5199, 1.0
        %v5232 = vadd.f32 %v5200, 1.0
        %v5233 = vadd.f32 %v5201, 1.0
        %v5234 = vadd.f32 %v5202, 1.0
        %v5235 = vadd.f32 %v5203, 1.0
        %v5236 = vadd.f32 %v5204, 1.0
        %v5237 = vadd.f32 %v5205, 1.0
        %v5238 = vadd.f32 %v5206, 1.0
        %v5239 = vmul.f32 %v4983, %v5207
        %v5240 = vmul.f32 %v4984, %v5208
        %v5241 = vmul.f32 %v4985, %v5209
        %v5242 = vmul.f32 %v4986, %v5210
        %v5243 = vmul.f32 %v4987, %v5211
        %v5244 = vmul.f32 %v4988, %v5212
        %v5245 = vmul.f32 %v4989, %v5213
        %v5246 = vmul.f32 %v4990, %v5214
        %v5247 = vmul.f32 %v4991, %v5215
        %v5248 = vmul.f32 %v4992, %v5216
        %v5249 = vmul.f32 %v4993, %v5217
        %v5250 = vmul.f32 %v4994, %v5218
        %v5251 = vmul.f32 %v4995, %v5219
        %v5252 = vmul.f32 %v4996, %v5220
        %v5253 = vmul.f32 %v4997, %v5221
        %v5254 = vmul.f32 %v4998, %v5222
        %v5255 = vmul.f32 %v4999, %v5223
        %v5256 = vmul.f32 %v5000, %v5224
        %v5257 = vmul.f32 %v5001, %v5225
        %v5258 = vmul.f32 %v5002, %v5226
        %v5259 = vmul.f32 %v5003, %v5227
        %v5260 = vmul.f32 %v5004, %v5228
        %v5261 = vmul.f32 %v5005, %v5229
        %v5262 = vmul.f32 %v5006, %v5230
        %v5263 = vmul.f32 %v5007, %v5231
        %v5264 = vmul.f32 %v5008, %v5232
        %v5265 = vmul.f32 %v5009, %v5233
        %v5266 = vmul.f32 %v5010, %v5234
        %v5267 = vmul.f32 %v5011, %v5235
        %v5268 = vmul.f32 %v5012, %v5236
        %v5269 = vmul.f32 %v5013, %v5237
        %v5270 = vmul.f32 %v5014, %v5238
        %v5271 = vld [vmem:[#allocation20] sm:$0xff]
        %v5272 = vld [vmem:[#allocation20 + $0x8] sm:$0xff]
        %v5273 = vld [vmem:[#allocation20 + $0x10] sm:$0xff]
        %v5274 = vld [vmem:[#allocation20 + $0x18] sm:$0xff]
        %v5275 = vld [vmem:[#allocation20 + $0x20] sm:$0xff]
        %v5276 = vld [vmem:[#allocation20 + $0x28] sm:$0xff]
        %v5277 = vld [vmem:[#allocation20 + $0x30] sm:$0xff]
        %v5278 = vld [vmem:[#allocation20 + $0x38] sm:$0xff]
        %v5279 = vld [vmem:[#allocation20 + $0x40] sm:$0xff]
        %v5280 = vld [vmem:[#allocation20 + $0x48] sm:$0xff]
        %v5281 = vld [vmem:[#allocation20 + $0x50] sm:$0xff]
        %v5282 = vld [vmem:[#allocation20 + $0x58] sm:$0xff]
        %v5283 = vld [vmem:[#allocation20 + $0x60] sm:$0xff]
        %v5284 = vld [vmem:[#allocation20 + $0x68] sm:$0xff]
        %v5285 = vld [vmem:[#allocation20 + $0x70] sm:$0xff]
        %v5286 = vld [vmem:[#allocation20 + $0x78] sm:$0xff]
        %v5287 = vld [vmem:[#allocation20 + $0x80] sm:$0xff]
        %v5288 = vld [vmem:[#allocation20 + $0x88] sm:$0xff]
        %v5289 = vld [vmem:[#allocation20 + $0x90] sm:$0xff]
        %v5290 = vld [vmem:[#allocation20 + $0x98] sm:$0xff]
        %v5291 = vld [vmem:[#allocation20 + $0xa0] sm:$0xff]
        %v5292 = vld [vmem:[#allocation20 + $0xa8] sm:$0xff]
        %v5293 = vld [vmem:[#allocation20 + $0xb0] sm:$0xff]
        %v5294 = vld [vmem:[#allocation20 + $0xb8] sm:$0xff]
        %v5295 = vld [vmem:[#allocation20 + $0xc0] sm:$0xff]
        %v5296 = vld [vmem:[#allocation20 + $0xc8] sm:$0xff]
        %v5297 = vld [vmem:[#allocation20 + $0xd0] sm:$0xff]
        %v5298 = vld [vmem:[#allocation20 + $0xd8] sm:$0xff]
        %v5299 = vld [vmem:[#allocation20 + $0xe0] sm:$0xff]
        %v5300 = vld [vmem:[#allocation20 + $0xe8] sm:$0xff]
        %v5301 = vld [vmem:[#allocation20 + $0xf0] sm:$0xff]
        %v5302 = vld [vmem:[#allocation20 + $0xf8] sm:$0xff]
        %v5303 = vld [vmem:[#allocation20 + $0x100] sm:$0xff]
        %v5304 = vld [vmem:[#allocation20 + $0x108] sm:$0xff]
        %v5305 = vld [vmem:[#allocation20 + $0x110] sm:$0xff]
        %v5306 = vld [vmem:[#allocation20 + $0x118] sm:$0xff]
        %v5307 = vld [vmem:[#allocation20 + $0x120] sm:$0xff]
        %v5308 = vld [vmem:[#allocation20 + $0x128] sm:$0xff]
        %v5309 = vld [vmem:[#allocation20 + $0x130] sm:$0xff]
        %v5310 = vld [vmem:[#allocation20 + $0x138] sm:$0xff]
        %v5311 = vld [vmem:[#allocation20 + $0x140] sm:$0xff]
        %v5312 = vld [vmem:[#allocation20 + $0x148] sm:$0xff]
        %v5313 = vld [vmem:[#allocation20 + $0x150] sm:$0xff]
        %v5314 = vld [vmem:[#allocation20 + $0x158] sm:$0xff]
        %v5315 = vld [vmem:[#allocation20 + $0x160] sm:$0xff]
        %v5316 = vld [vmem:[#allocation20 + $0x168] sm:$0xff]
        %v5317 = vld [vmem:[#allocation20 + $0x170] sm:$0xff]
        %v5318 = vld [vmem:[#allocation20 + $0x178] sm:$0xff]
        %v5319 = vld [vmem:[#allocation20 + $0x180] sm:$0xff]
        %v5320 = vld [vmem:[#allocation20 + $0x188] sm:$0xff]
        %v5321 = vld [vmem:[#allocation20 + $0x190] sm:$0xff]
        %v5322 = vld [vmem:[#allocation20 + $0x198] sm:$0xff]
        %v5323 = vld [vmem:[#allocation20 + $0x1a0] sm:$0xff]
        %v5324 = vld [vmem:[#allocation20 + $0x1a8] sm:$0xff]
        %v5325 = vld [vmem:[#allocation20 + $0x1b0] sm:$0xff]
        %v5326 = vld [vmem:[#allocation20 + $0x1b8] sm:$0xff]
        %v5327 = vld [vmem:[#allocation20 + $0x1c0] sm:$0xff]
        %v5328 = vld [vmem:[#allocation20 + $0x1c8] sm:$0xff]
        %v5329 = vld [vmem:[#allocation20 + $0x1d0] sm:$0xff]
        %v5330 = vld [vmem:[#allocation20 + $0x1d8] sm:$0xff]
        %v5331 = vld [vmem:[#allocation20 + $0x1e0] sm:$0xff]
        %v5332 = vld [vmem:[#allocation20 + $0x1e8] sm:$0xff]
        %v5333 = vld [vmem:[#allocation20 + $0x1f0] sm:$0xff]
        %v5334 = vld [vmem:[#allocation20 + $0x1f8] sm:$0xff]
        %v5335 = vld [vmem:[#allocation21] sm:$0x1]
        %v5337 = vlaneseq
        %v5338 = vshrl.u32 %v5337, 7
        %v5339 = vsub.s32 0, %v5338
        %v5340 = vrot.slane %v5335, %v5339
        %5342 = vmatprep.subr.mxu0 0.0
        %5343 = vmatpush1.msra.mxu0 %v5271
        %5344 = vmatprep.subr.mxu0 0.0
        %5345 = vmatpush1.msra.mxu0 %v5272
        %5346 = vmatprep.subr.mxu0 0.0
        %5347 = vmatpush1.msra.mxu0 %v5273
        %5348 = vmatprep.subr.mxu0 0.0
        %5349 = vmatpush1.msra.mxu0 %v5274
        %5350 = vmatprep.subr.mxu0 0.0
        %5351 = vmatpush1.msra.mxu0 %v5275
        %5352 = vmatprep.subr.mxu0 0.0
        %5353 = vmatpush1.msra.mxu0 %v5276
        %5354 = vmatprep.subr.mxu0 0.0
        %5355 = vmatpush1.msra.mxu0 %v5277
        %5356 = vmatprep.subr.mxu0 0.0
        %5357 = vmatpush1.msra.mxu0 %v5278
        %5358 = vmatprep.subr.mxu0 0.0
        %5359 = vmatpush1.msra.mxu0 %v5279
        %5360 = vmatprep.subr.mxu0 0.0
        %5361 = vmatpush1.msra.mxu0 %v5280
        %5362 = vmatprep.subr.mxu0 0.0
        %5363 = vmatpush1.msra.mxu0 %v5281
        %5364 = vmatprep.subr.mxu0 0.0
        %5365 = vmatpush1.msra.mxu0 %v5282
        %5366 = vmatprep.subr.mxu0 0.0
        %5367 = vmatpush1.msra.mxu0 %v5283
        %5368 = vmatprep.subr.mxu0 0.0
        %5369 = vmatpush1.msra.mxu0 %v5284
        %5370 = vmatprep.subr.mxu0 0.0
        %5371 = vmatpush1.msra.mxu0 %v5285
        %5372 = vmatprep.subr.mxu0 0.0
        %5373 = vmatpush1.msra.mxu0 %v5286
        %5374 = vmatprep.subr.mxu0 0.0
        %5375 = vmatpush1.msra.mxu0 %v5287
        %5376 = vmatprep.subr.mxu0 0.0
        %5377 = vmatpush1.msra.mxu0 %v5288
        %5378 = vmatprep.subr.mxu0 0.0
        %5379 = vmatpush1.msra.mxu0 %v5289
        %5380 = vmatprep.subr.mxu0 0.0
        %5381 = vmatpush1.msra.mxu0 %v5290
        %5382 = vmatprep.subr.mxu0 0.0
        %5383 = vmatpush1.msra.mxu0 %v5291
        %5384 = vmatprep.subr.mxu0 0.0
        %5385 = vmatpush1.msra.mxu0 %v5292
        %5386 = vmatprep.subr.mxu0 0.0
        %5387 = vmatpush1.msra.mxu0 %v5293
        %5388 = vmatprep.subr.mxu0 0.0
        %5389 = vmatpush1.msra.mxu0 %v5294
        %5390 = vmatprep.subr.mxu0 0.0
        %5391 = vmatpush1.msra.mxu0 %v5295
        %5392 = vmatprep.subr.mxu0 0.0
        %5393 = vmatpush1.msra.mxu0 %v5296
        %5394 = vmatprep.subr.mxu0 0.0
        %5395 = vmatpush1.msra.mxu0 %v5297
        %5396 = vmatprep.subr.mxu0 0.0
        %5397 = vmatpush1.msra.mxu0 %v5298
        %5398 = vmatprep.subr.mxu0 0.0
        %5399 = vmatpush1.msra.mxu0 %v5299
        %5400 = vmatprep.subr.mxu0 0.0
        %5401 = vmatpush1.msra.mxu0 %v5300
        %5402 = vmatprep.subr.mxu0 0.0
        %5403 = vmatpush1.msra.mxu0 %v5301
        %5404 = vmatprep.subr.mxu0 0.0
        %5405 = vmatpush1.msra.mxu0 %v5302
        %5406 = vmatprep.mubr.f32.mxu0 %v5240
        %5407 = vmatmul.mubr.f32.gmra.mrb[0].mxu0 %v5239
        %v5408 = vpop.f32.mrb[0].mxu0
        %v5409 = vadd.f32 %v5340, %v5408
        %v5410 = vpop.f32.mrb[0].mxu0
        %5411 = vmatprep.mubr.f32.mxu0 %v5244
        %5412 = vmatmul.mubr.f32.gmra.mrb[0].mxu0 %v5243
        %v5413 = vpop.f32.mrb[0].mxu0
        %v5414 = vadd.f32 %v5340, %v5413
        %v5415 = vpop.f32.mrb[0].mxu0
        %5416 = vmatprep.mubr.f32.mxu0 %v5248
        %5417 = vmatmul.mubr.f32.gmra.mrb[0].mxu0 %v5247
        %v5418 = vpop.f32.mrb[0].mxu0
        %v5419 = vadd.f32 %v5340, %v5418
        %v5420 = vpop.f32.mrb[0].mxu0
        %5421 = vmatprep.mubr.f32.mxu0 %v5252
        %5422 = vmatmul.mubr.f32.gmra.mrb[0].mxu0 %v5251
        %v5423 = vpop.f32.mrb[0].mxu0
        %v5424 = vadd.f32 %v5340, %v5423
        %v5425 = vpop.f32.mrb[0].mxu0
        %5426 = vmatprep.mubr.f32.mxu0 %v5256
        %5427 = vmatmul.mubr.f32.gmra.mrb[0].mxu0 %v5255
        %v5428 = vpop.f32.mrb[0].mxu0
        %v5429 = vadd.f32 %v5340, %v5428
        %v5430 = vpop.f32.mrb[0].mxu0
        %5431 = vmatprep.mubr.f32.mxu0 %v5260
        %5432 = vmatmul.mubr.f32.gmra.mrb[0].mxu0 %v5259
        %v5433 = vpop.f32.mrb[0].mxu0
        %v5434 = vadd.f32 %v5340, %v5433
        %v5435 = vpop.f32.mrb[0].mxu0
        %5436 = vmatprep.mubr.f32.mxu0 %v5264
        %5437 = vmatmul.mubr.f32.gmra.mrb[0].mxu0 %v5263
        %v5438 = vpop.f32.mrb[0].mxu0
        %v5439 = vadd.f32 %v5340, %v5438
        %v5440 = vpop.f32.mrb[0].mxu0
        %5441 = vmatprep.mubr.f32.mxu0 %v5268
        %5442 = vmatmul.mubr.f32.gmra.mrb[0].mxu0 %v5267
        %v5443 = vpop.f32.mrb[0].mxu0
        %v5444 = vadd.f32 %v5340, %v5443
        %v5445 = vpop.f32.mrb[0].mxu0
        %5446 = vdwg.mxu0
        %5447 = vmatprep.subr.mxu0 0.0
        %5448 = vmatpush1.msra.mxu0 %v5303
        %5449 = vmatprep.subr.mxu0 0.0
        %5450 = vmatpush1.msra.mxu0 %v5304
        %5451 = vmatprep.subr.mxu0 0.0
        %5452 = vmatpush1.msra.mxu0 %v5305
        %5453 = vmatprep.subr.mxu0 0.0
        %5454 = vmatpush1.msra.mxu0 %v5306
        %5455 = vmatprep.subr.mxu0 0.0
        %5456 = vmatpush1.msra.mxu0 %v5307
        %5457 = vmatprep.subr.mxu0 0.0
        %5458 = vmatpush1.msra.mxu0 %v5308
        %5459 = vmatprep.subr.mxu0 0.0
        %5460 = vmatpush1.msra.mxu0 %v5309
        %5461 = vmatprep.subr.mxu0 0.0
        %5462 = vmatpush1.msra.mxu0 %v5310
        %5463 = vmatprep.subr.mxu0 0.0
        %5464 = vmatpush1.msra.mxu0 %v5311
        %5465 = vmatprep.subr.mxu0 0.0
        %5466 = vmatpush1.msra.mxu0 %v5312
        %5467 = vmatprep.subr.mxu0 0.0
        %5468 = vmatpush1.msra.mxu0 %v5313
        %5469 = vmatprep.subr.mxu0 0.0
        %5470 = vmatpush1.msra.mxu0 %v5314
        %5471 = vmatprep.subr.mxu0 0.0
        %5472 = vmatpush1.msra.mxu0 %v5315
        %5473 = vmatprep.subr.mxu0 0.0
        %5474 = vmatpush1.msra.mxu0 %v5316
        %5475 = vmatprep.subr.mxu0 0.0
        %5476 = vmatpush1.msra.mxu0 %v5317
        %5477 = vmatprep.subr.mxu0 0.0
        %5478 = vmatpush1.msra.mxu0 %v5318
        %5479 = vmatprep.subr.mxu0 0.0
        %5480 = vmatpush1.msra.mxu0 %v5319
        %5481 = vmatprep.subr.mxu0 0.0
        %5482 = vmatpush1.msra.mxu0 %v5320
        %5483 = vmatprep.subr.mxu0 0.0
        %5484 = vmatpush1.msra.mxu0 %v5321
        %5485 = vmatprep.subr.mxu0 0.0
        %5486 = vmatpush1.msra.mxu0 %v5322
        %5487 = vmatprep.subr.mxu0 0.0
        %5488 = vmatpush1.msra.mxu0 %v5323
        %5489 = vmatprep.subr.mxu0 0.0
        %5490 = vmatpush1.msra.mxu0 %v5324
        %5491 = vmatprep.subr.mxu0 0.0
        %5492 = vmatpush1.msra.mxu0 %v5325
        %5493 = vmatprep.subr.mxu0 0.0
        %5494 = vmatpush1.msra.mxu0 %v5326
        %5495 = vmatprep.subr.mxu0 0.0
        %5496 = vmatpush1.msra.mxu0 %v5327
        %5497 = vmatprep.subr.mxu0 0.0
        %5498 = vmatpush1.msra.mxu0 %v5328
        %5499 = vmatprep.subr.mxu0 0.0
        %5500 = vmatpush1.msra.mxu0 %v5329
        %5501 = vmatprep.subr.mxu0 0.0
        %5502 = vmatpush1.msra.mxu0 %v5330
        %5503 = vmatprep.subr.mxu0 0.0
        %5504 = vmatpush1.msra.mxu0 %v5331
        %5505 = vmatprep.subr.mxu0 0.0
        %5506 = vmatpush1.msra.mxu0 %v5332
        %5507 = vmatprep.subr.mxu0 0.0
        %5508 = vmatpush1.msra.mxu0 %v5333
        %5509 = vmatprep.subr.mxu0 0.0
        %5510 = vmatpush1.msra.mxu0 %v5334
        %5511 = vmatprep.mubr.f32.mxu0 %v5242
        %5512 = vmatmul.mubr.f32.gmra.mrb[0].mxu0 %v5241
        %v5513 = vpop.f32.mrb[0].mxu0
        %v5514 = vadd.f32 %v5409, %v5513
        %v5515 = vpop.f32.mrb[0].mxu0
        %5516 = vmatprep.mubr.f32.mxu0 %v5246
        %5517 = vmatmul.mubr.f32.gmra.mrb[0].mxu0 %v5245
        %v5518 = vpop.f32.mrb[0].mxu0
        %v5519 = vadd.f32 %v5414, %v5518
        %v5520 = vpop.f32.mrb[0].mxu0
        %5521 = vmatprep.mubr.f32.mxu0 %v5250
        %5522 = vmatmul.mubr.f32.gmra.mrb[0].mxu0 %v5249
        %v5523 = vpop.f32.mrb[0].mxu0
        %v5524 = vadd.f32 %v5419, %v5523
        %v5525 = vpop.f32.mrb[0].mxu0
        %5526 = vmatprep.mubr.f32.mxu0 %v5254
        %5527 = vmatmul.mubr.f32.gmra.mrb[0].mxu0 %v5253
        %v5528 = vpop.f32.mrb[0].mxu0
        %v5529 = vadd.f32 %v5424, %v5528
        %v5530 = vpop.f32.mrb[0].mxu0
        %5531 = vmatprep.mubr.f32.mxu0 %v5258
        %5532 = vmatmul.mubr.f32.gmra.mrb[0].mxu0 %v5257
        %v5533 = vpop.f32.mrb[0].mxu0
        %v5534 = vadd.f32 %v5429, %v5533
        %v5535 = vpop.f32.mrb[0].mxu0
        %5536 = vmatprep.mubr.f32.mxu0 %v5262
        %5537 = vmatmul.mubr.f32.gmra.mrb[0].mxu0 %v5261
        %v5538 = vpop.f32.mrb[0].mxu0
        %v5539 = vadd.f32 %v5434, %v5538
        %v5540 = vpop.f32.mrb[0].mxu0
        %5541 = vmatprep.mubr.f32.mxu0 %v5266
        %5542 = vmatmul.mubr.f32.gmra.mrb[0].mxu0 %v5265
        %v5543 = vpop.f32.mrb[0].mxu0
        %v5544 = vadd.f32 %v5439, %v5543
        %v5545 = vpop.f32.mrb[0].mxu0
        %5546 = vmatprep.mubr.f32.mxu0 %v5270
        %5547 = vmatmul.mubr.f32.gmra.mrb[0].mxu0 %v5269
        %v5548 = vpop.f32.mrb[0].mxu0
        %v5549 = vadd.f32 %v5444, %v5548
        %v5550 = vpop.f32.mrb[0].mxu0
        %5551 = vdwg.mxu0
        %v5552 = vadd.f32 %v4489, %v5514
        %v5553 = vadd.f32 %v4490, %v5519
        %v5554 = vadd.f32 %v4491, %v5524
        %v5555 = vadd.f32 %v4492, %v5529
        %v5556 = vadd.f32 %v4493, %v5534
        %v5557 = vadd.f32 %v4494, %v5539
        %v5558 = vadd.f32 %v4495, %v5544
        %v5559 = vadd.f32 %v4496, %v5549
        %5560 = vst [vmem:[%s674] sm:$0xff] %v5552
        %5561 = vst [vmem:[%s674 + $0x8] sm:$0xff] %v5553
        %5562 = vst [vmem:[%s674 + $0x10] sm:$0xff] %v5554
        %5563 = vst [vmem:[%s674 + $0x18] sm:$0xff] %v5555
        %5564 = vst [vmem:[%s674 + $0x20] sm:$0xff] %v5556
        %5565 = vst [vmem:[%s674 + $0x28] sm:$0xff] %v5557
        %5566 = vst [vmem:[%s674 + $0x30] sm:$0xff] %v5558
        %5567 = vst [vmem:[%s674 + $0x38] sm:$0xff] %v5559
        %s5568 = sand.u32 %s359, 1
        %s5569 = scalar_lea.sflag [#allocation8], %s5568
        %s5570 = sand.u32 %s359, 1
        %s5571 = smul.addr %s5570, 64
        %s5572 = scalar_lea.vmem [#allocation29], %s5571
        // Predicated region
        $region144: #{tpu_custom_call.1} parent=75 // pred_check
          %p5573 = pneg %p369
        $region145: #{tpu_custom_call.1} parent=75 // pred_check_branch
          %5575 = sbr.rel (%p5573) target = $region147
        $region146: #{tpu_custom_call.1} parent=75 // pred_region
          %s5576 = smul.u32 8, %s43
          %s5578 = ssub.s32 1024, 1024
          %5579 = vsyncadd %s5569, %s5578
          %s5580 = smul.addr %s42, 16
          %s5581 = sadd.s32 %s5576, %s5580
          %s5582 = smul.addr %s5581, 128
          %s5583 = scalar_lea.hbm %s14, %s5582
          %s5584 = sshll.u32 %s5572, 4
          %s5585 = int_to_ptr.vmem [resolvable:$true] %s5584
          %5590 = dma.vmem_to_hbm [thread:$0]  %s5585, 1024, %s5583, %s5569, 128, 128, 8
        $region147: #{tpu_custom_call.1} parent=75 // pred_fallthru
          _
      $region76: #{tpu_custom_call.1} parent=5 // pred_fallthru
        _
      %p5591 = scmp.le.s32.totalorder 2, %s33
      // Predicated region
      $region148: #{tpu_custom_call.1} parent=5 // pred_check
        %p5592 = pneg %p5591
      $region149: #{tpu_custom_call.1} parent=5 // pred_check_branch
        %5594 = sbr.rel (%p5592) target = $region151
      $region150: #{tpu_custom_call.1} parent=5 // pred_region
        %s5595 = ssub.s32 %s33, 2
        // Predicated region
        $region152: #{tpu_custom_call.1} parent=150 // pred_check
          %p5596 = pneg %p375
        $region153: #{tpu_custom_call.1} parent=150 // pred_check_branch
          %5598 = sbr.rel (%p5596) target = $region155
        $region154: #{tpu_custom_call.1} parent=150 // pred_region
          %s5599 = sand.u32 %s360, 1
          %s5600 = scalar_lea.sflag [#allocation8], %s5599
          %s5601 = sand.u32 %s360, 1
          %s5602 = smul.addr %s5601, 64
          %s5603 = scalar_lea.vmem [#allocation29], %s5602
          %5604 = dma.done %s5600, 1024
        $region155: #{tpu_custom_call.1} parent=150 // pred_fallthru
          _
      $region151: #{tpu_custom_call.1} parent=5 // pred_fallthru
        _
    $region6: #{tpu_custom_call.1} parent=1 // loop_footer
      %s37 = sadd.s32 1, %s33
    $region7: #{tpu_custom_call.1} parent=1 // loop_footer_branch
      %32 = sbr.rel target = $region3
    $region8: #{tpu_custom_call.1} parent=1 // loop_exit
      _
    %5605 = vsyncpa [#allocation7], 1
    %s5606 = scalar_lea.sflag [#allocation7], 1
    %5607 = vsyncpa %s5606, 1
    %5608 = vsyncpa [#allocation10], 1
    %5609 = vsyncpa [#allocation13], 1
    %5610 = vsyncpa [#allocation16], 1
    %5611 = vsyncpa [#allocation19], 1
    %5612 = vsyncpa [#allocation22], 1
    %5613 = vsyncpa [#allocation25], 1
    %5614 = vsyncpa [#allocation28], 1
    %5615 = vsyncpa [#allocation8], 1
    %s5616 = scalar_lea.sflag [#allocation8], 1
    %5617 = vsyncpa %s5616, 1

</llo_original>
